<compile_context>
chip_gen: v7x
topology: tpu7x:2x2x1
jax: 0.10.0
libtpu: 0.0.40
codegen_flags: <defaults>
</compile_context>

<pallas_src>
import functools
import math

import jax
import jax.numpy as jnp
from jax import lax
from jax.experimental import pallas as pl
from jax.experimental.pallas import tpu as pltpu


_SEQ_UNROLL_MAX = 32   # fully unroll the seq loop up to this length
_SUBLANE = 8           # f32 sublane count
_VMEM_LIMIT = 48 * 1024 * 1024   # within v7x's 64 MiB physical VMEM


def _round_up(x, m):
    return ((x + m - 1) // m) * m


# ---------------------------------------------------------------------------
# Shared BiLSTM recurrence core (forward + backward directions in one pass).
#
#   x_ref    : (seq*bt, in_dim)  time-major rows for one batch tile
#                                (bt is a multiple of 8 -> aligned slices).
#   wcat_ref : (in_dim, 8H) bf16 fused [W_ih_fwd | W_ih_bwd].
#   bcat_ref : (1, 8H)      f32  fused [b_fwd | b_bwd]  (b_ih + b_hh summed).
#   whh*_ref : (H, 4H)      bf16 recurrent weights.
#   xp_ref   : (seq*bt, 8H) f32  VMEM scratch holding the hoisted projection.
#
# PyTorch gate order (i, f, g, o); c = sig(f)*c + sig(i)*tanh(g);
# h = sig(o)*tanh(c).
# ---------------------------------------------------------------------------
def _bilstm_core(x_ref, wcat_ref, bcat_ref, whhf_ref, whhb_ref, xp_ref,
                 *, seq, bt, hidden, seq_out_ref=None):
    H = hidden
    G = 4 * H

    # Hoisted fused input projection: ONE MXU matmul for both directions over
    # all timesteps (bias folded in).  Only h @ W_hh stays inside the loop.
    xp_ref[...] = (
        jnp.dot(x_ref[...].astype(jnp.bfloat16), wcat_ref[...],
                preferred_element_type=jnp.float32)
        + bcat_ref[...])

    whhf = whhf_ref[...]          # bf16, loaded once outside the loop
    whhb = whhb_ref[...]

    def cell(h, c, pre, whh):
        gates = pre + jnp.dot(h.astype(jnp.bfloat16), whh,
                              preferred_element_type=jnp.float32)
        # Full-4H-lane activations (two EUP passes), sliced afterwards.
        sig = jax.nn.sigmoid(gates)
        th = jnp.tanh(gates)
        i_g = sig[:, 0:H]
        f_g = sig[:, H:2 * H]
        g_g = th[:, 2 * H:3 * H]
        o_g = sig[:, 3 * H:4 * H]
        c_new = f_g * c + i_g * g_g
        h_new = o_g * jnp.tanh(c_new)
        return h_new, c_new

    def step(t, carry, *, dynamic):
        h_f, c_f, h_b, c_b, h_b_last = carry
        tb = seq - 1 - t
        off_f = t * bt
        off_b = tb * bt
        if dynamic:
            off_f = pl.multiple_of(off_f, _SUBLANE)
            off_b = pl.multiple_of(off_b, _SUBLANE)
        pre_f = xp_ref[pl.ds(off_f, bt), 0:G]
        pre_b = xp_ref[pl.ds(off_b, bt), G:2 * G]
        h_f, c_f = cell(h_f, c_f, pre_f, whhf)
        h_b, c_b = cell(h_b, c_b, pre_b, whhb)
        # Backward hidden at original index seq-1 == bwd state after step 0
        # (this is what bilstm_out[:, -1, H:] is).
        if dynamic:
            h_b_last = jnp.where(t == 0, h_b, h_b_last)
        else:
            h_b_last = h_b if t == 0 else h_b_last
        if seq_out_ref is not None:
            seq_out_ref[pl.ds(off_f, bt), 0:H] = h_f
            seq_out_ref[pl.ds(off_b, bt), H:2 * H] = h_b
        return h_f, c_f, h_b, c_b, h_b_last

    z = jnp.zeros((bt, H), jnp.float32)
    carry = (z, z, z, z, z)
    if seq <= _SEQ_UNROLL_MAX:
        # Short static sequence: full unroll, fwd/bwd chains interleavable.
        for t in range(seq):
            carry = step(t, carry, dynamic=False)
    else:
        # Long sequences: bound live ranges (unrolled Python loops don't).
        carry = lax.fori_loop(0, seq, functools.partial(step, dynamic=True),
                              carry, unroll=8)
    h_f, _, _, _, h_b_last = carry
    return h_f, h_b_last


# ---------------------------------------------------------------------------
# Kernel A: one BiLSTM layer producing the full sequence output (only used for
# layers before the last when num_layers > 1).  The output slab has the same
# (n_tiles, seq*bt, feat) layout as the input, so layers chain with no
# wrapper-side transpose / reverse / concatenate.
# ---------------------------------------------------------------------------
def _bilstm_seq_kernel(x_ref, wcat, bcat, whhf, whhb, out_ref, xp_ref,
                       *, seq, bt, hidden):
    _bilstm_core(x_ref, wcat, bcat, whhf, whhb, xp_ref,
                 seq=seq, bt=bt, hidden=hidden, seq_out_ref=out_ref)


def bilstm_layer(x_tiles, p, *, seq, bt, hidden):
    n_tiles, rows, in_dim = x_tiles.shape          # rows == seq * bt
    kernel = functools.partial(_bilstm_seq_kernel, seq=seq, bt=bt, hidden=hidden)
    return pl.pallas_call(
        kernel,
        out_shape=jax.ShapeDtypeStruct((n_tiles, rows, 2 * hidden), jnp.float32),
        grid=(n_tiles,),
        in_specs=[pl.BlockSpec((None, rows, in_dim), lambda b: (b, 0, 0)),
                  pl.BlockSpec((in_dim, 8 * hidden), lambda b: (0, 0)),
                  pl.BlockSpec((1, 8 * hidden), lambda b: (0, 0)),
                  pl.BlockSpec((hidden, 4 * hidden), lambda b: (0, 0)),
                  pl.BlockSpec((hidden, 4 * hidden), lambda b: (0, 0))],
        out_specs=pl.BlockSpec((None, rows, 2 * hidden), lambda b: (b, 0, 0)),
        scratch_shapes=[pltpu.VMEM((rows, 8 * hidden), jnp.float32)],
        compiler_params=pltpu.CompilerParams(
            dimension_semantics=("parallel",),
            vmem_limit_bytes=_VMEM_LIMIT),
    )(x_tiles, p["w_ih_cat"], p["b_cat"], p["w_hh_f"], p["w_hh_b"])


# ---------------------------------------------------------------------------
# Kernel B: last BiLSTM layer + RK4 neural ODE + final Linear, all fused.
# concat(h, t) of the final Linear is a split matmul: the K=2 t-part is two
# VPU broadcast FMAs instead of an MXU push/pop.
# ---------------------------------------------------------------------------
def _bilstm_ode_fc_kernel(x_ref, wcat, bcat, whhf, whhb,
                          wode_ref, bode_ref, tfeat_ref,
                          wfch_ref, wfct_ref, bfc_ref,
                          out_ref, xp_ref,
                          *, seq, bt, hidden, n_ode_steps):
    h_f, h_b = _bilstm_core(x_ref, wcat, bcat, whhf, whhb, xp_ref,
                            seq=seq, bt=bt, hidden=hidden)

    # bilstm_out[:, -1, :] assembled in registers (no VMEM round-trip).
    h = jnp.concatenate([h_f, h_b], axis=-1)            # (bt, 2H) f32

    wode = wode_ref[...]                                 # bf16, loaded once
    b_ode = bode_ref[...]                                # f32, hoisted out of f()

    def f(hh):                                           # dh/dt = relu(hh @ W + b)
        return jnp.maximum(
            jnp.dot(hh.astype(jnp.bfloat16), wode,
                    preferred_element_type=jnp.float32) + b_ode, 0.0)

    # Fixed-step RK4 over t in [0, 1], fully unrolled (n_ode_steps is small).
    dt = 1.0 / n_ode_steps
    for _ in range(n_ode_steps):
        k1 = f(h)
        k2 = f(h + (0.5 * dt) * k1)
        k3 = f(h + (0.5 * dt) * k2)
        k4 = f(h + dt * k3)
        h = h + (dt / 6.0) * (k1 + 2.0 * k2 + 2.0 * k3 + k4)

    # Final Linear on concat(h, t): MXU for the 2H part, VPU FMAs for the
    # K=2 t-feature part.
    t_part = (tfeat_ref[:, 0:1] * wfct_ref[0:1, :]
              + tfeat_ref[:, 1:2] * wfct_ref[1:2, :])
    out_ref[...] = (jnp.dot(h.astype(jnp.bfloat16), wfch_ref[...],
                            preferred_element_type=jnp.float32)
                    + t_part + bfc_ref[...])


def bilstm_ode_fc(x_tiles, p, params, t_feat_p, *, seq, bt, hidden, out_dim,
                  n_ode_steps):
    n_tiles, rows, in_dim = x_tiles.shape
    D = 2 * hidden
    kernel = functools.partial(_bilstm_ode_fc_kernel, seq=seq, bt=bt,
                               hidden=hidden, n_ode_steps=n_ode_steps)
    return pl.pallas_call(
        kernel,
        out_shape=jax.ShapeDtypeStruct((n_tiles * bt, out_dim), jnp.float32),
        grid=(n_tiles,),
        in_specs=[pl.BlockSpec((None, rows, in_dim), lambda b: (b, 0, 0)),
                  pl.BlockSpec((in_dim, 8 * hidden), lambda b: (0, 0)),
                  pl.BlockSpec((1, 8 * hidden), lambda b: (0, 0)),
                  pl.BlockSpec((hidden, 4 * hidden), lambda b: (0, 0)),
                  pl.BlockSpec((hidden, 4 * hidden), lambda b: (0, 0)),
                  pl.BlockSpec((D, D), lambda b: (0, 0)),
                  pl.BlockSpec((1, D), lambda b: (0, 0)),
                  pl.BlockSpec((bt, 2), lambda b: (b, 0)),
                  pl.BlockSpec((D, out_dim), lambda b: (0, 0)),
                  pl.BlockSpec((2, out_dim), lambda b: (0, 0)),
                  pl.BlockSpec((1, out_dim), lambda b: (0, 0))],
        out_specs=pl.BlockSpec((bt, out_dim), lambda b: (b, 0)),
        scratch_shapes=[pltpu.VMEM((rows, 8 * hidden), jnp.float32)],
        compiler_params=pltpu.CompilerParams(
            dimension_semantics=("parallel",),
            vmem_limit_bytes=_VMEM_LIMIT),
    )(x_tiles, p["w_ih_cat"], p["b_cat"], p["w_hh_f"], p["w_hh_b"],
      params["w_ode"], params["b_ode"], t_feat_p,
      params["w_fc_h"], params["w_fc_t"], params["b_fc"])


# ---------------------------------------------------------------------------
# Parameters (deterministic init, PyTorch-like uniform ranges).  Linear weights
# are stored transposed as (in, out); LSTM biases are pre-summed (b_ih + b_hh);
# matmul weights are stored in bf16 (biases stay f32).
# ---------------------------------------------------------------------------
def init_params(key, input_dim, hidden_dim, output_dim, num_layers):
    H = hidden_dim
    bound = 1.0 / math.sqrt(H)
    lstm_params = []
    for layer in range(num_layers):
        in_dim = input_dim if layer == 0 else 2 * H
        key, kf1, kf2, kf3, kf4, kb1, kb2, kb3, kb4 = jax.random.split(key, 9)
        w_ih_f = jax.random.uniform(kf1, (in_dim, 4 * H), jnp.float32, -bound, bound)
        w_hh_f = jax.random.uniform(kf2, (H, 4 * H), jnp.float32, -bound, bound)
        b_f = (jax.random.uniform(kf3, (1, 4 * H), jnp.float32, -bound, bound)
               + jax.random.uniform(kf4, (1, 4 * H), jnp.float32, -bound, bound))
        w_ih_b = jax.random.uniform(kb1, (in_dim, 4 * H), jnp.float32, -bound, bound)
        w_hh_b = jax.random.uniform(kb2, (H, 4 * H), jnp.float32, -bound, bound)
        b_b = (jax.random.uniform(kb3, (1, 4 * H), jnp.float32, -bound, bound)
               + jax.random.uniform(kb4, (1, 4 * H), jnp.float32, -bound, bound))
        lstm_params.append({
            # Fused [fwd | bwd] input-projection weights: one (in_dim, 8H)
            # matmul fills the 256-wide v6e/v7x MXU.
            "w_ih_cat": jnp.concatenate([w_ih_f, w_ih_b], axis=1).astype(jnp.bfloat16),
            "b_cat": jnp.concatenate([b_f, b_b], axis=1),
            "w_hh_f": w_hh_f.astype(jnp.bfloat16),
            "w_hh_b": w_hh_b.astype(jnp.bfloat16),
        })

    D = 2 * H
    key, k1, k2 = jax.random.split(key, 3)
    kd = 1.0 / math.sqrt(D)
    w_ode = jax.random.uniform(k1, (D, D), jnp.float32, -kd, kd)
    b_ode = jax.random.uniform(k2, (1, D), jnp.float32, -kd, kd)

    key, k1, k2 = jax.random.split(key, 3)
    kf = 1.0 / math.sqrt(D + 2)
    w_fc = jax.random.uniform(k1, (D + 2, output_dim), jnp.float32, -kf, kf)
    b_fc = jax.random.uniform(k2, (1, output_dim), jnp.float32, -kf, kf)

    return {"lstm": lstm_params,
            "w_ode": w_ode.astype(jnp.bfloat16), "b_ode": b_ode,
            "w_fc_h": w_fc[:D].astype(jnp.bfloat16), "w_fc_t": w_fc[D:],
            "b_fc": b_fc}


# ---------------------------------------------------------------------------
# Forward pass == nODEBiLSTM.forward(x, t)
# ---------------------------------------------------------------------------
def node_bilstm_forward(params, x, t_feat, *, num_layers, n_ode_steps=8):
    # x: (batch, seq, input_dim), batch_first as in the PyTorch module.
    batch, seq, in_dim = x.shape
    hidden = params["lstm"][0]["w_hh_f"].shape[0]
    out_dim = params["b_fc"].shape[1]

    # Batch tile: pad to the f32 sublane count (8), cap per-kernel tiles at 128
    # rows; extra tiles become a "parallel" grid axis (both v7x TensorCores,
    # double-buffered pipelining elsewhere).
    bt = 128 if batch >= 128 else _round_up(batch, _SUBLANE)
    bp = _round_up(batch, bt)
    n_tiles = bp // bt

    x = x.astype(jnp.float32)
    # Wrapper-side layout only: time-major, batch padded, grouped per batch
    # tile so every in-kernel per-timestep slice/store is sublane aligned.
    xt = jnp.transpose(x, (1, 0, 2))                      # (S, B, I)
    if bp != batch:
        xt = jnp.pad(xt, ((0, 0), (0, bp - batch), (0, 0)))
    x_tiles = (xt.reshape(seq, n_tiles, bt, in_dim)
                 .transpose(1, 0, 2, 3)
                 .reshape(n_tiles, seq * bt, in_dim))

    tf = t_feat.astype(jnp.float32)
    if bp != batch:
        tf = jnp.pad(tf, ((0, bp - batch), (0, 0)))

    for layer in range(num_layers - 1):
        x_tiles = bilstm_layer(x_tiles, params["lstm"][layer],
                               seq=seq, bt=bt, hidden=hidden)

    out = bilstm_ode_fc(x_tiles, params["lstm"][num_layers - 1], params, tf,
                        seq=seq, bt=bt, hidden=hidden,
                        out_dim=out_dim, n_ode_steps=n_ode_steps)
    return out[:batch]


if __name__ == "__main__":
    batch, seq = 2, 8
    input_dim, hidden_dim, output_dim = 4, 32, 8

    key = jax.random.PRNGKey(0)
    key, kx, kt = jax.random.split(key, 3)
    x = jax.random.normal(kx, (batch, seq, input_dim), jnp.float32)
    t_feat = jax.random.normal(kt, (batch, 2), jnp.float32)

    # Single-layer config (whole forward = one fused Pallas kernel).
    params1 = init_params(jax.random.PRNGKey(0), input_dim, hidden_dim,
                          output_dim, num_layers=1)
    fwd1 = jax.jit(functools.partial(node_bilstm_forward, num_layers=1))
    out1 = jax.block_until_ready(fwd1(params1, x, t_feat))
    assert out1.shape == (batch, output_dim)
    assert bool(jnp.all(jnp.isfinite(out1)))

    # Stacked-layer smoke test (kernel A -> kernel B chaining).
    params2 = init_params(jax.random.PRNGKey(1), input_dim, hidden_dim,
                          output_dim, num_layers=2)
    fwd2 = jax.jit(functools.partial(node_bilstm_forward, num_layers=2))
    out2 = jax.block_until_ready(fwd2(params2, x, t_feat))
    assert out2.shape == (batch, output_dim)
    assert bool(jnp.all(jnp.isfinite(out2)))

    print("KERNEL_OK")
</pallas_src>

<mosaic_0001>
module attributes {stable_mosaic.version = 11 : i64} {
  func.func @_bilstm_ode_fc_kernel(%arg0: i32, %arg1: memref<1x64x4xf32, #tpu.memory_space<vmem>>, %arg2: memref<4x256xbf16, #tpu.memory_space<vmem>>, %arg3: memref<1x256xf32, #tpu.memory_space<vmem>>, %arg4: memref<32x128xbf16, #tpu.memory_space<vmem>>, %arg5: memref<32x128xbf16, #tpu.memory_space<vmem>>, %arg6: memref<64x64xbf16, #tpu.memory_space<vmem>>, %arg7: memref<1x64xf32, #tpu.memory_space<vmem>>, %arg8: memref<8x2xf32, #tpu.memory_space<vmem>>, %arg9: memref<64x8xbf16, #tpu.memory_space<vmem>>, %arg10: memref<2x8xf32, #tpu.memory_space<vmem>>, %arg11: memref<1x8xf32, #tpu.memory_space<vmem>>, %arg12: memref<8x8xf32, #tpu.memory_space<vmem>>, %arg13: memref<64x256xf32, #tpu.memory_space<vmem>>) attributes {dimension_semantics = [#tpu.dimension_semantics<parallel>], iteration_bounds = array<i64: 1>, scalar_prefetch = 0 : i64, scratch_operands = 1 : i64, tpu.core_type = #tpu.core_type<tc>, window_params = [{transform_indices = @transform_0, window_bounds = array<i64: 1, 64, 4>}, {pipeline_mode = #tpu.pipeline_mode<synchronous>, transform_indices = @transform_1, window_bounds = array<i64: 4, 256>}, {pipeline_mode = #tpu.pipeline_mode<synchronous>, transform_indices = @transform_2, window_bounds = array<i64: 1, 256>}, {pipeline_mode = #tpu.pipeline_mode<synchronous>, transform_indices = @transform_3, window_bounds = array<i64: 32, 128>}, {pipeline_mode = #tpu.pipeline_mode<synchronous>, transform_indices = @transform_4, window_bounds = array<i64: 32, 128>}, {pipeline_mode = #tpu.pipeline_mode<synchronous>, transform_indices = @transform_5, window_bounds = array<i64: 64, 64>}, {pipeline_mode = #tpu.pipeline_mode<synchronous>, transform_indices = @transform_6, window_bounds = array<i64: 1, 64>}, {transform_indices = @transform_7, window_bounds = array<i64: 8, 2>}, {pipeline_mode = #tpu.pipeline_mode<synchronous>, transform_indices = @transform_8, window_bounds = array<i64: 64, 8>}, {pipeline_mode = #tpu.pipeline_mode<synchronous>, transform_indices = @transform_9, window_bounds = array<i64: 2, 8>}, {pipeline_mode = #tpu.pipeline_mode<synchronous>, transform_indices = @transform_10, window_bounds = array<i64: 1, 8>}, {transform_indices = @transform_11, window_bounds = array<i64: 8, 8>}]} {
    %c0 = arith.constant 0 : index
    %c0_0 = arith.constant 0 : index
    %c0_1 = arith.constant 0 : index
    %0 = vector.load %arg1[%c0, %c0_0, %c0_1] : memref<1x64x4xf32, #tpu.memory_space<vmem>>, vector<1x64x4xf32>
    %1 = vector.shape_cast %0 : vector<1x64x4xf32> to vector<64x4xf32>
    %2 = arith.truncf %1 : vector<64x4xf32> to vector<64x4xbf16>
    %c0_2 = arith.constant 0 : index
    %c0_3 = arith.constant 0 : index
    %3 = vector.load %arg2[%c0_2, %c0_3] : memref<4x256xbf16, #tpu.memory_space<vmem>>, vector<4x256xbf16>
    %cst = arith.constant dense<0.000000e+00> : vector<64x256xf32>
    %4 = tpu.matmul %2, %3, %cst {dimension_numbers = #tpu.dot_dimension_numbers<[1], [0], [0], [1], [0, 0, 1, 1], [], []>} : vector<64x4xbf16>, vector<4x256xbf16>, vector<64x256xf32> -> vector<64x256xf32>
    %c0_4 = arith.constant 0 : index
    %c0_5 = arith.constant 0 : index
    %5 = vector.load %arg3[%c0_4, %c0_5] : memref<1x256xf32, #tpu.memory_space<vmem>>, vector<1x256xf32>
    %6 = vector.broadcast %5 : vector<1x256xf32> to vector<64x256xf32>
    %7 = arith.addf %4, %6 : vector<64x256xf32>
    %c0_6 = arith.constant 0 : index
    %c0_7 = arith.constant 0 : index
    %8 = vector.load %arg13[%c0_6, %c0_7] : memref<64x256xf32, #tpu.memory_space<vmem>>, vector<64x256xf32>
    tpu.vector_store %arg13[%c0_6, %c0_7], %7 {strides = array<i32>} : memref<64x256xf32, #tpu.memory_space<vmem>>, vector<64x256xf32>,
    %c0_8 = arith.constant 0 : index
    %c0_9 = arith.constant 0 : index
    %9 = vector.load %arg4[%c0_8, %c0_9] : memref<32x128xbf16, #tpu.memory_space<vmem>>, vector<32x128xbf16>
    %c0_10 = arith.constant 0 : index
    %c0_11 = arith.constant 0 : index
    %10 = vector.load %arg5[%c0_10, %c0_11] : memref<32x128xbf16, #tpu.memory_space<vmem>>, vector<32x128xbf16>
    %cst_12 = arith.constant 0.000000e+00 : f32
    %11 = vector.broadcast %cst_12 : f32 to vector<8x32xf32>
    %c0_13 = arith.constant 0 : index
    %c0_14 = arith.constant 0 : index
    %12 = vector.load %arg13[%c0_13, %c0_14] : memref<64x256xf32, #tpu.memory_space<vmem>>, vector<8x128xf32>
    %c56 = arith.constant 56 : index
    %c128 = arith.constant 128 : index
    %13 = vector.load %arg13[%c56, %c128] : memref<64x256xf32, #tpu.memory_space<vmem>>, vector<8x128xf32>
    %14 = arith.truncf %11 : vector<8x32xf32> to vector<8x32xbf16>
    %cst_15 = arith.constant dense<0.000000e+00> : vector<8x128xf32>
    %15 = tpu.matmul %14, %9, %cst_15 {dimension_numbers = #tpu.dot_dimension_numbers<[1], [0], [0], [1], [0, 0, 1, 1], [], []>} : vector<8x32xbf16>, vector<32x128xbf16>, vector<8x128xf32> -> vector<8x128xf32>
    %16 = arith.addf %12, %15 : vector<8x128xf32>
    %17 = arith.negf %16 : vector<8x128xf32>
    %18 = math.exp %17 : vector<8x128xf32>
    %cst_16 = arith.constant 1.000000e+00 : f32
    %19 = vector.broadcast %cst_16 : f32 to vector<8x128xf32>
    %20 = arith.addf %19, %18 : vector<8x128xf32>
    %21 = arith.divf %19, %20 : vector<8x128xf32>
    %22 = math.tanh %16 : vector<8x128xf32>
    %23 = vector.extract_strided_slice %21 {offsets = [0, 0], sizes = [8, 32], strides = [1, 1]} : vector<8x128xf32> to vector<8x32xf32>
    %24 = vector.extract_strided_slice %21 {offsets = [0, 32], sizes = [8, 32], strides = [1, 1]} : vector<8x128xf32> to vector<8x32xf32>
    %25 = vector.extract_strided_slice %22 {offsets = [0, 64], sizes = [8, 32], strides = [1, 1]} : vector<8x128xf32> to vector<8x32xf32>
    %26 = vector.extract_strided_slice %21 {offsets = [0, 96], sizes = [8, 32], strides = [1, 1]} : vector<8x128xf32> to vector<8x32xf32>
    %27 = arith.mulf %24, %11 : vector<8x32xf32>
    %28 = arith.mulf %23, %25 : vector<8x32xf32>
    %29 = arith.addf %27, %28 : vector<8x32xf32>
    %30 = math.tanh %29 : vector<8x32xf32>
    %31 = arith.mulf %26, %30 : vector<8x32xf32>
    %32 = arith.truncf %11 : vector<8x32xf32> to vector<8x32xbf16>
    %cst_17 = arith.constant dense<0.000000e+00> : vector<8x128xf32>
    %33 = tpu.matmul %32, %10, %cst_17 {dimension_numbers = #tpu.dot_dimension_numbers<[1], [0], [0], [1], [0, 0, 1, 1], [], []>} : vector<8x32xbf16>, vector<32x128xbf16>, vector<8x128xf32> -> vector<8x128xf32>
    %34 = arith.addf %13, %33 : vector<8x128xf32>
    %35 = arith.negf %34 : vector<8x128xf32>
    %36 = math.exp %35 : vector<8x128xf32>
    %cst_18 = arith.constant 1.000000e+00 : f32
    %37 = vector.broadcast %cst_18 : f32 to vector<8x128xf32>
    %38 = arith.addf %37, %36 : vector<8x128xf32>
    %39 = arith.divf %37, %38 : vector<8x128xf32>
    %40 = math.tanh %34 : vector<8x128xf32>
    %41 = vector.extract_strided_slice %39 {offsets = [0, 0], sizes = [8, 32], strides = [1, 1]} : vector<8x128xf32> to vector<8x32xf32>
    %42 = vector.extract_strided_slice %39 {offsets = [0, 32], sizes = [8, 32], strides = [1, 1]} : vector<8x128xf32> to vector<8x32xf32>
    %43 = vector.extract_strided_slice %40 {offsets = [0, 64], sizes = [8, 32], strides = [1, 1]} : vector<8x128xf32> to vector<8x32xf32>
    %44 = vector.extract_strided_slice %39 {offsets = [0, 96], sizes = [8, 32], strides = [1, 1]} : vector<8x128xf32> to vector<8x32xf32>
    %45 = arith.mulf %42, %11 : vector<8x32xf32>
    %46 = arith.mulf %41, %43 : vector<8x32xf32>
    %47 = arith.addf %45, %46 : vector<8x32xf32>
    %48 = math.tanh %47 : vector<8x32xf32>
    %49 = arith.mulf %44, %48 : vector<8x32xf32>
    %c8 = arith.constant 8 : index
    %c0_19 = arith.constant 0 : index
    %50 = vector.load %arg13[%c8, %c0_19] : memref<64x256xf32, #tpu.memory_space<vmem>>, vector<8x128xf32>
    %51 = arith.truncf %31 : vector<8x32xf32> to vector<8x32xbf16>
    %cst_20 = arith.constant dense<0.000000e+00> : vector<8x128xf32>
    %52 = tpu.matmul %51, %9, %cst_20 {dimension_numbers = #tpu.dot_dimension_numbers<[1], [0], [0], [1], [0, 0, 1, 1], [], []>} : vector<8x32xbf16>, vector<32x128xbf16>, vector<8x128xf32> -> vector<8x128xf32>
    %53 = arith.addf %50, %52 : vector<8x128xf32>
    %54 = arith.negf %53 : vector<8x128xf32>
    %55 = math.exp %54 : vector<8x128xf32>
    %cst_21 = arith.constant 1.000000e+00 : f32
    %56 = vector.broadcast %cst_21 : f32 to vector<8x128xf32>
    %57 = arith.addf %56, %55 : vector<8x128xf32>
    %58 = arith.divf %56, %57 : vector<8x128xf32>
    %59 = math.tanh %53 : vector<8x128xf32>
    %60 = vector.extract_strided_slice %58 {offsets = [0, 0], sizes = [8, 32], strides = [1, 1]} : vector<8x128xf32> to vector<8x32xf32>
    %61 = vector.extract_strided_slice %58 {offsets = [0, 32], sizes = [8, 32], strides = [1, 1]} : vector<8x128xf32> to vector<8x32xf32>
    %62 = vector.extract_strided_slice %59 {offsets = [0, 64], sizes = [8, 32], strides = [1, 1]} : vector<8x128xf32> to vector<8x32xf32>
    %63 = vector.extract_strided_slice %58 {offsets = [0, 96], sizes = [8, 32], strides = [1, 1]} : vector<8x128xf32> to vector<8x32xf32>
    %64 = arith.mulf %61, %29 : vector<8x32xf32>
    %65 = arith.mulf %60, %62 : vector<8x32xf32>
    %66 = arith.addf %64, %65 : vector<8x32xf32>
    %67 = math.tanh %66 : vector<8x32xf32>
    %68 = arith.mulf %63, %67 : vector<8x32xf32>
    %c16 = arith.constant 16 : index
    %c0_22 = arith.constant 0 : index
    %69 = vector.load %arg13[%c16, %c0_22] : memref<64x256xf32, #tpu.memory_space<vmem>>, vector<8x128xf32>
    %70 = arith.truncf %68 : vector<8x32xf32> to vector<8x32xbf16>
    %cst_23 = arith.constant dense<0.000000e+00> : vector<8x128xf32>
    %71 = tpu.matmul %70, %9, %cst_23 {dimension_numbers = #tpu.dot_dimension_numbers<[1], [0], [0], [1], [0, 0, 1, 1], [], []>} : vector<8x32xbf16>, vector<32x128xbf16>, vector<8x128xf32> -> vector<8x128xf32>
    %72 = arith.addf %69, %71 : vector<8x128xf32>
    %73 = arith.negf %72 : vector<8x128xf32>
    %74 = math.exp %73 : vector<8x128xf32>
    %cst_24 = arith.constant 1.000000e+00 : f32
    %75 = vector.broadcast %cst_24 : f32 to vector<8x128xf32>
    %76 = arith.addf %75, %74 : vector<8x128xf32>
    %77 = arith.divf %75, %76 : vector<8x128xf32>
    %78 = math.tanh %72 : vector<8x128xf32>
    %79 = vector.extract_strided_slice %77 {offsets = [0, 0], sizes = [8, 32], strides = [1, 1]} : vector<8x128xf32> to vector<8x32xf32>
    %80 = vector.extract_strided_slice %77 {offsets = [0, 32], sizes = [8, 32], strides = [1, 1]} : vector<8x128xf32> to vector<8x32xf32>
    %81 = vector.extract_strided_slice %78 {offsets = [0, 64], sizes = [8, 32], strides = [1, 1]} : vector<8x128xf32> to vector<8x32xf32>
    %82 = vector.extract_strided_slice %77 {offsets = [0, 96], sizes = [8, 32], strides = [1, 1]} : vector<8x128xf32> to vector<8x32xf32>
    %83 = arith.mulf %80, %66 : vector<8x32xf32>
    %84 = arith.mulf %79, %81 : vector<8x32xf32>
    %85 = arith.addf %83, %84 : vector<8x32xf32>
    %86 = math.tanh %85 : vector<8x32xf32>
    %87 = arith.mulf %82, %86 : vector<8x32xf32>
    %c24 = arith.constant 24 : index
    %c0_25 = arith.constant 0 : index
    %88 = vector.load %arg13[%c24, %c0_25] : memref<64x256xf32, #tpu.memory_space<vmem>>, vector<8x128xf32>
    %89 = arith.truncf %87 : vector<8x32xf32> to vector<8x32xbf16>
    %cst_26 = arith.constant dense<0.000000e+00> : vector<8x128xf32>
    %90 = tpu.matmul %89, %9, %cst_26 {dimension_numbers = #tpu.dot_dimension_numbers<[1], [0], [0], [1], [0, 0, 1, 1], [], []>} : vector<8x32xbf16>, vector<32x128xbf16>, vector<8x128xf32> -> vector<8x128xf32>
    %91 = arith.addf %88, %90 : vector<8x128xf32>
    %92 = arith.negf %91 : vector<8x128xf32>
    %93 = math.exp %92 : vector<8x128xf32>
    %cst_27 = arith.constant 1.000000e+00 : f32
    %94 = vector.broadcast %cst_27 : f32 to vector<8x128xf32>
    %95 = arith.addf %94, %93 : vector<8x128xf32>
    %96 = arith.divf %94, %95 : vector<8x128xf32>
    %97 = math.tanh %91 : vector<8x128xf32>
    %98 = vector.extract_strided_slice %96 {offsets = [0, 0], sizes = [8, 32], strides = [1, 1]} : vector<8x128xf32> to vector<8x32xf32>
    %99 = vector.extract_strided_slice %96 {offsets = [0, 32], sizes = [8, 32], strides = [1, 1]} : vector<8x128xf32> to vector<8x32xf32>
    %100 = vector.extract_strided_slice %97 {offsets = [0, 64], sizes = [8, 32], strides = [1, 1]} : vector<8x128xf32> to vector<8x32xf32>
    %101 = vector.extract_strided_slice %96 {offsets = [0, 96], sizes = [8, 32], strides = [1, 1]} : vector<8x128xf32> to vector<8x32xf32>
    %102 = arith.mulf %99, %85 : vector<8x32xf32>
    %103 = arith.mulf %98, %100 : vector<8x32xf32>
    %104 = arith.addf %102, %103 : vector<8x32xf32>
    %105 = math.tanh %104 : vector<8x32xf32>
    %106 = arith.mulf %101, %105 : vector<8x32xf32>
    %c32 = arith.constant 32 : index
    %c0_28 = arith.constant 0 : index
    %107 = vector.load %arg13[%c32, %c0_28] : memref<64x256xf32, #tpu.memory_space<vmem>>, vector<8x128xf32>
    %108 = arith.truncf %106 : vector<8x32xf32> to vector<8x32xbf16>
    %cst_29 = arith.constant dense<0.000000e+00> : vector<8x128xf32>
    %109 = tpu.matmul %108, %9, %cst_29 {dimension_numbers = #tpu.dot_dimension_numbers<[1], [0], [0], [1], [0, 0, 1, 1], [], []>} : vector<8x32xbf16>, vector<32x128xbf16>, vector<8x128xf32> -> vector<8x128xf32>
    %110 = arith.addf %107, %109 : vector<8x128xf32>
    %111 = arith.negf %110 : vector<8x128xf32>
    %112 = math.exp %111 : vector<8x128xf32>
    %cst_30 = arith.constant 1.000000e+00 : f32
    %113 = vector.broadcast %cst_30 : f32 to vector<8x128xf32>
    %114 = arith.addf %113, %112 : vector<8x128xf32>
    %115 = arith.divf %113, %114 : vector<8x128xf32>
    %116 = math.tanh %110 : vector<8x128xf32>
    %117 = vector.extract_strided_slice %115 {offsets = [0, 0], sizes = [8, 32], strides = [1, 1]} : vector<8x128xf32> to vector<8x32xf32>
    %118 = vector.extract_strided_slice %115 {offsets = [0, 32], sizes = [8, 32], strides = [1, 1]} : vector<8x128xf32> to vector<8x32xf32>
    %119 = vector.extract_strided_slice %116 {offsets = [0, 64], sizes = [8, 32], strides = [1, 1]} : vector<8x128xf32> to vector<8x32xf32>
    %120 = vector.extract_strided_slice %115 {offsets = [0, 96], sizes = [8, 32], strides = [1, 1]} : vector<8x128xf32> to vector<8x32xf32>
    %121 = arith.mulf %118, %104 : vector<8x32xf32>
    %122 = arith.mulf %117, %119 : vector<8x32xf32>
    %123 = arith.addf %121, %122 : vector<8x32xf32>
    %124 = math.tanh %123 : vector<8x32xf32>
    %125 = arith.mulf %120, %124 : vector<8x32xf32>
    %c40 = arith.constant 40 : index
    %c0_31 = arith.constant 0 : index
    %126 = vector.load %arg13[%c40, %c0_31] : memref<64x256xf32, #tpu.memory_space<vmem>>, vector<8x128xf32>
    %127 = arith.truncf %125 : vector<8x32xf32> to vector<8x32xbf16>
    %cst_32 = arith.constant dense<0.000000e+00> : vector<8x128xf32>
    %128 = tpu.matmul %127, %9, %cst_32 {dimension_numbers = #tpu.dot_dimension_numbers<[1], [0], [0], [1], [0, 0, 1, 1], [], []>} : vector<8x32xbf16>, vector<32x128xbf16>, vector<8x128xf32> -> vector<8x128xf32>
    %129 = arith.addf %126, %128 : vector<8x128xf32>
    %130 = arith.negf %129 : vector<8x128xf32>
    %131 = math.exp %130 : vector<8x128xf32>
    %cst_33 = arith.constant 1.000000e+00 : f32
    %132 = vector.broadcast %cst_33 : f32 to vector<8x128xf32>
    %133 = arith.addf %132, %131 : vector<8x128xf32>
    %134 = arith.divf %132, %133 : vector<8x128xf32>
    %135 = math.tanh %129 : vector<8x128xf32>
    %136 = vector.extract_strided_slice %134 {offsets = [0, 0], sizes = [8, 32], strides = [1, 1]} : vector<8x128xf32> to vector<8x32xf32>
    %137 = vector.extract_strided_slice %134 {offsets = [0, 32], sizes = [8, 32], strides = [1, 1]} : vector<8x128xf32> to vector<8x32xf32>
    %138 = vector.extract_strided_slice %135 {offsets = [0, 64], sizes = [8, 32], strides = [1, 1]} : vector<8x128xf32> to vector<8x32xf32>
    %139 = vector.extract_strided_slice %134 {offsets = [0, 96], sizes = [8, 32], strides = [1, 1]} : vector<8x128xf32> to vector<8x32xf32>
    %140 = arith.mulf %137, %123 : vector<8x32xf32>
    %141 = arith.mulf %136, %138 : vector<8x32xf32>
    %142 = arith.addf %140, %141 : vector<8x32xf32>
    %143 = math.tanh %142 : vector<8x32xf32>
    %144 = arith.mulf %139, %143 : vector<8x32xf32>
    %c48 = arith.constant 48 : index
    %c0_34 = arith.constant 0 : index
    %145 = vector.load %arg13[%c48, %c0_34] : memref<64x256xf32, #tpu.memory_space<vmem>>, vector<8x128xf32>
    %146 = arith.truncf %144 : vector<8x32xf32> to vector<8x32xbf16>
    %cst_35 = arith.constant dense<0.000000e+00> : vector<8x128xf32>
    %147 = tpu.matmul %146, %9, %cst_35 {dimension_numbers = #tpu.dot_dimension_numbers<[1], [0], [0], [1], [0, 0, 1, 1], [], []>} : vector<8x32xbf16>, vector<32x128xbf16>, vector<8x128xf32> -> vector<8x128xf32>
    %148 = arith.addf %145, %147 : vector<8x128xf32>
    %149 = arith.negf %148 : vector<8x128xf32>
    %150 = math.exp %149 : vector<8x128xf32>
    %cst_36 = arith.constant 1.000000e+00 : f32
    %151 = vector.broadcast %cst_36 : f32 to vector<8x128xf32>
    %152 = arith.addf %151, %150 : vector<8x128xf32>
    %153 = arith.divf %151, %152 : vector<8x128xf32>
    %154 = math.tanh %148 : vector<8x128xf32>
    %155 = vector.extract_strided_slice %153 {offsets = [0, 0], sizes = [8, 32], strides = [1, 1]} : vector<8x128xf32> to vector<8x32xf32>
    %156 = vector.extract_strided_slice %153 {offsets = [0, 32], sizes = [8, 32], strides = [1, 1]} : vector<8x128xf32> to vector<8x32xf32>
    %157 = vector.extract_strided_slice %154 {offsets = [0, 64], sizes = [8, 32], strides = [1, 1]} : vector<8x128xf32> to vector<8x32xf32>
    %158 = vector.extract_strided_slice %153 {offsets = [0, 96], sizes = [8, 32], strides = [1, 1]} : vector<8x128xf32> to vector<8x32xf32>
    %159 = arith.mulf %156, %142 : vector<8x32xf32>
    %160 = arith.mulf %155, %157 : vector<8x32xf32>
    %161 = arith.addf %159, %160 : vector<8x32xf32>
    %162 = math.tanh %161 : vector<8x32xf32>
    %163 = arith.mulf %158, %162 : vector<8x32xf32>
    %c56_37 = arith.constant 56 : index
    %c0_38 = arith.constant 0 : index
    %164 = vector.load %arg13[%c56_37, %c0_38] : memref<64x256xf32, #tpu.memory_space<vmem>>, vector<8x128xf32>
    %165 = arith.truncf %163 : vector<8x32xf32> to vector<8x32xbf16>
    %cst_39 = arith.constant dense<0.000000e+00> : vector<8x128xf32>
    %166 = tpu.matmul %165, %9, %cst_39 {dimension_numbers = #tpu.dot_dimension_numbers<[1], [0], [0], [1], [0, 0, 1, 1], [], []>} : vector<8x32xbf16>, vector<32x128xbf16>, vector<8x128xf32> -> vector<8x128xf32>
    %167 = arith.addf %164, %166 : vector<8x128xf32>
    %168 = arith.negf %167 : vector<8x128xf32>
    %169 = math.exp %168 : vector<8x128xf32>
    %cst_40 = arith.constant 1.000000e+00 : f32
    %170 = vector.broadcast %cst_40 : f32 to vector<8x128xf32>
    %171 = arith.addf %170, %169 : vector<8x128xf32>
    %172 = arith.divf %170, %171 : vector<8x128xf32>
    %173 = math.tanh %167 : vector<8x128xf32>
    %174 = vector.extract_strided_slice %172 {offsets = [0, 0], sizes = [8, 32], strides = [1, 1]} : vector<8x128xf32> to vector<8x32xf32>
    %175 = vector.extract_strided_slice %172 {offsets = [0, 32], sizes = [8, 32], strides = [1, 1]} : vector<8x128xf32> to vector<8x32xf32>
    %176 = vector.extract_strided_slice %173 {offsets = [0, 64], sizes = [8, 32], strides = [1, 1]} : vector<8x128xf32> to vector<8x32xf32>
    %177 = vector.extract_strided_slice %172 {offsets = [0, 96], sizes = [8, 32], strides = [1, 1]} : vector<8x128xf32> to vector<8x32xf32>
    %178 = arith.mulf %175, %161 : vector<8x32xf32>
    %179 = arith.mulf %174, %176 : vector<8x32xf32>
    %180 = arith.addf %178, %179 : vector<8x32xf32>
    %181 = math.tanh %180 : vector<8x32xf32>
    %182 = arith.mulf %177, %181 : vector<8x32xf32>
    %183 = tpu.concatenate %182, %49 in 1 : vector<8x32xf32>, vector<8x32xf32> -> vector<8x64xf32>
    %c0_41 = arith.constant 0 : index
    %c0_42 = arith.constant 0 : index
    %184 = vector.load %arg6[%c0_41, %c0_42] : memref<64x64xbf16, #tpu.memory_space<vmem>>, vector<64x64xbf16>
    %c0_43 = arith.constant 0 : index
    %c0_44 = arith.constant 0 : index
    %185 = vector.load %arg7[%c0_43, %c0_44] : memref<1x64xf32, #tpu.memory_space<vmem>>, vector<1x64xf32>
    %186 = arith.truncf %183 : vector<8x64xf32> to vector<8x64xbf16>
    %cst_45 = arith.constant dense<0.000000e+00> : vector<8x64xf32>
    %187 = tpu.matmul %186, %184, %cst_45 {dimension_numbers = #tpu.dot_dimension_numbers<[1], [0], [0], [1], [0, 0, 1, 1], [], []>} : vector<8x64xbf16>, vector<64x64xbf16>, vector<8x64xf32> -> vector<8x64xf32>
    %188 = vector.broadcast %185 : vector<1x64xf32> to vector<8x64xf32>
    %189 = arith.addf %187, %188 : vector<8x64xf32>
    %cst_46 = arith.constant 0.000000e+00 : f32
    %190 = vector.broadcast %cst_46 : f32 to vector<8x64xf32>
    %191 = arith.maximumf %189, %190 : vector<8x64xf32>
    %cst_47 = arith.constant 6.250000e-02 : f32
    %192 = vector.broadcast %cst_47 : f32 to vector<8x64xf32>
    %193 = arith.mulf %192, %191 : vector<8x64xf32>
    %194 = arith.addf %183, %193 : vector<8x64xf32>
    %195 = arith.truncf %194 : vector<8x64xf32> to vector<8x64xbf16>
    %cst_48 = arith.constant dense<0.000000e+00> : vector<8x64xf32>
    %196 = tpu.matmul %195, %184, %cst_48 {dimension_numbers = #tpu.dot_dimension_numbers<[1], [0], [0], [1], [0, 0, 1, 1], [], []>} : vector<8x64xbf16>, vector<64x64xbf16>, vector<8x64xf32> -> vector<8x64xf32>
    %197 = vector.broadcast %185 : vector<1x64xf32> to vector<8x64xf32>
    %198 = arith.addf %196, %197 : vector<8x64xf32>
    %cst_49 = arith.constant 0.000000e+00 : f32
    %199 = vector.broadcast %cst_49 : f32 to vector<8x64xf32>
    %200 = arith.maximumf %198, %199 : vector<8x64xf32>
    %cst_50 = arith.constant 6.250000e-02 : f32
    %201 = vector.broadcast %cst_50 : f32 to vector<8x64xf32>
    %202 = arith.mulf %201, %200 : vector<8x64xf32>
    %203 = arith.addf %183, %202 : vector<8x64xf32>
    %204 = arith.truncf %203 : vector<8x64xf32> to vector<8x64xbf16>
    %cst_51 = arith.constant dense<0.000000e+00> : vector<8x64xf32>
    %205 = tpu.matmul %204, %184, %cst_51 {dimension_numbers = #tpu.dot_dimension_numbers<[1], [0], [0], [1], [0, 0, 1, 1], [], []>} : vector<8x64xbf16>, vector<64x64xbf16>, vector<8x64xf32> -> vector<8x64xf32>
    %206 = vector.broadcast %185 : vector<1x64xf32> to vector<8x64xf32>
    %207 = arith.addf %205, %206 : vector<8x64xf32>
    %cst_52 = arith.constant 0.000000e+00 : f32
    %208 = vector.broadcast %cst_52 : f32 to vector<8x64xf32>
    %209 = arith.maximumf %207, %208 : vector<8x64xf32>
    %cst_53 = arith.constant 1.250000e-01 : f32
    %210 = vector.broadcast %cst_53 : f32 to vector<8x64xf32>
    %211 = arith.mulf %210, %209 : vector<8x64xf32>
    %212 = arith.addf %183, %211 : vector<8x64xf32>
    %213 = arith.truncf %212 : vector<8x64xf32> to vector<8x64xbf16>
    %cst_54 = arith.constant dense<0.000000e+00> : vector<8x64xf32>
    %214 = tpu.matmul %213, %184, %cst_54 {dimension_numbers = #tpu.dot_dimension_numbers<[1], [0], [0], [1], [0, 0, 1, 1], [], []>} : vector<8x64xbf16>, vector<64x64xbf16>, vector<8x64xf32> -> vector<8x64xf32>
    %215 = vector.broadcast %185 : vector<1x64xf32> to vector<8x64xf32>
    %216 = arith.addf %214, %215 : vector<8x64xf32>
    %cst_55 = arith.constant 0.000000e+00 : f32
    %217 = vector.broadcast %cst_55 : f32 to vector<8x64xf32>
    %218 = arith.maximumf %216, %217 : vector<8x64xf32>
    %cst_56 = arith.constant 2.000000e+00 : f32
    %219 = vector.broadcast %cst_56 : f32 to vector<8x64xf32>
    %220 = arith.mulf %219, %200 : vector<8x64xf32>
    %221 = arith.addf %191, %220 : vector<8x64xf32>
    %cst_57 = arith.constant 2.000000e+00 : f32
    %222 = vector.broadcast %cst_57 : f32 to vector<8x64xf32>
    %223 = arith.mulf %222, %209 : vector<8x64xf32>
    %224 = arith.addf %221, %223 : vector<8x64xf32>
    %225 = arith.addf %224, %218 : vector<8x64xf32>
    %cst_58 = arith.constant 0.020833334 : f32
    %226 = vector.broadcast %cst_58 : f32 to vector<8x64xf32>
    %227 = arith.mulf %226, %225 : vector<8x64xf32>
    %228 = arith.addf %183, %227 : vector<8x64xf32>
    %229 = arith.truncf %228 : vector<8x64xf32> to vector<8x64xbf16>
    %cst_59 = arith.constant dense<0.000000e+00> : vector<8x64xf32>
    %230 = tpu.matmul %229, %184, %cst_59 {dimension_numbers = #tpu.dot_dimension_numbers<[1], [0], [0], [1], [0, 0, 1, 1], [], []>} : vector<8x64xbf16>, vector<64x64xbf16>, vector<8x64xf32> -> vector<8x64xf32>
    %231 = vector.broadcast %185 : vector<1x64xf32> to vector<8x64xf32>
    %232 = arith.addf %230, %231 : vector<8x64xf32>
    %cst_60 = arith.constant 0.000000e+00 : f32
    %233 = vector.broadcast %cst_60 : f32 to vector<8x64xf32>
    %234 = arith.maximumf %232, %233 : vector<8x64xf32>
    %cst_61 = arith.constant 6.250000e-02 : f32
    %235 = vector.broadcast %cst_61 : f32 to vector<8x64xf32>
    %236 = arith.mulf %235, %234 : vector<8x64xf32>
    %237 = arith.addf %228, %236 : vector<8x64xf32>
    %238 = arith.truncf %237 : vector<8x64xf32> to vector<8x64xbf16>
    %cst_62 = arith.constant dense<0.000000e+00> : vector<8x64xf32>
    %239 = tpu.matmul %238, %184, %cst_62 {dimension_numbers = #tpu.dot_dimension_numbers<[1], [0], [0], [1], [0, 0, 1, 1], [], []>} : vector<8x64xbf16>, vector<64x64xbf16>, vector<8x64xf32> -> vector<8x64xf32>
    %240 = vector.broadcast %185 : vector<1x64xf32> to vector<8x64xf32>
    %241 = arith.addf %239, %240 : vector<8x64xf32>
    %cst_63 = arith.constant 0.000000e+00 : f32
    %242 = vector.broadcast %cst_63 : f32 to vector<8x64xf32>
    %243 = arith.maximumf %241, %242 : vector<8x64xf32>
    %cst_64 = arith.constant 6.250000e-02 : f32
    %244 = vector.broadcast %cst_64 : f32 to vector<8x64xf32>
    %245 = arith.mulf %244, %243 : vector<8x64xf32>
    %246 = arith.addf %228, %245 : vector<8x64xf32>
    %247 = arith.truncf %246 : vector<8x64xf32> to vector<8x64xbf16>
    %cst_65 = arith.constant dense<0.000000e+00> : vector<8x64xf32>
    %248 = tpu.matmul %247, %184, %cst_65 {dimension_numbers = #tpu.dot_dimension_numbers<[1], [0], [0], [1], [0, 0, 1, 1], [], []>} : vector<8x64xbf16>, vector<64x64xbf16>, vector<8x64xf32> -> vector<8x64xf32>
    %249 = vector.broadcast %185 : vector<1x64xf32> to vector<8x64xf32>
    %250 = arith.addf %248, %249 : vector<8x64xf32>
    %cst_66 = arith.constant 0.000000e+00 : f32
    %251 = vector.broadcast %cst_66 : f32 to vector<8x64xf32>
    %252 = arith.maximumf %250, %251 : vector<8x64xf32>
    %cst_67 = arith.constant 1.250000e-01 : f32
    %253 = vector.broadcast %cst_67 : f32 to vector<8x64xf32>
    %254 = arith.mulf %253, %252 : vector<8x64xf32>
    %255 = arith.addf %228, %254 : vector<8x64xf32>
    %256 = arith.truncf %255 : vector<8x64xf32> to vector<8x64xbf16>
    %cst_68 = arith.constant dense<0.000000e+00> : vector<8x64xf32>
    %257 = tpu.matmul %256, %184, %cst_68 {dimension_numbers = #tpu.dot_dimension_numbers<[1], [0], [0], [1], [0, 0, 1, 1], [], []>} : vector<8x64xbf16>, vector<64x64xbf16>, vector<8x64xf32> -> vector<8x64xf32>
    %258 = vector.broadcast %185 : vector<1x64xf32> to vector<8x64xf32>
    %259 = arith.addf %257, %258 : vector<8x64xf32>
    %cst_69 = arith.constant 0.000000e+00 : f32
    %260 = vector.broadcast %cst_69 : f32 to vector<8x64xf32>
    %261 = arith.maximumf %259, %260 : vector<8x64xf32>
    %cst_70 = arith.constant 2.000000e+00 : f32
    %262 = vector.broadcast %cst_70 : f32 to vector<8x64xf32>
    %263 = arith.mulf %262, %243 : vector<8x64xf32>
    %264 = arith.addf %234, %263 : vector<8x64xf32>
    %cst_71 = arith.constant 2.000000e+00 : f32
    %265 = vector.broadcast %cst_71 : f32 to vector<8x64xf32>
    %266 = arith.mulf %265, %252 : vector<8x64xf32>
    %267 = arith.addf %264, %266 : vector<8x64xf32>
    %268 = arith.addf %267, %261 : vector<8x64xf32>
    %cst_72 = arith.constant 0.020833334 : f32
    %269 = vector.broadcast %cst_72 : f32 to vector<8x64xf32>
    %270 = arith.mulf %269, %268 : vector<8x64xf32>
    %271 = arith.addf %228, %270 : vector<8x64xf32>
    %272 = arith.truncf %271 : vector<8x64xf32> to vector<8x64xbf16>
    %cst_73 = arith.constant dense<0.000000e+00> : vector<8x64xf32>
    %273 = tpu.matmul %272, %184, %cst_73 {dimension_numbers = #tpu.dot_dimension_numbers<[1], [0], [0], [1], [0, 0, 1, 1], [], []>} : vector<8x64xbf16>, vector<64x64xbf16>, vector<8x64xf32> -> vector<8x64xf32>
    %274 = vector.broadcast %185 : vector<1x64xf32> to vector<8x64xf32>
    %275 = arith.addf %273, %274 : vector<8x64xf32>
    %cst_74 = arith.constant 0.000000e+00 : f32
    %276 = vector.broadcast %cst_74 : f32 to vector<8x64xf32>
    %277 = arith.maximumf %275, %276 : vector<8x64xf32>
    %cst_75 = arith.constant 6.250000e-02 : f32
    %278 = vector.broadcast %cst_75 : f32 to vector<8x64xf32>
    %279 = arith.mulf %278, %277 : vector<8x64xf32>
    %280 = arith.addf %271, %279 : vector<8x64xf32>
    %281 = arith.truncf %280 : vector<8x64xf32> to vector<8x64xbf16>
    %cst_76 = arith.constant dense<0.000000e+00> : vector<8x64xf32>
    %282 = tpu.matmul %281, %184, %cst_76 {dimension_numbers = #tpu.dot_dimension_numbers<[1], [0], [0], [1], [0, 0, 1, 1], [], []>} : vector<8x64xbf16>, vector<64x64xbf16>, vector<8x64xf32> -> vector<8x64xf32>
    %283 = vector.broadcast %185 : vector<1x64xf32> to vector<8x64xf32>
    %284 = arith.addf %282, %283 : vector<8x64xf32>
    %cst_77 = arith.constant 0.000000e+00 : f32
    %285 = vector.broadcast %cst_77 : f32 to vector<8x64xf32>
    %286 = arith.maximumf %284, %285 : vector<8x64xf32>
    %cst_78 = arith.constant 6.250000e-02 : f32
    %287 = vector.broadcast %cst_78 : f32 to vector<8x64xf32>
    %288 = arith.mulf %287, %286 : vector<8x64xf32>
    %289 = arith.addf %271, %288 : vector<8x64xf32>
    %290 = arith.truncf %289 : vector<8x64xf32> to vector<8x64xbf16>
    %cst_79 = arith.constant dense<0.000000e+00> : vector<8x64xf32>
    %291 = tpu.matmul %290, %184, %cst_79 {dimension_numbers = #tpu.dot_dimension_numbers<[1], [0], [0], [1], [0, 0, 1, 1], [], []>} : vector<8x64xbf16>, vector<64x64xbf16>, vector<8x64xf32> -> vector<8x64xf32>
    %292 = vector.broadcast %185 : vector<1x64xf32> to vector<8x64xf32>
    %293 = arith.addf %291, %292 : vector<8x64xf32>
    %cst_80 = arith.constant 0.000000e+00 : f32
    %294 = vector.broadcast %cst_80 : f32 to vector<8x64xf32>
    %295 = arith.maximumf %293, %294 : vector<8x64xf32>
    %cst_81 = arith.constant 1.250000e-01 : f32
    %296 = vector.broadcast %cst_81 : f32 to vector<8x64xf32>
    %297 = arith.mulf %296, %295 : vector<8x64xf32>
    %298 = arith.addf %271, %297 : vector<8x64xf32>
    %299 = arith.truncf %298 : vector<8x64xf32> to vector<8x64xbf16>
    %cst_82 = arith.constant dense<0.000000e+00> : vector<8x64xf32>
    %300 = tpu.matmul %299, %184, %cst_82 {dimension_numbers = #tpu.dot_dimension_numbers<[1], [0], [0], [1], [0, 0, 1, 1], [], []>} : vector<8x64xbf16>, vector<64x64xbf16>, vector<8x64xf32> -> vector<8x64xf32>
    %301 = vector.broadcast %185 : vector<1x64xf32> to vector<8x64xf32>
    %302 = arith.addf %300, %301 : vector<8x64xf32>
    %cst_83 = arith.constant 0.000000e+00 : f32
    %303 = vector.broadcast %cst_83 : f32 to vector<8x64xf32>
    %304 = arith.maximumf %302, %303 : vector<8x64xf32>
    %cst_84 = arith.constant 2.000000e+00 : f32
    %305 = vector.broadcast %cst_84 : f32 to vector<8x64xf32>
    %306 = arith.mulf %305, %286 : vector<8x64xf32>
    %307 = arith.addf %277, %306 : vector<8x64xf32>
    %cst_85 = arith.constant 2.000000e+00 : f32
    %308 = vector.broadcast %cst_85 : f32 to vector<8x64xf32>
    %309 = arith.mulf %308, %295 : vector<8x64xf32>
    %310 = arith.addf %307, %309 : vector<8x64xf32>
    %311 = arith.addf %310, %304 : vector<8x64xf32>
    %cst_86 = arith.constant 0.020833334 : f32
    %312 = vector.broadcast %cst_86 : f32 to vector<8x64xf32>
    %313 = arith.mulf %312, %311 : vector<8x64xf32>
    %314 = arith.addf %271, %313 : vector<8x64xf32>
    %315 = arith.truncf %314 : vector<8x64xf32> to vector<8x64xbf16>
    %cst_87 = arith.constant dense<0.000000e+00> : vector<8x64xf32>
    %316 = tpu.matmul %315, %184, %cst_87 {dimension_numbers = #tpu.dot_dimension_numbers<[1], [0], [0], [1], [0, 0, 1, 1], [], []>} : vector<8x64xbf16>, vector<64x64xbf16>, vector<8x64xf32> -> vector<8x64xf32>
    %317 = vector.broadcast %185 : vector<1x64xf32> to vector<8x64xf32>
    %318 = arith.addf %316, %317 : vector<8x64xf32>
    %cst_88 = arith.constant 0.000000e+00 : f32
    %319 = vector.broadcast %cst_88 : f32 to vector<8x64xf32>
    %320 = arith.maximumf %318, %319 : vector<8x64xf32>
    %cst_89 = arith.constant 6.250000e-02 : f32
    %321 = vector.broadcast %cst_89 : f32 to vector<8x64xf32>
    %322 = arith.mulf %321, %320 : vector<8x64xf32>
    %323 = arith.addf %314, %322 : vector<8x64xf32>
    %324 = arith.truncf %323 : vector<8x64xf32> to vector<8x64xbf16>
    %cst_90 = arith.constant dense<0.000000e+00> : vector<8x64xf32>
    %325 = tpu.matmul %324, %184, %cst_90 {dimension_numbers = #tpu.dot_dimension_numbers<[1], [0], [0], [1], [0, 0, 1, 1], [], []>} : vector<8x64xbf16>, vector<64x64xbf16>, vector<8x64xf32> -> vector<8x64xf32>
    %326 = vector.broadcast %185 : vector<1x64xf32> to vector<8x64xf32>
    %327 = arith.addf %325, %326 : vector<8x64xf32>
    %cst_91 = arith.constant 0.000000e+00 : f32
    %328 = vector.broadcast %cst_91 : f32 to vector<8x64xf32>
    %329 = arith.maximumf %327, %328 : vector<8x64xf32>
    %cst_92 = arith.constant 6.250000e-02 : f32
    %330 = vector.broadcast %cst_92 : f32 to vector<8x64xf32>
    %331 = arith.mulf %330, %329 : vector<8x64xf32>
    %332 = arith.addf %314, %331 : vector<8x64xf32>
    %333 = arith.truncf %332 : vector<8x64xf32> to vector<8x64xbf16>
    %cst_93 = arith.constant dense<0.000000e+00> : vector<8x64xf32>
    %334 = tpu.matmul %333, %184, %cst_93 {dimension_numbers = #tpu.dot_dimension_numbers<[1], [0], [0], [1], [0, 0, 1, 1], [], []>} : vector<8x64xbf16>, vector<64x64xbf16>, vector<8x64xf32> -> vector<8x64xf32>
    %335 = vector.broadcast %185 : vector<1x64xf32> to vector<8x64xf32>
    %336 = arith.addf %334, %335 : vector<8x64xf32>
    %cst_94 = arith.constant 0.000000e+00 : f32
    %337 = vector.broadcast %cst_94 : f32 to vector<8x64xf32>
    %338 = arith.maximumf %336, %337 : vector<8x64xf32>
    %cst_95 = arith.constant 1.250000e-01 : f32
    %339 = vector.broadcast %cst_95 : f32 to vector<8x64xf32>
    %340 = arith.mulf %339, %338 : vector<8x64xf32>
    %341 = arith.addf %314, %340 : vector<8x64xf32>
    %342 = arith.truncf %341 : vector<8x64xf32> to vector<8x64xbf16>
    %cst_96 = arith.constant dense<0.000000e+00> : vector<8x64xf32>
    %343 = tpu.matmul %342, %184, %cst_96 {dimension_numbers = #tpu.dot_dimension_numbers<[1], [0], [0], [1], [0, 0, 1, 1], [], []>} : vector<8x64xbf16>, vector<64x64xbf16>, vector<8x64xf32> -> vector<8x64xf32>
    %344 = vector.broadcast %185 : vector<1x64xf32> to vector<8x64xf32>
    %345 = arith.addf %343, %344 : vector<8x64xf32>
    %cst_97 = arith.constant 0.000000e+00 : f32
    %346 = vector.broadcast %cst_97 : f32 to vector<8x64xf32>
    %347 = arith.maximumf %345, %346 : vector<8x64xf32>
    %cst_98 = arith.constant 2.000000e+00 : f32
    %348 = vector.broadcast %cst_98 : f32 to vector<8x64xf32>
    %349 = arith.mulf %348, %329 : vector<8x64xf32>
    %350 = arith.addf %320, %349 : vector<8x64xf32>
    %cst_99 = arith.constant 2.000000e+00 : f32
    %351 = vector.broadcast %cst_99 : f32 to vector<8x64xf32>
    %352 = arith.mulf %351, %338 : vector<8x64xf32>
    %353 = arith.addf %350, %352 : vector<8x64xf32>
    %354 = arith.addf %353, %347 : vector<8x64xf32>
    %cst_100 = arith.constant 0.020833334 : f32
    %355 = vector.broadcast %cst_100 : f32 to vector<8x64xf32>
    %356 = arith.mulf %355, %354 : vector<8x64xf32>
    %357 = arith.addf %314, %356 : vector<8x64xf32>
    %358 = arith.truncf %357 : vector<8x64xf32> to vector<8x64xbf16>
    %cst_101 = arith.constant dense<0.000000e+00> : vector<8x64xf32>
    %359 = tpu.matmul %358, %184, %cst_101 {dimension_numbers = #tpu.dot_dimension_numbers<[1], [0], [0], [1], [0, 0, 1, 1], [], []>} : vector<8x64xbf16>, vector<64x64xbf16>, vector<8x64xf32> -> vector<8x64xf32>
    %360 = vector.broadcast %185 : vector<1x64xf32> to vector<8x64xf32>
    %361 = arith.addf %359, %360 : vector<8x64xf32>
    %cst_102 = arith.constant 0.000000e+00 : f32
    %362 = vector.broadcast %cst_102 : f32 to vector<8x64xf32>
    %363 = arith.maximumf %361, %362 : vector<8x64xf32>
    %cst_103 = arith.constant 6.250000e-02 : f32
    %364 = vector.broadcast %cst_103 : f32 to vector<8x64xf32>
    %365 = arith.mulf %364, %363 : vector<8x64xf32>
    %366 = arith.addf %357, %365 : vector<8x64xf32>
    %367 = arith.truncf %366 : vector<8x64xf32> to vector<8x64xbf16>
    %cst_104 = arith.constant dense<0.000000e+00> : vector<8x64xf32>
    %368 = tpu.matmul %367, %184, %cst_104 {dimension_numbers = #tpu.dot_dimension_numbers<[1], [0], [0], [1], [0, 0, 1, 1], [], []>} : vector<8x64xbf16>, vector<64x64xbf16>, vector<8x64xf32> -> vector<8x64xf32>
    %369 = vector.broadcast %185 : vector<1x64xf32> to vector<8x64xf32>
    %370 = arith.addf %368, %369 : vector<8x64xf32>
    %cst_105 = arith.constant 0.000000e+00 : f32
    %371 = vector.broadcast %cst_105 : f32 to vector<8x64xf32>
    %372 = arith.maximumf %370, %371 : vector<8x64xf32>
    %cst_106 = arith.constant 6.250000e-02 : f32
    %373 = vector.broadcast %cst_106 : f32 to vector<8x64xf32>
    %374 = arith.mulf %373, %372 : vector<8x64xf32>
    %375 = arith.addf %357, %374 : vector<8x64xf32>
    %376 = arith.truncf %375 : vector<8x64xf32> to vector<8x64xbf16>
    %cst_107 = arith.constant dense<0.000000e+00> : vector<8x64xf32>
    %377 = tpu.matmul %376, %184, %cst_107 {dimension_numbers = #tpu.dot_dimension_numbers<[1], [0], [0], [1], [0, 0, 1, 1], [], []>} : vector<8x64xbf16>, vector<64x64xbf16>, vector<8x64xf32> -> vector<8x64xf32>
    %378 = vector.broadcast %185 : vector<1x64xf32> to vector<8x64xf32>
    %379 = arith.addf %377, %378 : vector<8x64xf32>
    %cst_108 = arith.constant 0.000000e+00 : f32
    %380 = vector.broadcast %cst_108 : f32 to vector<8x64xf32>
    %381 = arith.maximumf %379, %380 : vector<8x64xf32>
    %cst_109 = arith.constant 1.250000e-01 : f32
    %382 = vector.broadcast %cst_109 : f32 to vector<8x64xf32>
    %383 = arith.mulf %382, %381 : vector<8x64xf32>
    %384 = arith.addf %357, %383 : vector<8x64xf32>
    %385 = arith.truncf %384 : vector<8x64xf32> to vector<8x64xbf16>
    %cst_110 = arith.constant dense<0.000000e+00> : vector<8x64xf32>
    %386 = tpu.matmul %385, %184, %cst_110 {dimension_numbers = #tpu.dot_dimension_numbers<[1], [0], [0], [1], [0, 0, 1, 1], [], []>} : vector<8x64xbf16>, vector<64x64xbf16>, vector<8x64xf32> -> vector<8x64xf32>
    %387 = vector.broadcast %185 : vector<1x64xf32> to vector<8x64xf32>
    %388 = arith.addf %386, %387 : vector<8x64xf32>
    %cst_111 = arith.constant 0.000000e+00 : f32
    %389 = vector.broadcast %cst_111 : f32 to vector<8x64xf32>
    %390 = arith.maximumf %388, %389 : vector<8x64xf32>
    %cst_112 = arith.constant 2.000000e+00 : f32
    %391 = vector.broadcast %cst_112 : f32 to vector<8x64xf32>
    %392 = arith.mulf %391, %372 : vector<8x64xf32>
    %393 = arith.addf %363, %392 : vector<8x64xf32>
    %cst_113 = arith.constant 2.000000e+00 : f32
    %394 = vector.broadcast %cst_113 : f32 to vector<8x64xf32>
    %395 = arith.mulf %394, %381 : vector<8x64xf32>
    %396 = arith.addf %393, %395 : vector<8x64xf32>
    %397 = arith.addf %396, %390 : vector<8x64xf32>
    %cst_114 = arith.constant 0.020833334 : f32
    %398 = vector.broadcast %cst_114 : f32 to vector<8x64xf32>
    %399 = arith.mulf %398, %397 : vector<8x64xf32>
    %400 = arith.addf %357, %399 : vector<8x64xf32>
    %401 = arith.truncf %400 : vector<8x64xf32> to vector<8x64xbf16>
    %cst_115 = arith.constant dense<0.000000e+00> : vector<8x64xf32>
    %402 = tpu.matmul %401, %184, %cst_115 {dimension_numbers = #tpu.dot_dimension_numbers<[1], [0], [0], [1], [0, 0, 1, 1], [], []>} : vector<8x64xbf16>, vector<64x64xbf16>, vector<8x64xf32> -> vector<8x64xf32>
    %403 = vector.broadcast %185 : vector<1x64xf32> to vector<8x64xf32>
    %404 = arith.addf %402, %403 : vector<8x64xf32>
    %cst_116 = arith.constant 0.000000e+00 : f32
    %405 = vector.broadcast %cst_116 : f32 to vector<8x64xf32>
    %406 = arith.maximumf %404, %405 : vector<8x64xf32>
    %cst_117 = arith.constant 6.250000e-02 : f32
    %407 = vector.broadcast %cst_117 : f32 to vector<8x64xf32>
    %408 = arith.mulf %407, %406 : vector<8x64xf32>
    %409 = arith.addf %400, %408 : vector<8x64xf32>
    %410 = arith.truncf %409 : vector<8x64xf32> to vector<8x64xbf16>
    %cst_118 = arith.constant dense<0.000000e+00> : vector<8x64xf32>
    %411 = tpu.matmul %410, %184, %cst_118 {dimension_numbers = #tpu.dot_dimension_numbers<[1], [0], [0], [1], [0, 0, 1, 1], [], []>} : vector<8x64xbf16>, vector<64x64xbf16>, vector<8x64xf32> -> vector<8x64xf32>
    %412 = vector.broadcast %185 : vector<1x64xf32> to vector<8x64xf32>
    %413 = arith.addf %411, %412 : vector<8x64xf32>
    %cst_119 = arith.constant 0.000000e+00 : f32
    %414 = vector.broadcast %cst_119 : f32 to vector<8x64xf32>
    %415 = arith.maximumf %413, %414 : vector<8x64xf32>
    %cst_120 = arith.constant 6.250000e-02 : f32
    %416 = vector.broadcast %cst_120 : f32 to vector<8x64xf32>
    %417 = arith.mulf %416, %415 : vector<8x64xf32>
    %418 = arith.addf %400, %417 : vector<8x64xf32>
    %419 = arith.truncf %418 : vector<8x64xf32> to vector<8x64xbf16>
    %cst_121 = arith.constant dense<0.000000e+00> : vector<8x64xf32>
    %420 = tpu.matmul %419, %184, %cst_121 {dimension_numbers = #tpu.dot_dimension_numbers<[1], [0], [0], [1], [0, 0, 1, 1], [], []>} : vector<8x64xbf16>, vector<64x64xbf16>, vector<8x64xf32> -> vector<8x64xf32>
    %421 = vector.broadcast %185 : vector<1x64xf32> to vector<8x64xf32>
    %422 = arith.addf %420, %421 : vector<8x64xf32>
    %cst_122 = arith.constant 0.000000e+00 : f32
    %423 = vector.broadcast %cst_122 : f32 to vector<8x64xf32>
    %424 = arith.maximumf %422, %423 : vector<8x64xf32>
    %cst_123 = arith.constant 1.250000e-01 : f32
    %425 = vector.broadcast %cst_123 : f32 to vector<8x64xf32>
    %426 = arith.mulf %425, %424 : vector<8x64xf32>
    %427 = arith.addf %400, %426 : vector<8x64xf32>
    %428 = arith.truncf %427 : vector<8x64xf32> to vector<8x64xbf16>
    %cst_124 = arith.constant dense<0.000000e+00> : vector<8x64xf32>
    %429 = tpu.matmul %428, %184, %cst_124 {dimension_numbers = #tpu.dot_dimension_numbers<[1], [0], [0], [1], [0, 0, 1, 1], [], []>} : vector<8x64xbf16>, vector<64x64xbf16>, vector<8x64xf32> -> vector<8x64xf32>
    %430 = vector.broadcast %185 : vector<1x64xf32> to vector<8x64xf32>
    %431 = arith.addf %429, %430 : vector<8x64xf32>
    %cst_125 = arith.constant 0.000000e+00 : f32
    %432 = vector.broadcast %cst_125 : f32 to vector<8x64xf32>
    %433 = arith.maximumf %431, %432 : vector<8x64xf32>
    %cst_126 = arith.constant 2.000000e+00 : f32
    %434 = vector.broadcast %cst_126 : f32 to vector<8x64xf32>
    %435 = arith.mulf %434, %415 : vector<8x64xf32>
    %436 = arith.addf %406, %435 : vector<8x64xf32>
    %cst_127 = arith.constant 2.000000e+00 : f32
    %437 = vector.broadcast %cst_127 : f32 to vector<8x64xf32>
    %438 = arith.mulf %437, %424 : vector<8x64xf32>
    %439 = arith.addf %436, %438 : vector<8x64xf32>
    %440 = arith.addf %439, %433 : vector<8x64xf32>
    %cst_128 = arith.constant 0.020833334 : f32
    %441 = vector.broadcast %cst_128 : f32 to vector<8x64xf32>
    %442 = arith.mulf %441, %440 : vector<8x64xf32>
    %443 = arith.addf %400, %442 : vector<8x64xf32>
    %444 = arith.truncf %443 : vector<8x64xf32> to vector<8x64xbf16>
    %cst_129 = arith.constant dense<0.000000e+00> : vector<8x64xf32>
    %445 = tpu.matmul %444, %184, %cst_129 {dimension_numbers = #tpu.dot_dimension_numbers<[1], [0], [0], [1], [0, 0, 1, 1], [], []>} : vector<8x64xbf16>, vector<64x64xbf16>, vector<8x64xf32> -> vector<8x64xf32>
    %446 = vector.broadcast %185 : vector<1x64xf32> to vector<8x64xf32>
    %447 = arith.addf %445, %446 : vector<8x64xf32>
    %cst_130 = arith.constant 0.000000e+00 : f32
    %448 = vector.broadcast %cst_130 : f32 to vector<8x64xf32>
    %449 = arith.maximumf %447, %448 : vector<8x64xf32>
    %cst_131 = arith.constant 6.250000e-02 : f32
    %450 = vector.broadcast %cst_131 : f32 to vector<8x64xf32>
    %451 = arith.mulf %450, %449 : vector<8x64xf32>
    %452 = arith.addf %443, %451 : vector<8x64xf32>
    %453 = arith.truncf %452 : vector<8x64xf32> to vector<8x64xbf16>
    %cst_132 = arith.constant dense<0.000000e+00> : vector<8x64xf32>
    %454 = tpu.matmul %453, %184, %cst_132 {dimension_numbers = #tpu.dot_dimension_numbers<[1], [0], [0], [1], [0, 0, 1, 1], [], []>} : vector<8x64xbf16>, vector<64x64xbf16>, vector<8x64xf32> -> vector<8x64xf32>
    %455 = vector.broadcast %185 : vector<1x64xf32> to vector<8x64xf32>
    %456 = arith.addf %454, %455 : vector<8x64xf32>
    %cst_133 = arith.constant 0.000000e+00 : f32
    %457 = vector.broadcast %cst_133 : f32 to vector<8x64xf32>
    %458 = arith.maximumf %456, %457 : vector<8x64xf32>
    %cst_134 = arith.constant 6.250000e-02 : f32
    %459 = vector.broadcast %cst_134 : f32 to vector<8x64xf32>
    %460 = arith.mulf %459, %458 : vector<8x64xf32>
    %461 = arith.addf %443, %460 : vector<8x64xf32>
    %462 = arith.truncf %461 : vector<8x64xf32> to vector<8x64xbf16>
    %cst_135 = arith.constant dense<0.000000e+00> : vector<8x64xf32>
    %463 = tpu.matmul %462, %184, %cst_135 {dimension_numbers = #tpu.dot_dimension_numbers<[1], [0], [0], [1], [0, 0, 1, 1], [], []>} : vector<8x64xbf16>, vector<64x64xbf16>, vector<8x64xf32> -> vector<8x64xf32>
    %464 = vector.broadcast %185 : vector<1x64xf32> to vector<8x64xf32>
    %465 = arith.addf %463, %464 : vector<8x64xf32>
    %cst_136 = arith.constant 0.000000e+00 : f32
    %466 = vector.broadcast %cst_136 : f32 to vector<8x64xf32>
    %467 = arith.maximumf %465, %466 : vector<8x64xf32>
    %cst_137 = arith.constant 1.250000e-01 : f32
    %468 = vector.broadcast %cst_137 : f32 to vector<8x64xf32>
    %469 = arith.mulf %468, %467 : vector<8x64xf32>
    %470 = arith.addf %443, %469 : vector<8x64xf32>
    %471 = arith.truncf %470 : vector<8x64xf32> to vector<8x64xbf16>
    %cst_138 = arith.constant dense<0.000000e+00> : vector<8x64xf32>
    %472 = tpu.matmul %471, %184, %cst_138 {dimension_numbers = #tpu.dot_dimension_numbers<[1], [0], [0], [1], [0, 0, 1, 1], [], []>} : vector<8x64xbf16>, vector<64x64xbf16>, vector<8x64xf32> -> vector<8x64xf32>
    %473 = vector.broadcast %185 : vector<1x64xf32> to vector<8x64xf32>
    %474 = arith.addf %472, %473 : vector<8x64xf32>
    %cst_139 = arith.constant 0.000000e+00 : f32
    %475 = vector.broadcast %cst_139 : f32 to vector<8x64xf32>
    %476 = arith.maximumf %474, %475 : vector<8x64xf32>
    %cst_140 = arith.constant 2.000000e+00 : f32
    %477 = vector.broadcast %cst_140 : f32 to vector<8x64xf32>
    %478 = arith.mulf %477, %458 : vector<8x64xf32>
    %479 = arith.addf %449, %478 : vector<8x64xf32>
    %cst_141 = arith.constant 2.000000e+00 : f32
    %480 = vector.broadcast %cst_141 : f32 to vector<8x64xf32>
    %481 = arith.mulf %480, %467 : vector<8x64xf32>
    %482 = arith.addf %479, %481 : vector<8x64xf32>
    %483 = arith.addf %482, %476 : vector<8x64xf32>
    %cst_142 = arith.constant 0.020833334 : f32
    %484 = vector.broadcast %cst_142 : f32 to vector<8x64xf32>
    %485 = arith.mulf %484, %483 : vector<8x64xf32>
    %486 = arith.addf %443, %485 : vector<8x64xf32>
    %487 = arith.truncf %486 : vector<8x64xf32> to vector<8x64xbf16>
    %cst_143 = arith.constant dense<0.000000e+00> : vector<8x64xf32>
    %488 = tpu.matmul %487, %184, %cst_143 {dimension_numbers = #tpu.dot_dimension_numbers<[1], [0], [0], [1], [0, 0, 1, 1], [], []>} : vector<8x64xbf16>, vector<64x64xbf16>, vector<8x64xf32> -> vector<8x64xf32>
    %489 = vector.broadcast %185 : vector<1x64xf32> to vector<8x64xf32>
    %490 = arith.addf %488, %489 : vector<8x64xf32>
    %cst_144 = arith.constant 0.000000e+00 : f32
    %491 = vector.broadcast %cst_144 : f32 to vector<8x64xf32>
    %492 = arith.maximumf %490, %491 : vector<8x64xf32>
    %cst_145 = arith.constant 6.250000e-02 : f32
    %493 = vector.broadcast %cst_145 : f32 to vector<8x64xf32>
    %494 = arith.mulf %493, %492 : vector<8x64xf32>
    %495 = arith.addf %486, %494 : vector<8x64xf32>
    %496 = arith.truncf %495 : vector<8x64xf32> to vector<8x64xbf16>
    %cst_146 = arith.constant dense<0.000000e+00> : vector<8x64xf32>
    %497 = tpu.matmul %496, %184, %cst_146 {dimension_numbers = #tpu.dot_dimension_numbers<[1], [0], [0], [1], [0, 0, 1, 1], [], []>} : vector<8x64xbf16>, vector<64x64xbf16>, vector<8x64xf32> -> vector<8x64xf32>
    %498 = vector.broadcast %185 : vector<1x64xf32> to vector<8x64xf32>
    %499 = arith.addf %497, %498 : vector<8x64xf32>
    %cst_147 = arith.constant 0.000000e+00 : f32
    %500 = vector.broadcast %cst_147 : f32 to vector<8x64xf32>
    %501 = arith.maximumf %499, %500 : vector<8x64xf32>
    %cst_148 = arith.constant 6.250000e-02 : f32
    %502 = vector.broadcast %cst_148 : f32 to vector<8x64xf32>
    %503 = arith.mulf %502, %501 : vector<8x64xf32>
    %504 = arith.addf %486, %503 : vector<8x64xf32>
    %505 = arith.truncf %504 : vector<8x64xf32> to vector<8x64xbf16>
    %cst_149 = arith.constant dense<0.000000e+00> : vector<8x64xf32>
    %506 = tpu.matmul %505, %184, %cst_149 {dimension_numbers = #tpu.dot_dimension_numbers<[1], [0], [0], [1], [0, 0, 1, 1], [], []>} : vector<8x64xbf16>, vector<64x64xbf16>, vector<8x64xf32> -> vector<8x64xf32>
    %507 = vector.broadcast %185 : vector<1x64xf32> to vector<8x64xf32>
    %508 = arith.addf %506, %507 : vector<8x64xf32>
    %cst_150 = arith.constant 0.000000e+00 : f32
    %509 = vector.broadcast %cst_150 : f32 to vector<8x64xf32>
    %510 = arith.maximumf %508, %509 : vector<8x64xf32>
    %cst_151 = arith.constant 1.250000e-01 : f32
    %511 = vector.broadcast %cst_151 : f32 to vector<8x64xf32>
    %512 = arith.mulf %511, %510 : vector<8x64xf32>
    %513 = arith.addf %486, %512 : vector<8x64xf32>
    %514 = arith.truncf %513 : vector<8x64xf32> to vector<8x64xbf16>
    %cst_152 = arith.constant dense<0.000000e+00> : vector<8x64xf32>
    %515 = tpu.matmul %514, %184, %cst_152 {dimension_numbers = #tpu.dot_dimension_numbers<[1], [0], [0], [1], [0, 0, 1, 1], [], []>} : vector<8x64xbf16>, vector<64x64xbf16>, vector<8x64xf32> -> vector<8x64xf32>
    %516 = vector.broadcast %185 : vector<1x64xf32> to vector<8x64xf32>
    %517 = arith.addf %515, %516 : vector<8x64xf32>
    %cst_153 = arith.constant 0.000000e+00 : f32
    %518 = vector.broadcast %cst_153 : f32 to vector<8x64xf32>
    %519 = arith.maximumf %517, %518 : vector<8x64xf32>
    %cst_154 = arith.constant 2.000000e+00 : f32
    %520 = vector.broadcast %cst_154 : f32 to vector<8x64xf32>
    %521 = arith.mulf %520, %501 : vector<8x64xf32>
    %522 = arith.addf %492, %521 : vector<8x64xf32>
    %cst_155 = arith.constant 2.000000e+00 : f32
    %523 = vector.broadcast %cst_155 : f32 to vector<8x64xf32>
    %524 = arith.mulf %523, %510 : vector<8x64xf32>
    %525 = arith.addf %522, %524 : vector<8x64xf32>
    %526 = arith.addf %525, %519 : vector<8x64xf32>
    %cst_156 = arith.constant 0.020833334 : f32
    %527 = vector.broadcast %cst_156 : f32 to vector<8x64xf32>
    %528 = arith.mulf %527, %526 : vector<8x64xf32>
    %529 = arith.addf %486, %528 : vector<8x64xf32>
    %c0_157 = arith.constant 0 : index
    %c0_158 = arith.constant 0 : index
    %530 = vector.load %arg8[%c0_157, %c0_158] : memref<8x2xf32, #tpu.memory_space<vmem>>, vector<8x1xf32>
    %c0_159 = arith.constant 0 : index
    %c0_160 = arith.constant 0 : index
    %531 = vector.load %arg10[%c0_159, %c0_160] : memref<2x8xf32, #tpu.memory_space<vmem>>, vector<1x8xf32>
    %532 = vector.broadcast %530 : vector<8x1xf32> to vector<8x8xf32>
    %533 = vector.broadcast %531 : vector<1x8xf32> to vector<8x8xf32>
    %534 = arith.mulf %532, %533 : vector<8x8xf32>
    %c0_161 = arith.constant 0 : index
    %c1 = arith.constant 1 : index
    %535 = vector.load %arg8[%c0_161, %c1] : memref<8x2xf32, #tpu.memory_space<vmem>>, vector<8x1xf32>
    %c1_162 = arith.constant 1 : index
    %c0_163 = arith.constant 0 : index
    %536 = vector.load %arg10[%c1_162, %c0_163] : memref<2x8xf32, #tpu.memory_space<vmem>>, vector<1x8xf32>
    %537 = vector.broadcast %535 : vector<8x1xf32> to vector<8x8xf32>
    %538 = vector.broadcast %536 : vector<1x8xf32> to vector<8x8xf32>
    %539 = arith.mulf %537, %538 : vector<8x8xf32>
    %540 = arith.addf %534, %539 : vector<8x8xf32>
    %541 = arith.truncf %529 : vector<8x64xf32> to vector<8x64xbf16>
    %c0_164 = arith.constant 0 : index
    %c0_165 = arith.constant 0 : index
    %542 = vector.load %arg9[%c0_164, %c0_165] : memref<64x8xbf16, #tpu.memory_space<vmem>>, vector<64x8xbf16>
    %cst_166 = arith.constant dense<0.000000e+00> : vector<8x8xf32>
    %543 = tpu.matmul %541, %542, %cst_166 {dimension_numbers = #tpu.dot_dimension_numbers<[1], [0], [0], [1], [0, 0, 1, 1], [], []>} : vector<8x64xbf16>, vector<64x8xbf16>, vector<8x8xf32> -> vector<8x8xf32>
    %544 = arith.addf %543, %540 : vector<8x8xf32>
    %c0_167 = arith.constant 0 : index
    %c0_168 = arith.constant 0 : index
    %545 = vector.load %arg11[%c0_167, %c0_168] : memref<1x8xf32, #tpu.memory_space<vmem>>, vector<1x8xf32>
    %546 = vector.broadcast %545 : vector<1x8xf32> to vector<8x8xf32>
    %547 = arith.addf %544, %546 : vector<8x8xf32>
    %c0_169 = arith.constant 0 : index
    %c0_170 = arith.constant 0 : index
    %548 = vector.load %arg12[%c0_169, %c0_170] : memref<8x8xf32, #tpu.memory_space<vmem>>, vector<8x8xf32>
    tpu.vector_store %arg12[%c0_169, %c0_170], %547 {strides = array<i32>} : memref<8x8xf32, #tpu.memory_space<vmem>>, vector<8x8xf32>,
    return
  }
  func.func @transform_0(%arg0: i32) -> (i32, i32, i32) {
    %c0_i32 = arith.constant 0 : i32
    %c0_i32_0 = arith.constant 0 : i32
    %c0_i32_1 = arith.constant 0 : i32
    return %arg0, %c0_i32, %c0_i32_0 : i32, i32, i32
  }
  func.func @transform_1(%arg0: i32) -> (i32, i32) {
    %c0_i32 = arith.constant 0 : i32
    %c0_i32_0 = arith.constant 0 : i32
    %c0_i32_1 = arith.constant 0 : i32
    return %c0_i32, %c0_i32_0 : i32, i32
  }
  func.func @transform_2(%arg0: i32) -> (i32, i32) {
    %c0_i32 = arith.constant 0 : i32
    %c0_i32_0 = arith.constant 0 : i32
    %c0_i32_1 = arith.constant 0 : i32
    return %c0_i32, %c0_i32_0 : i32, i32
  }
  func.func @transform_3(%arg0: i32) -> (i32, i32) {
    %c0_i32 = arith.constant 0 : i32
    %c0_i32_0 = arith.constant 0 : i32
    %c0_i32_1 = arith.constant 0 : i32
    return %c0_i32, %c0_i32_0 : i32, i32
  }
  func.func @transform_4(%arg0: i32) -> (i32, i32) {
    %c0_i32 = arith.constant 0 : i32
    %c0_i32_0 = arith.constant 0 : i32
    %c0_i32_1 = arith.constant 0 : i32
    return %c0_i32, %c0_i32_0 : i32, i32
  }
  func.func @transform_5(%arg0: i32) -> (i32, i32) {
    %c0_i32 = arith.constant 0 : i32
    %c0_i32_0 = arith.constant 0 : i32
    %c0_i32_1 = arith.constant 0 : i32
    return %c0_i32, %c0_i32_0 : i32, i32
  }
  func.func @transform_6(%arg0: i32) -> (i32, i32) {
    %c0_i32 = arith.constant 0 : i32
    %c0_i32_0 = arith.constant 0 : i32
    %c0_i32_1 = arith.constant 0 : i32
    return %c0_i32, %c0_i32_0 : i32, i32
  }
  func.func @transform_7(%arg0: i32) -> (i32, i32) {
    %c0_i32 = arith.constant 0 : i32
    %c0_i32_0 = arith.constant 0 : i32
    return %arg0, %c0_i32 : i32, i32
  }
  func.func @transform_8(%arg0: i32) -> (i32, i32) {
    %c0_i32 = arith.constant 0 : i32
    %c0_i32_0 = arith.constant 0 : i32
    %c0_i32_1 = arith.constant 0 : i32
    return %c0_i32, %c0_i32_0 : i32, i32
  }
  func.func @transform_9(%arg0: i32) -> (i32, i32) {
    %c0_i32 = arith.constant 0 : i32
    %c0_i32_0 = arith.constant 0 : i32
    %c0_i32_1 = arith.constant 0 : i32
    return %c0_i32, %c0_i32_0 : i32, i32
  }
  func.func @transform_10(%arg0: i32) -> (i32, i32) {
    %c0_i32 = arith.constant 0 : i32
    %c0_i32_0 = arith.constant 0 : i32
    %c0_i32_1 = arith.constant 0 : i32
    return %c0_i32, %c0_i32_0 : i32, i32
  }
  func.func @transform_11(%arg0: i32) -> (i32, i32) {
    %c0_i32 = arith.constant 0 : i32
    %c0_i32_0 = arith.constant 0 : i32
    return %arg0, %c0_i32 : i32, i32
  }
}

</mosaic_0001>

<llo_original>
// kernel: node_bilstm_forward.1
$region0: #{node_bilstm_forward.1}
  #allocation0 [shape = 'u32[]', space=smem, size = 0x4, offset = 0x4, fixed_abs, tag = 'smem constant byte address 0x4 - core index']
  #allocation1 [shape = 'u32[144,128]{1,0:T(1,128)}', space=vmem, size = 0x12000, scoped, tag = 'internal scratch']
  #allocation2 [shape = 'f32[64,256]{1,0:T(8,128)}', space=vmem, size = 0x10000, scoped, tag = 'scratch operand']
  %s0 = inlined_call_operand.vmem [shape: f32[1,64,4], index: 0, kind: input, shape index: {}]
  %s1 = inlined_call_operand.vmem [shape: bf16[4,256], index: 1, kind: input, shape index: {}]
  %s2 = inlined_call_operand.vmem [shape: f32[1,256], index: 2, kind: input, shape index: {}]
  %s3 = inlined_call_operand.vmem [shape: bf16[32,128], index: 3, kind: input, shape index: {}]
  %s4 = inlined_call_operand.vmem [shape: bf16[32,128], index: 4, kind: input, shape index: {}]
  %s5 = inlined_call_operand.vmem [shape: bf16[64,64], index: 5, kind: input, shape index: {}]
  %s6 = inlined_call_operand.vmem [shape: f32[1,64], index: 6, kind: input, shape index: {}]
  %s7 = inlined_call_operand.vmem [shape: f32[8,2], index: 7, kind: input, shape index: {}]
  %s8 = inlined_call_operand.vmem [shape: bf16[64,8], index: 8, kind: input, shape index: {}]
  %s9 = inlined_call_operand.vmem [shape: f32[2,8], index: 9, kind: input, shape index: {}]
  %s10 = inlined_call_operand.vmem [shape: f32[1,8], index: 10, kind: input, shape index: {}]
  %s11 = inlined_call_operand.vmem [shape: f32[8,8], index: 11, kind: output, shape index: {}]
  %s12 = sld [smem:[#allocation0]]
  $region54: #{node_bilstm_forward.1} parent=0
    _
  %s14 = ssub.s32 1, %s12
  %s15 = scalar_select 0, %s14, %s12
  // Predicated region
  $region2: #{node_bilstm_forward.1} parent=0 // pred_check
    _
  $region3: #{node_bilstm_forward.1} parent=0 // pred_check_branch
    %17 = sbr.rel (0) target = $region5
  $region4: #{node_bilstm_forward.1} parent=0 // pred_region
    _
  $region5: #{node_bilstm_forward.1} parent=0 // pred_fallthru
    _
  // Predicated region
  $region6: #{node_bilstm_forward.1} parent=0 // pred_check
    _
  $region7: #{node_bilstm_forward.1} parent=0 // pred_check_branch
    %19 = sbr.rel (0) target = $region9
  $region8: #{node_bilstm_forward.1} parent=0 // pred_region
    _
  $region9: #{node_bilstm_forward.1} parent=0 // pred_fallthru
    _
  // Predicated region
  $region10: #{node_bilstm_forward.1} parent=0 // pred_check
    _
  $region11: #{node_bilstm_forward.1} parent=0 // pred_check_branch
    %21 = sbr.rel (0) target = $region13
  $region12: #{node_bilstm_forward.1} parent=0 // pred_region
    _
  $region13: #{node_bilstm_forward.1} parent=0 // pred_fallthru
    _
  // Predicated region
  $region14: #{node_bilstm_forward.1} parent=0 // pred_check
    _
  $region15: #{node_bilstm_forward.1} parent=0 // pred_check_branch
    %23 = sbr.rel (0) target = $region17
  $region16: #{node_bilstm_forward.1} parent=0 // pred_region
    _
  $region17: #{node_bilstm_forward.1} parent=0 // pred_fallthru
    _
  // Predicated region
  $region18: #{node_bilstm_forward.1} parent=0 // pred_check
    _
  $region19: #{node_bilstm_forward.1} parent=0 // pred_check_branch
    %25 = sbr.rel (0) target = $region21
  $region20: #{node_bilstm_forward.1} parent=0 // pred_region
    _
  $region21: #{node_bilstm_forward.1} parent=0 // pred_fallthru
    _
  // Predicated region
  $region22: #{node_bilstm_forward.1} parent=0 // pred_check
    _
  $region23: #{node_bilstm_forward.1} parent=0 // pred_check_branch
    %27 = sbr.rel (0) target = $region25
  $region24: #{node_bilstm_forward.1} parent=0 // pred_region
    _
  $region25: #{node_bilstm_forward.1} parent=0 // pred_fallthru
    _
  // Predicated region
  $region26: #{node_bilstm_forward.1} parent=0 // pred_check
    _
  $region27: #{node_bilstm_forward.1} parent=0 // pred_check_branch
    %29 = sbr.rel (0) target = $region29
  $region28: #{node_bilstm_forward.1} parent=0 // pred_region
    _
  $region29: #{node_bilstm_forward.1} parent=0 // pred_fallthru
    _
  // Predicated region
  $region30: #{node_bilstm_forward.1} parent=0 // pred_check
    _
  $region31: #{node_bilstm_forward.1} parent=0 // pred_check_branch
    %31 = sbr.rel (0) target = $region33
  $region32: #{node_bilstm_forward.1} parent=0 // pred_region
    _
  $region33: #{node_bilstm_forward.1} parent=0 // pred_fallthru
    _
  // Predicated region
  $region34: #{node_bilstm_forward.1} parent=0 // pred_check
    _
  $region35: #{node_bilstm_forward.1} parent=0 // pred_check_branch
    %33 = sbr.rel (0) target = $region37
  $region36: #{node_bilstm_forward.1} parent=0 // pred_region
    _
  $region37: #{node_bilstm_forward.1} parent=0 // pred_fallthru
    _
  // Predicated region
  $region38: #{node_bilstm_forward.1} parent=0 // pred_check
    _
  $region39: #{node_bilstm_forward.1} parent=0 // pred_check_branch
    %35 = sbr.rel (0) target = $region41
  $region40: #{node_bilstm_forward.1} parent=0 // pred_region
    _
  $region41: #{node_bilstm_forward.1} parent=0 // pred_fallthru
    _
  // Predicated region
  $region42: #{node_bilstm_forward.1} parent=0 // pred_check
    _
  $region43: #{node_bilstm_forward.1} parent=0 // pred_check_branch
    %37 = sbr.rel (0) target = $region45
  $region44: #{node_bilstm_forward.1} parent=0 // pred_region
    _
  $region45: #{node_bilstm_forward.1} parent=0 // pred_fallthru
    _
  %v39 = vld [vmem:[%s0] sm:$0xff]
  %v40 = vld [vmem:[%s0 + $0x8] sm:$0xff]
  %v41 = vld [vmem:[%s0 + $0x10] sm:$0xff]
  %v42 = vld [vmem:[%s0 + $0x18] sm:$0xff]
  %v43 = vld [vmem:[%s0 + $0x20] sm:$0xff]
  %v44 = vld [vmem:[%s0 + $0x28] sm:$0xff]
  %v45 = vld [vmem:[%s0 + $0x30] sm:$0xff]
  %v46 = vld [vmem:[%s0 + $0x38] sm:$0xff]
  %v47 = vpack.c.bf16 %v40, %v39
  %v48 = vpack.c.bf16 %v42, %v41
  %v49 = vpack.c.bf16 %v44, %v43
  %v50 = vpack.c.bf16 %v46, %v45
  %v51 = vld [vmem:[%s1] sm:$0xf]
  %v52 = vld [vmem:[%s2] sm:$0x3]
  %v54 = vlaneseq
  %v55 = vshrl.u32 %v54, 7
  %v56 = vsub.s32 0, %v55
  %v57 = vrot.slane %v52, %v56
  %v58 = vlaneseq
  %v59 = vshrl.u32 %v58, 7
  %v60 = vsub.s32 1, %v59
  %v61 = vrot.slane %v52, %v60
  %v66 = vunpack.c.l.s4 1983009808
  %v67 = vunpack.c.0.s8 %v66
  %v68 = vlaneseq
  %v69 = vshrl.u32 %v68, 7
  %v70 = vsub.s32 %v67, %v69
  %v71 = vrot.slane %v51, %v70
  %v72 = vcombine.high %v71, %v71
  %vm73 = vcmask 31744
  %v75 = vsel %vm73, %v47, 0
  %v78 = vsel %vm73, %v48, 0
  %v81 = vsel %vm73, %v49, 0
  %v84 = vsel %vm73, %v50, 0
  %vm86 = vcmask 1041408
  %v88 = vsel %vm86, %v71, 0
  %v91 = vsel %vm86, %v72, 0
  %93 = vmatprep.subr.bf16.mxu0 %v91
  %94 = vmatpush1.bf16.msra.mxu0 %v88
  %95 = vmatprep.subr.bf16.mxu0 0
  %96 = vmatpush1.bf16.msra.mxu0 0
  %97 = vmatprep.subr.bf16.mxu0 0
  %98 = vmatpush1.bf16.msra.mxu0 0
  %99 = vmatprep.subr.bf16.mxu0 0
  %100 = vmatpush1.bf16.msra.mxu0 0
  %101 = vmatprep.subr.bf16.mxu0 0
  %102 = vmatpush1.bf16.msra.mxu0 0
  %103 = vmatprep.subr.bf16.mxu0 0
  %104 = vmatpush1.bf16.msra.mxu0 0
  %105 = vmatprep.subr.bf16.mxu0 0
  %106 = vmatpush1.bf16.msra.mxu0 0
  %107 = vmatprep.subr.bf16.mxu0 0
  %108 = vmatpush1.bf16.msra.mxu0 0
  %109 = vmatprep.subr.bf16.mxu0 0
  %110 = vmatpush1.bf16.msra.mxu0 0
  %111 = vmatprep.subr.bf16.mxu0 0
  %112 = vmatpush1.bf16.msra.mxu0 0
  %113 = vmatprep.subr.bf16.mxu0 0
  %114 = vmatpush1.bf16.msra.mxu0 0
  %115 = vmatprep.subr.bf16.mxu0 0
  %116 = vmatpush1.bf16.msra.mxu0 0
  %117 = vmatprep.subr.bf16.mxu0 0
  %118 = vmatpush1.bf16.msra.mxu0 0
  %119 = vmatprep.subr.bf16.mxu0 0
  %120 = vmatpush1.bf16.msra.mxu0 0
  %121 = vmatprep.subr.bf16.mxu0 0
  %122 = vmatpush1.bf16.msra.mxu0 0
  %123 = vmatprep.subr.bf16.mxu0 0
  %124 = vmatpush1.bf16.msra.mxu0 0
  %125 = vmatprep.mubr.bf16.mxu0 0
  %126 = vmatmul.mubr.bf16.gmra.mrb[0].mxu0 %v75
  %v127 = vpop.f32.mrb[0].mxu0
  %v128 = vadd.f32 %v57, %v127
  %v129 = vpop.f32.mrb[0].mxu0
  %v130 = vadd.f32 %v61, %v129
  %v131 = vpop.f32.mrb[0].mxu0
  %v132 = vadd.f32 %v57, %v131
  %v133 = vpop.f32.mrb[0].mxu0
  %v134 = vadd.f32 %v61, %v133
  %135 = vmatprep.mubr.bf16.mxu0 0
  %136 = vmatmul.mubr.bf16.gmra.mrb[0].mxu0 %v78
  %v137 = vpop.f32.mrb[0].mxu0
  %v138 = vadd.f32 %v57, %v137
  %v139 = vpop.f32.mrb[0].mxu0
  %v140 = vadd.f32 %v61, %v139
  %v141 = vpop.f32.mrb[0].mxu0
  %v142 = vadd.f32 %v57, %v141
  %v143 = vpop.f32.mrb[0].mxu0
  %v144 = vadd.f32 %v61, %v143
  %145 = vmatprep.mubr.bf16.mxu0 0
  %146 = vmatmul.mubr.bf16.gmra.mrb[0].mxu0 %v81
  %v147 = vpop.f32.mrb[0].mxu0
  %v148 = vadd.f32 %v57, %v147
  %v149 = vpop.f32.mrb[0].mxu0
  %v150 = vadd.f32 %v61, %v149
  %v151 = vpop.f32.mrb[0].mxu0
  %v152 = vadd.f32 %v57, %v151
  %v153 = vpop.f32.mrb[0].mxu0
  %v154 = vadd.f32 %v61, %v153
  %155 = vmatprep.mubr.bf16.mxu0 0
  %156 = vmatmul.mubr.bf16.gmra.mrb[0].mxu0 %v84
  %v157 = vpop.f32.mrb[0].mxu0
  %v158 = vadd.f32 %v57, %v157
  %v159 = vpop.f32.mrb[0].mxu0
  %v160 = vadd.f32 %v61, %v159
  %v161 = vpop.f32.mrb[0].mxu0
  %v162 = vadd.f32 %v57, %v161
  %v163 = vpop.f32.mrb[0].mxu0
  %v164 = vadd.f32 %v61, %v163
  %165 = vdwg.mxu0
  %166 = vst [vmem:[#allocation2] sm:$0xff] %v128
  %167 = vst [vmem:[#allocation2 + $0x8] sm:$0xff] %v130
  %168 = vst [vmem:[#allocation2 + $0x10] sm:$0xff] %v132
  %169 = vst [vmem:[#allocation2 + $0x18] sm:$0xff] %v134
  %170 = vst [vmem:[#allocation2 + $0x20] sm:$0xff] %v138
  %171 = vst [vmem:[#allocation2 + $0x28] sm:$0xff] %v140
  %172 = vst [vmem:[#allocation2 + $0x30] sm:$0xff] %v142
  %173 = vst [vmem:[#allocation2 + $0x38] sm:$0xff] %v144
  %174 = vst [vmem:[#allocation2 + $0x40] sm:$0xff] %v148
  %175 = vst [vmem:[#allocation2 + $0x48] sm:$0xff] %v150
  %176 = vst [vmem:[#allocation2 + $0x50] sm:$0xff] %v152
  %177 = vst [vmem:[#allocation2 + $0x58] sm:$0xff] %v154
  %178 = vst [vmem:[#allocation2 + $0x60] sm:$0xff] %v158
  %179 = vst [vmem:[#allocation2 + $0x68] sm:$0xff] %v160
  %180 = vst [vmem:[#allocation2 + $0x70] sm:$0xff] %v162
  %181 = vst [vmem:[#allocation2 + $0x78] sm:$0xff] %v164
  %v182 = vld [vmem:[%s3] sm:$0xf]
  %v183 = vld [vmem:[%s3 + $0x4] sm:$0xf]
  %v184 = vld [vmem:[%s3 + $0x8] sm:$0xf]
  %v185 = vld [vmem:[%s3 + $0xc] sm:$0xf]
  %v186 = vld [vmem:[%s4] sm:$0xf]
  %v187 = vld [vmem:[%s4 + $0x4] sm:$0xf]
  %v188 = vld [vmem:[%s4 + $0x8] sm:$0xf]
  %v189 = vld [vmem:[%s4 + $0xc] sm:$0xf]
  %v190 = vld [vmem:[#allocation2] sm:$0xff]
  %v191 = vld [vmem:[#allocation2 + $0x78] sm:$0xff]
  %v196 = vunpack.c.l.b16 %v182
  %v197 = vunpack.c.l.b16 %v183
  %v198 = vunpack.c.l.b16 %v184
  %v199 = vunpack.c.l.b16 %v185
  %v200 = vpack.c.b16 %v197, %v196
  %v201 = vpack.c.b16 %v199, %v198
  %vm204 = vcmask 261120
  %v206 = vsel %vm204, 0, 0
  %208 = vmatprep.subr.bf16.mxu0 0
  %209 = vmatpush1.bf16.msra.mxu0 %v200
  %210 = vmatprep.subr.bf16.mxu0 0
  %211 = vmatpush1.bf16.msra.mxu0 %v201
  %212 = vmatprep.subr.bf16.mxu0 0
  %213 = vmatpush1.bf16.msra.mxu0 0
  %214 = vmatprep.subr.bf16.mxu0 0
  %215 = vmatpush1.bf16.msra.mxu0 0
  %216 = vmatprep.subr.bf16.mxu0 0
  %217 = vmatpush1.bf16.msra.mxu0 0
  %218 = vmatprep.subr.bf16.mxu0 0
  %219 = vmatpush1.bf16.msra.mxu0 0
  %220 = vmatprep.subr.bf16.mxu0 0
  %221 = vmatpush1.bf16.msra.mxu0 0
  %222 = vmatprep.subr.bf16.mxu0 0
  %223 = vmatpush1.bf16.msra.mxu0 0
  %224 = vmatprep.subr.bf16.mxu0 0
  %225 = vmatpush1.bf16.msra.mxu0 0
  %226 = vmatprep.subr.bf16.mxu0 0
  %227 = vmatpush1.bf16.msra.mxu0 0
  %228 = vmatprep.subr.bf16.mxu0 0
  %229 = vmatpush1.bf16.msra.mxu0 0
  %230 = vmatprep.subr.bf16.mxu0 0
  %231 = vmatpush1.bf16.msra.mxu0 0
  %232 = vmatprep.subr.bf16.mxu0 0
  %233 = vmatpush1.bf16.msra.mxu0 0
  %234 = vmatprep.subr.bf16.mxu0 0
  %235 = vmatpush1.bf16.msra.mxu0 0
  %236 = vmatprep.subr.bf16.mxu0 0
  %237 = vmatpush1.bf16.msra.mxu0 0
  %238 = vmatprep.subr.bf16.mxu0 0
  %239 = vmatpush1.bf16.msra.mxu0 0
  %240 = vmatprep.mubr.bf16.mxu0 0
  %241 = vmatmul.mubr.bf16.gmra.mrb[0].mxu0 %v206
  %v242 = vpop.f32.mrb[0].mxu0
  %v243 = vadd.f32 0.0, %v242
  %v244 = vpop.f32.mrb[0].mxu0
  %v245 = vpop.f32.mrb[0].mxu0
  %v246 = vpop.f32.mrb[0].mxu0
  %247 = vdwg.mxu0
  %v248 = vadd.f32 %v190, %v243
  %v249 = vxor.u32 %v248, 2147483648
  %v250 = vmul.f32 %v249, 1.442695
  %v251 = vpow.pop %v250
  %v252 = vadd.f32 %v251, 1.0
  %v253 = vrcp.pop %v252
  %v254 = vmul.f32 1.0, %v253
  %v255 = vtanh.pop %v248
  %v256 = vmul.f32 %v254, 0.0
  %258 = vrot.lane.b32.xlu0 %v255, 64
  %v259 = vpop.permute.xlu0 %258
  %v261 = vmul.f32 %v254, %v259
  %263 = vrot.lane.b32.xlu0 %v261, 32
  %v264 = vpop.permute.xlu0 %263
  %v266 = vadd.f32 %v256, %v264
  %v267 = vtanh.pop %v266
  %269 = vrot.lane.b32.xlu0 %v267, 64
  %v270 = vpop.permute.xlu0 %269
  %v272 = vmul.f32 %v254, %v270
  %v277 = vunpack.c.l.b16 %v186
  %v278 = vunpack.c.l.b16 %v187
  %v279 = vunpack.c.l.b16 %v188
  %v280 = vunpack.c.l.b16 %v189
  %v281 = vpack.c.b16 %v278, %v277
  %v282 = vpack.c.b16 %v280, %v279
  %285 = vmatprep.subr.bf16.mxu0 0
  %286 = vmatpush1.bf16.msra.mxu0 %v281
  %287 = vmatprep.subr.bf16.mxu0 0
  %288 = vmatpush1.bf16.msra.mxu0 %v282
  %289 = vmatprep.subr.bf16.mxu0 0
  %290 = vmatpush1.bf16.msra.mxu0 0
  %291 = vmatprep.subr.bf16.mxu0 0
  %292 = vmatpush1.bf16.msra.mxu0 0
  %293 = vmatprep.subr.bf16.mxu0 0
  %294 = vmatpush1.bf16.msra.mxu0 0
  %295 = vmatprep.subr.bf16.mxu0 0
  %296 = vmatpush1.bf16.msra.mxu0 0
  %297 = vmatprep.subr.bf16.mxu0 0
  %298 = vmatpush1.bf16.msra.mxu0 0
  %299 = vmatprep.subr.bf16.mxu0 0
  %300 = vmatpush1.bf16.msra.mxu0 0
  %301 = vmatprep.subr.bf16.mxu0 0
  %302 = vmatpush1.bf16.msra.mxu0 0
  %303 = vmatprep.subr.bf16.mxu0 0
  %304 = vmatpush1.bf16.msra.mxu0 0
  %305 = vmatprep.subr.bf16.mxu0 0
  %306 = vmatpush1.bf16.msra.mxu0 0
  %307 = vmatprep.subr.bf16.mxu0 0
  %308 = vmatpush1.bf16.msra.mxu0 0
  %309 = vmatprep.subr.bf16.mxu0 0
  %310 = vmatpush1.bf16.msra.mxu0 0
  %311 = vmatprep.subr.bf16.mxu0 0
  %312 = vmatpush1.bf16.msra.mxu0 0
  %313 = vmatprep.subr.bf16.mxu0 0
  %314 = vmatpush1.bf16.msra.mxu0 0
  %315 = vmatprep.subr.bf16.mxu0 0
  %316 = vmatpush1.bf16.msra.mxu0 0
  %317 = vmatprep.mubr.bf16.mxu0 0
  %318 = vmatmul.mubr.bf16.gmra.mrb[0].mxu0 %v206
  %v319 = vpop.f32.mrb[0].mxu0
  %v320 = vadd.f32 0.0, %v319
  %v321 = vpop.f32.mrb[0].mxu0
  %v322 = vpop.f32.mrb[0].mxu0
  %v323 = vpop.f32.mrb[0].mxu0
  %324 = vdwg.mxu0
  %v325 = vadd.f32 %v191, %v320
  %v326 = vxor.u32 %v325, 2147483648
  %v327 = vmul.f32 %v326, 1.442695
  %v328 = vpow.pop %v327
  %v329 = vadd.f32 %v328, 1.0
  %v330 = vrcp.pop %v329
  %v331 = vmul.f32 1.0, %v330
  %v332 = vtanh.pop %v325
  %v333 = vmul.f32 %v331, 0.0
  %335 = vrot.lane.b32.xlu0 %v332, 64
  %v336 = vpop.permute.xlu0 %335
  %v338 = vmul.f32 %v331, %v336
  %340 = vrot.lane.b32.xlu0 %v338, 32
  %v341 = vpop.permute.xlu0 %340
  %v343 = vadd.f32 %v333, %v341
  %v344 = vtanh.pop %v343
  %346 = vrot.lane.b32.xlu0 %v344, 64
  %v347 = vpop.permute.xlu0 %346
  %v349 = vmul.f32 %v331, %v347
  %v350 = vld [vmem:[#allocation2 + $0x10] sm:$0xff]
  %v351 = vpack.c.bf16 %v272, %v272
  %353 = vrot.lane.b32.xlu0 %v351, 32
  %v354 = vpop.permute.xlu0 %353
  %v356 = vsel %vm204, %v354, 0
  %358 = vmatprep.subr.bf16.mxu0 0
  %359 = vmatpush1.bf16.msra.mxu0 %v200
  %360 = vmatprep.subr.bf16.mxu0 0
  %361 = vmatpush1.bf16.msra.mxu0 %v201
  %362 = vmatprep.subr.bf16.mxu0 0
  %363 = vmatpush1.bf16.msra.mxu0 0
  %364 = vmatprep.subr.bf16.mxu0 0
  %365 = vmatpush1.bf16.msra.mxu0 0
  %366 = vmatprep.subr.bf16.mxu0 0
  %367 = vmatpush1.bf16.msra.mxu0 0
  %368 = vmatprep.subr.bf16.mxu0 0
  %369 = vmatpush1.bf16.msra.mxu0 0
  %370 = vmatprep.subr.bf16.mxu0 0
  %371 = vmatpush1.bf16.msra.mxu0 0
  %372 = vmatprep.subr.bf16.mxu0 0
  %373 = vmatpush1.bf16.msra.mxu0 0
  %374 = vmatprep.subr.bf16.mxu0 0
  %375 = vmatpush1.bf16.msra.mxu0 0
  %376 = vmatprep.subr.bf16.mxu0 0
  %377 = vmatpush1.bf16.msra.mxu0 0
  %378 = vmatprep.subr.bf16.mxu0 0
  %379 = vmatpush1.bf16.msra.mxu0 0
  %380 = vmatprep.subr.bf16.mxu0 0
  %381 = vmatpush1.bf16.msra.mxu0 0
  %382 = vmatprep.subr.bf16.mxu0 0
  %383 = vmatpush1.bf16.msra.mxu0 0
  %384 = vmatprep.subr.bf16.mxu0 0
  %385 = vmatpush1.bf16.msra.mxu0 0
  %386 = vmatprep.subr.bf16.mxu0 0
  %387 = vmatpush1.bf16.msra.mxu0 0
  %388 = vmatprep.subr.bf16.mxu0 0
  %389 = vmatpush1.bf16.msra.mxu0 0
  %390 = vmatprep.mubr.bf16.mxu0 0
  %391 = vmatmul.mubr.bf16.gmra.mrb[0].mxu0 %v356
  %v392 = vpop.f32.mrb[0].mxu0
  %v393 = vadd.f32 0.0, %v392
  %v394 = vpop.f32.mrb[0].mxu0
  %v395 = vpop.f32.mrb[0].mxu0
  %v396 = vpop.f32.mrb[0].mxu0
  %397 = vdwg.mxu0
  %v398 = vadd.f32 %v350, %v393
  %v399 = vxor.u32 %v398, 2147483648
  %v400 = vmul.f32 %v399, 1.442695
  %v401 = vpow.pop %v400
  %v402 = vadd.f32 %v401, 1.0
  %v403 = vrcp.pop %v402
  %v404 = vmul.f32 1.0, %v403
  %v405 = vtanh.pop %v398
  %v406 = vmul.f32 %v404, %v266
  %408 = vrot.lane.b32.xlu0 %v405, 64
  %v409 = vpop.permute.xlu0 %408
  %v411 = vmul.f32 %v404, %v409
  %413 = vrot.lane.b32.xlu0 %v411, 32
  %v414 = vpop.permute.xlu0 %413
  %v416 = vadd.f32 %v406, %v414
  %v417 = vtanh.pop %v416
  %419 = vrot.lane.b32.xlu0 %v417, 64
  %v420 = vpop.permute.xlu0 %419
  %v422 = vmul.f32 %v404, %v420
  %v423 = vld [vmem:[#allocation2 + $0x20] sm:$0xff]
  %v424 = vpack.c.bf16 %v422, %v422
  %426 = vrot.lane.b32.xlu0 %v424, 32
  %v427 = vpop.permute.xlu0 %426
  %v429 = vsel %vm204, %v427, 0
  %431 = vmatprep.subr.bf16.mxu0 0
  %432 = vmatpush1.bf16.msra.mxu0 %v200
  %433 = vmatprep.subr.bf16.mxu0 0
  %434 = vmatpush1.bf16.msra.mxu0 %v201
  %435 = vmatprep.subr.bf16.mxu0 0
  %436 = vmatpush1.bf16.msra.mxu0 0
  %437 = vmatprep.subr.bf16.mxu0 0
  %438 = vmatpush1.bf16.msra.mxu0 0
  %439 = vmatprep.subr.bf16.mxu0 0
  %440 = vmatpush1.bf16.msra.mxu0 0
  %441 = vmatprep.subr.bf16.mxu0 0
  %442 = vmatpush1.bf16.msra.mxu0 0
  %443 = vmatprep.subr.bf16.mxu0 0
  %444 = vmatpush1.bf16.msra.mxu0 0
  %445 = vmatprep.subr.bf16.mxu0 0
  %446 = vmatpush1.bf16.msra.mxu0 0
  %447 = vmatprep.subr.bf16.mxu0 0
  %448 = vmatpush1.bf16.msra.mxu0 0
  %449 = vmatprep.subr.bf16.mxu0 0
  %450 = vmatpush1.bf16.msra.mxu0 0
  %451 = vmatprep.subr.bf16.mxu0 0
  %452 = vmatpush1.bf16.msra.mxu0 0
  %453 = vmatprep.subr.bf16.mxu0 0
  %454 = vmatpush1.bf16.msra.mxu0 0
  %455 = vmatprep.subr.bf16.mxu0 0
  %456 = vmatpush1.bf16.msra.mxu0 0
  %457 = vmatprep.subr.bf16.mxu0 0
  %458 = vmatpush1.bf16.msra.mxu0 0
  %459 = vmatprep.subr.bf16.mxu0 0
  %460 = vmatpush1.bf16.msra.mxu0 0
  %461 = vmatprep.subr.bf16.mxu0 0
  %462 = vmatpush1.bf16.msra.mxu0 0
  %463 = vmatprep.mubr.bf16.mxu0 0
  %464 = vmatmul.mubr.bf16.gmra.mrb[0].mxu0 %v429
  %v465 = vpop.f32.mrb[0].mxu0
  %v466 = vadd.f32 0.0, %v465
  %v467 = vpop.f32.mrb[0].mxu0
  %v468 = vpop.f32.mrb[0].mxu0
  %v469 = vpop.f32.mrb[0].mxu0
  %470 = vdwg.mxu0
  %v471 = vadd.f32 %v423, %v466
  %v472 = vxor.u32 %v471, 2147483648
  %v473 = vmul.f32 %v472, 1.442695
  %v474 = vpow.pop %v473
  %v475 = vadd.f32 %v474, 1.0
  %v476 = vrcp.pop %v475
  %v477 = vmul.f32 1.0, %v476
  %v478 = vtanh.pop %v471
  %v479 = vmul.f32 %v477, %v416
  %481 = vrot.lane.b32.xlu0 %v478, 64
  %v482 = vpop.permute.xlu0 %481
  %v484 = vmul.f32 %v477, %v482
  %486 = vrot.lane.b32.xlu0 %v484, 32
  %v487 = vpop.permute.xlu0 %486
  %v489 = vadd.f32 %v479, %v487
  %v490 = vtanh.pop %v489
  %492 = vrot.lane.b32.xlu0 %v490, 64
  %v493 = vpop.permute.xlu0 %492
  %v495 = vmul.f32 %v477, %v493
  %v496 = vld [vmem:[#allocation2 + $0x30] sm:$0xff]
  %v497 = vpack.c.bf16 %v495, %v495
  %499 = vrot.lane.b32.xlu0 %v497, 32
  %v500 = vpop.permute.xlu0 %499
  %v502 = vsel %vm204, %v500, 0
  %504 = vmatprep.subr.bf16.mxu0 0
  %505 = vmatpush1.bf16.msra.mxu0 %v200
  %506 = vmatprep.subr.bf16.mxu0 0
  %507 = vmatpush1.bf16.msra.mxu0 %v201
  %508 = vmatprep.subr.bf16.mxu0 0
  %509 = vmatpush1.bf16.msra.mxu0 0
  %510 = vmatprep.subr.bf16.mxu0 0
  %511 = vmatpush1.bf16.msra.mxu0 0
  %512 = vmatprep.subr.bf16.mxu0 0
  %513 = vmatpush1.bf16.msra.mxu0 0
  %514 = vmatprep.subr.bf16.mxu0 0
  %515 = vmatpush1.bf16.msra.mxu0 0
  %516 = vmatprep.subr.bf16.mxu0 0
  %517 = vmatpush1.bf16.msra.mxu0 0
  %518 = vmatprep.subr.bf16.mxu0 0
  %519 = vmatpush1.bf16.msra.mxu0 0
  %520 = vmatprep.subr.bf16.mxu0 0
  %521 = vmatpush1.bf16.msra.mxu0 0
  %522 = vmatprep.subr.bf16.mxu0 0
  %523 = vmatpush1.bf16.msra.mxu0 0
  %524 = vmatprep.subr.bf16.mxu0 0
  %525 = vmatpush1.bf16.msra.mxu0 0
  %526 = vmatprep.subr.bf16.mxu0 0
  %527 = vmatpush1.bf16.msra.mxu0 0
  %528 = vmatprep.subr.bf16.mxu0 0
  %529 = vmatpush1.bf16.msra.mxu0 0
  %530 = vmatprep.subr.bf16.mxu0 0
  %531 = vmatpush1.bf16.msra.mxu0 0
  %532 = vmatprep.subr.bf16.mxu0 0
  %533 = vmatpush1.bf16.msra.mxu0 0
  %534 = vmatprep.subr.bf16.mxu0 0
  %535 = vmatpush1.bf16.msra.mxu0 0
  %536 = vmatprep.mubr.bf16.mxu0 0
  %537 = vmatmul.mubr.bf16.gmra.mrb[0].mxu0 %v502
  %v538 = vpop.f32.mrb[0].mxu0
  %v539 = vadd.f32 0.0, %v538
  %v540 = vpop.f32.mrb[0].mxu0
  %v541 = vpop.f32.mrb[0].mxu0
  %v542 = vpop.f32.mrb[0].mxu0
  %543 = vdwg.mxu0
  %v544 = vadd.f32 %v496, %v539
  %v545 = vxor.u32 %v544, 2147483648
  %v546 = vmul.f32 %v545, 1.442695
  %v547 = vpow.pop %v546
  %v548 = vadd.f32 %v547, 1.0
  %v549 = vrcp.pop %v548
  %v550 = vmul.f32 1.0, %v549
  %v551 = vtanh.pop %v544
  %v552 = vmul.f32 %v550, %v489
  %554 = vrot.lane.b32.xlu0 %v551, 64
  %v555 = vpop.permute.xlu0 %554
  %v557 = vmul.f32 %v550, %v555
  %559 = vrot.lane.b32.xlu0 %v557, 32
  %v560 = vpop.permute.xlu0 %559
  %v562 = vadd.f32 %v552, %v560
  %v563 = vtanh.pop %v562
  %565 = vrot.lane.b32.xlu0 %v563, 64
  %v566 = vpop.permute.xlu0 %565
  %v568 = vmul.f32 %v550, %v566
  %v569 = vld [vmem:[#allocation2 + $0x40] sm:$0xff]
  %v570 = vpack.c.bf16 %v568, %v568
  %572 = vrot.lane.b32.xlu0 %v570, 32
  %v573 = vpop.permute.xlu0 %572
  %v575 = vsel %vm204, %v573, 0
  %577 = vmatprep.subr.bf16.mxu0 0
  %578 = vmatpush1.bf16.msra.mxu0 %v200
  %579 = vmatprep.subr.bf16.mxu0 0
  %580 = vmatpush1.bf16.msra.mxu0 %v201
  %581 = vmatprep.subr.bf16.mxu0 0
  %582 = vmatpush1.bf16.msra.mxu0 0
  %583 = vmatprep.subr.bf16.mxu0 0
  %584 = vmatpush1.bf16.msra.mxu0 0
  %585 = vmatprep.subr.bf16.mxu0 0
  %586 = vmatpush1.bf16.msra.mxu0 0
  %587 = vmatprep.subr.bf16.mxu0 0
  %588 = vmatpush1.bf16.msra.mxu0 0
  %589 = vmatprep.subr.bf16.mxu0 0
  %590 = vmatpush1.bf16.msra.mxu0 0
  %591 = vmatprep.subr.bf16.mxu0 0
  %592 = vmatpush1.bf16.msra.mxu0 0
  %593 = vmatprep.subr.bf16.mxu0 0
  %594 = vmatpush1.bf16.msra.mxu0 0
  %595 = vmatprep.subr.bf16.mxu0 0
  %596 = vmatpush1.bf16.msra.mxu0 0
  %597 = vmatprep.subr.bf16.mxu0 0
  %598 = vmatpush1.bf16.msra.mxu0 0
  %599 = vmatprep.subr.bf16.mxu0 0
  %600 = vmatpush1.bf16.msra.mxu0 0
  %601 = vmatprep.subr.bf16.mxu0 0
  %602 = vmatpush1.bf16.msra.mxu0 0
  %603 = vmatprep.subr.bf16.mxu0 0
  %604 = vmatpush1.bf16.msra.mxu0 0
  %605 = vmatprep.subr.bf16.mxu0 0
  %606 = vmatpush1.bf16.msra.mxu0 0
  %607 = vmatprep.subr.bf16.mxu0 0
  %608 = vmatpush1.bf16.msra.mxu0 0
  %609 = vmatprep.mubr.bf16.mxu0 0
  %610 = vmatmul.mubr.bf16.gmra.mrb[0].mxu0 %v575
  %v611 = vpop.f32.mrb[0].mxu0
  %v612 = vadd.f32 0.0, %v611
  %v613 = vpop.f32.mrb[0].mxu0
  %v614 = vpop.f32.mrb[0].mxu0
  %v615 = vpop.f32.mrb[0].mxu0
  %616 = vdwg.mxu0
  %v617 = vadd.f32 %v569, %v612
  %v618 = vxor.u32 %v617, 2147483648
  %v619 = vmul.f32 %v618, 1.442695
  %v620 = vpow.pop %v619
  %v621 = vadd.f32 %v620, 1.0
  %v622 = vrcp.pop %v621
  %v623 = vmul.f32 1.0, %v622
  %v624 = vtanh.pop %v617
  %v625 = vmul.f32 %v623, %v562
  %627 = vrot.lane.b32.xlu0 %v624, 64
  %v628 = vpop.permute.xlu0 %627
  %v630 = vmul.f32 %v623, %v628
  %632 = vrot.lane.b32.xlu0 %v630, 32
  %v633 = vpop.permute.xlu0 %632
  %v635 = vadd.f32 %v625, %v633
  %v636 = vtanh.pop %v635
  %638 = vrot.lane.b32.xlu0 %v636, 64
  %v639 = vpop.permute.xlu0 %638
  %v641 = vmul.f32 %v623, %v639
  %v642 = vld [vmem:[#allocation2 + $0x50] sm:$0xff]
  %v643 = vpack.c.bf16 %v641, %v641
  %645 = vrot.lane.b32.xlu0 %v643, 32
  %v646 = vpop.permute.xlu0 %645
  %v648 = vsel %vm204, %v646, 0
  %650 = vmatprep.subr.bf16.mxu0 0
  %651 = vmatpush1.bf16.msra.mxu0 %v200
  %652 = vmatprep.subr.bf16.mxu0 0
  %653 = vmatpush1.bf16.msra.mxu0 %v201
  %654 = vmatprep.subr.bf16.mxu0 0
  %655 = vmatpush1.bf16.msra.mxu0 0
  %656 = vmatprep.subr.bf16.mxu0 0
  %657 = vmatpush1.bf16.msra.mxu0 0
  %658 = vmatprep.subr.bf16.mxu0 0
  %659 = vmatpush1.bf16.msra.mxu0 0
  %660 = vmatprep.subr.bf16.mxu0 0
  %661 = vmatpush1.bf16.msra.mxu0 0
  %662 = vmatprep.subr.bf16.mxu0 0
  %663 = vmatpush1.bf16.msra.mxu0 0
  %664 = vmatprep.subr.bf16.mxu0 0
  %665 = vmatpush1.bf16.msra.mxu0 0
  %666 = vmatprep.subr.bf16.mxu0 0
  %667 = vmatpush1.bf16.msra.mxu0 0
  %668 = vmatprep.subr.bf16.mxu0 0
  %669 = vmatpush1.bf16.msra.mxu0 0
  %670 = vmatprep.subr.bf16.mxu0 0
  %671 = vmatpush1.bf16.msra.mxu0 0
  %672 = vmatprep.subr.bf16.mxu0 0
  %673 = vmatpush1.bf16.msra.mxu0 0
  %674 = vmatprep.subr.bf16.mxu0 0
  %675 = vmatpush1.bf16.msra.mxu0 0
  %676 = vmatprep.subr.bf16.mxu0 0
  %677 = vmatpush1.bf16.msra.mxu0 0
  %678 = vmatprep.subr.bf16.mxu0 0
  %679 = vmatpush1.bf16.msra.mxu0 0
  %680 = vmatprep.subr.bf16.mxu0 0
  %681 = vmatpush1.bf16.msra.mxu0 0
  %682 = vmatprep.mubr.bf16.mxu0 0
  %683 = vmatmul.mubr.bf16.gmra.mrb[0].mxu0 %v648
  %v684 = vpop.f32.mrb[0].mxu0
  %v685 = vadd.f32 0.0, %v684
  %v686 = vpop.f32.mrb[0].mxu0
  %v687 = vpop.f32.mrb[0].mxu0
  %v688 = vpop.f32.mrb[0].mxu0
  %689 = vdwg.mxu0
  %v690 = vadd.f32 %v642, %v685
  %v691 = vxor.u32 %v690, 2147483648
  %v692 = vmul.f32 %v691, 1.442695
  %v693 = vpow.pop %v692
  %v694 = vadd.f32 %v693, 1.0
  %v695 = vrcp.pop %v694
  %v696 = vmul.f32 1.0, %v695
  %v697 = vtanh.pop %v690
  %v698 = vmul.f32 %v696, %v635
  %700 = vrot.lane.b32.xlu0 %v697, 64
  %v701 = vpop.permute.xlu0 %700
  %v703 = vmul.f32 %v696, %v701
  %705 = vrot.lane.b32.xlu0 %v703, 32
  %v706 = vpop.permute.xlu0 %705
  %v708 = vadd.f32 %v698, %v706
  %v709 = vtanh.pop %v708
  %711 = vrot.lane.b32.xlu0 %v709, 64
  %v712 = vpop.permute.xlu0 %711
  %v714 = vmul.f32 %v696, %v712
  %v715 = vld [vmem:[#allocation2 + $0x60] sm:$0xff]
  %v716 = vpack.c.bf16 %v714, %v714
  %718 = vrot.lane.b32.xlu0 %v716, 32
  %v719 = vpop.permute.xlu0 %718
  %v721 = vsel %vm204, %v719, 0
  %723 = vmatprep.subr.bf16.mxu0 0
  %724 = vmatpush1.bf16.msra.mxu0 %v200
  %725 = vmatprep.subr.bf16.mxu0 0
  %726 = vmatpush1.bf16.msra.mxu0 %v201
  %727 = vmatprep.subr.bf16.mxu0 0
  %728 = vmatpush1.bf16.msra.mxu0 0
  %729 = vmatprep.subr.bf16.mxu0 0
  %730 = vmatpush1.bf16.msra.mxu0 0
  %731 = vmatprep.subr.bf16.mxu0 0
  %732 = vmatpush1.bf16.msra.mxu0 0
  %733 = vmatprep.subr.bf16.mxu0 0
  %734 = vmatpush1.bf16.msra.mxu0 0
  %735 = vmatprep.subr.bf16.mxu0 0
  %736 = vmatpush1.bf16.msra.mxu0 0
  %737 = vmatprep.subr.bf16.mxu0 0
  %738 = vmatpush1.bf16.msra.mxu0 0
  %739 = vmatprep.subr.bf16.mxu0 0
  %740 = vmatpush1.bf16.msra.mxu0 0
  %741 = vmatprep.subr.bf16.mxu0 0
  %742 = vmatpush1.bf16.msra.mxu0 0
  %743 = vmatprep.subr.bf16.mxu0 0
  %744 = vmatpush1.bf16.msra.mxu0 0
  %745 = vmatprep.subr.bf16.mxu0 0
  %746 = vmatpush1.bf16.msra.mxu0 0
  %747 = vmatprep.subr.bf16.mxu0 0
  %748 = vmatpush1.bf16.msra.mxu0 0
  %749 = vmatprep.subr.bf16.mxu0 0
  %750 = vmatpush1.bf16.msra.mxu0 0
  %751 = vmatprep.subr.bf16.mxu0 0
  %752 = vmatpush1.bf16.msra.mxu0 0
  %753 = vmatprep.subr.bf16.mxu0 0
  %754 = vmatpush1.bf16.msra.mxu0 0
  %755 = vmatprep.mubr.bf16.mxu0 0
  %756 = vmatmul.mubr.bf16.gmra.mrb[0].mxu0 %v721
  %v757 = vpop.f32.mrb[0].mxu0
  %v758 = vadd.f32 0.0, %v757
  %v759 = vpop.f32.mrb[0].mxu0
  %v760 = vpop.f32.mrb[0].mxu0
  %v761 = vpop.f32.mrb[0].mxu0
  %762 = vdwg.mxu0
  %v763 = vadd.f32 %v715, %v758
  %v764 = vxor.u32 %v763, 2147483648
  %v765 = vmul.f32 %v764, 1.442695
  %v766 = vpow.pop %v765
  %v767 = vadd.f32 %v766, 1.0
  %v768 = vrcp.pop %v767
  %v769 = vmul.f32 1.0, %v768
  %v770 = vtanh.pop %v763
  %v771 = vmul.f32 %v769, %v708
  %773 = vrot.lane.b32.xlu0 %v770, 64
  %v774 = vpop.permute.xlu0 %773
  %v776 = vmul.f32 %v769, %v774
  %778 = vrot.lane.b32.xlu0 %v776, 32
  %v779 = vpop.permute.xlu0 %778
  %v781 = vadd.f32 %v771, %v779
  %v782 = vtanh.pop %v781
  %784 = vrot.lane.b32.xlu0 %v782, 64
  %v785 = vpop.permute.xlu0 %784
  %v787 = vmul.f32 %v769, %v785
  %v788 = vld [vmem:[#allocation2 + $0x70] sm:$0xff]
  %v789 = vpack.c.bf16 %v787, %v787
  %791 = vrot.lane.b32.xlu0 %v789, 32
  %v792 = vpop.permute.xlu0 %791
  %v794 = vsel %vm204, %v792, 0
  %796 = vmatprep.subr.bf16.mxu0 0
  %797 = vmatpush1.bf16.msra.mxu0 %v200
  %798 = vmatprep.subr.bf16.mxu0 0
  %799 = vmatpush1.bf16.msra.mxu0 %v201
  %800 = vmatprep.subr.bf16.mxu0 0
  %801 = vmatpush1.bf16.msra.mxu0 0
  %802 = vmatprep.subr.bf16.mxu0 0
  %803 = vmatpush1.bf16.msra.mxu0 0
  %804 = vmatprep.subr.bf16.mxu0 0
  %805 = vmatpush1.bf16.msra.mxu0 0
  %806 = vmatprep.subr.bf16.mxu0 0
  %807 = vmatpush1.bf16.msra.mxu0 0
  %808 = vmatprep.subr.bf16.mxu0 0
  %809 = vmatpush1.bf16.msra.mxu0 0
  %810 = vmatprep.subr.bf16.mxu0 0
  %811 = vmatpush1.bf16.msra.mxu0 0
  %812 = vmatprep.subr.bf16.mxu0 0
  %813 = vmatpush1.bf16.msra.mxu0 0
  %814 = vmatprep.subr.bf16.mxu0 0
  %815 = vmatpush1.bf16.msra.mxu0 0
  %816 = vmatprep.subr.bf16.mxu0 0
  %817 = vmatpush1.bf16.msra.mxu0 0
  %818 = vmatprep.subr.bf16.mxu0 0
  %819 = vmatpush1.bf16.msra.mxu0 0
  %820 = vmatprep.subr.bf16.mxu0 0
  %821 = vmatpush1.bf16.msra.mxu0 0
  %822 = vmatprep.subr.bf16.mxu0 0
  %823 = vmatpush1.bf16.msra.mxu0 0
  %824 = vmatprep.subr.bf16.mxu0 0
  %825 = vmatpush1.bf16.msra.mxu0 0
  %826 = vmatprep.subr.bf16.mxu0 0
  %827 = vmatpush1.bf16.msra.mxu0 0
  %828 = vmatprep.mubr.bf16.mxu0 0
  %829 = vmatmul.mubr.bf16.gmra.mrb[0].mxu0 %v794
  %v830 = vpop.f32.mrb[0].mxu0
  %v831 = vadd.f32 0.0, %v830
  %v832 = vpop.f32.mrb[0].mxu0
  %v833 = vpop.f32.mrb[0].mxu0
  %v834 = vpop.f32.mrb[0].mxu0
  %835 = vdwg.mxu0
  %v836 = vadd.f32 %v788, %v831
  %v837 = vxor.u32 %v836, 2147483648
  %v838 = vmul.f32 %v837, 1.442695
  %v839 = vpow.pop %v838
  %v840 = vadd.f32 %v839, 1.0
  %v841 = vrcp.pop %v840
  %v842 = vmul.f32 1.0, %v841
  %v843 = vtanh.pop %v836
  %v844 = vmul.f32 %v842, %v781
  %846 = vrot.lane.b32.xlu0 %v843, 64
  %v847 = vpop.permute.xlu0 %846
  %v849 = vmul.f32 %v842, %v847
  %851 = vrot.lane.b32.xlu0 %v849, 32
  %v852 = vpop.permute.xlu0 %851
  %v854 = vadd.f32 %v844, %v852
  %v855 = vtanh.pop %v854
  %857 = vrot.lane.b32.xlu0 %v855, 64
  %v858 = vpop.permute.xlu0 %857
  %v860 = vmul.f32 %v842, %v858
  %862 = vrot.lane.b32.xlu0 %v860, 32
  %v863 = vpop.permute.xlu0 %862
  %866 = vrot.lane.b32.xlu0 %v349, 64
  %v867 = vpop.permute.xlu0 %866
  %v869 = vsel %vm204, %v863, %v867
  %v870 = vld [vmem:[%s5] sm:$0xf]
  %v871 = vld [vmem:[%s5 + $0x4] sm:$0xf]
  %v872 = vld [vmem:[%s5 + $0x8] sm:$0xf]
  %v873 = vld [vmem:[%s5 + $0xc] sm:$0xf]
  %v874 = vld [vmem:[%s5 + $0x10] sm:$0xf]
  %v875 = vld [vmem:[%s5 + $0x14] sm:$0xf]
  %v876 = vld [vmem:[%s5 + $0x18] sm:$0xf]
  %v877 = vld [vmem:[%s5 + $0x1c] sm:$0xf]
  %v878 = vld [vmem:[%s6] sm:$0x1]
  %v879 = vpack.c.bf16 %v869, %v869
  %v881 = vlaneseq
  %v882 = vshrl.u32 %v881, 7
  %v883 = vsub.s32 0, %v882
  %v884 = vrot.slane %v878, %v883
  %v894 = vunpack.c.l.b16 %v870
  %v895 = vunpack.c.l.b16 %v871
  %v896 = vunpack.c.l.b16 %v872
  %v897 = vunpack.c.l.b16 %v873
  %v898 = vunpack.c.l.b16 %v874
  %v899 = vunpack.c.l.b16 %v875
  %v900 = vunpack.c.l.b16 %v876
  %v901 = vunpack.c.l.b16 %v877
  %v902 = vpack.c.b16 %v895, %v894
  %v903 = vpack.c.b16 %v897, %v896
  %v904 = vpack.c.b16 %v899, %v898
  %v905 = vpack.c.b16 %v901, %v900
  %vm910 = vcmask 523264
  %v912 = vsel %vm910, %v879, 0
  %914 = vmatprep.subr.bf16.mxu0 0
  %915 = vmatpush1.bf16.msra.mxu0 %v902
  %916 = vmatprep.subr.bf16.mxu0 0
  %917 = vmatpush1.bf16.msra.mxu0 %v903
  %918 = vmatprep.subr.bf16.mxu0 0
  %919 = vmatpush1.bf16.msra.mxu0 %v904
  %920 = vmatprep.subr.bf16.mxu0 0
  %921 = vmatpush1.bf16.msra.mxu0 %v905
  %922 = vmatprep.subr.bf16.mxu0 0
  %923 = vmatpush1.bf16.msra.mxu0 0
  %924 = vmatprep.subr.bf16.mxu0 0
  %925 = vmatpush1.bf16.msra.mxu0 0
  %926 = vmatprep.subr.bf16.mxu0 0
  %927 = vmatpush1.bf16.msra.mxu0 0
  %928 = vmatprep.subr.bf16.mxu0 0
  %929 = vmatpush1.bf16.msra.mxu0 0
  %930 = vmatprep.subr.bf16.mxu0 0
  %931 = vmatpush1.bf16.msra.mxu0 0
  %932 = vmatprep.subr.bf16.mxu0 0
  %933 = vmatpush1.bf16.msra.mxu0 0
  %934 = vmatprep.subr.bf16.mxu0 0
  %935 = vmatpush1.bf16.msra.mxu0 0
  %936 = vmatprep.subr.bf16.mxu0 0
  %937 = vmatpush1.bf16.msra.mxu0 0
  %938 = vmatprep.subr.bf16.mxu0 0
  %939 = vmatpush1.bf16.msra.mxu0 0
  %940 = vmatprep.subr.bf16.mxu0 0
  %941 = vmatpush1.bf16.msra.mxu0 0
  %942 = vmatprep.subr.bf16.mxu0 0
  %943 = vmatpush1.bf16.msra.mxu0 0
  %944 = vmatprep.subr.bf16.mxu0 0
  %945 = vmatpush1.bf16.msra.mxu0 0
  %946 = vmatprep.mubr.bf16.mxu0 0
  %947 = vmatmul.mubr.bf16.gmra.mrb[0].mxu0 %v912
  %v948 = vpop.f32.mrb[0].mxu0
  %v949 = vadd.f32 %v884, %v948
  %v950 = vpop.f32.mrb[0].mxu0
  %v951 = vpop.f32.mrb[0].mxu0
  %v952 = vpop.f32.mrb[0].mxu0
  %953 = vdwg.mxu0
  %v954 = vmax.f32 %v949, 0.0
  %v955 = vmul.f32 %v954, 0.0625
  %v956 = vadd.f32 %v869, %v955
  %v957 = vpack.c.bf16 %v956, %v956
  %v959 = vsel %vm910, %v957, 0
  %961 = vmatprep.subr.bf16.mxu0 0
  %962 = vmatpush1.bf16.msra.mxu0 %v902
  %963 = vmatprep.subr.bf16.mxu0 0
  %964 = vmatpush1.bf16.msra.mxu0 %v903
  %965 = vmatprep.subr.bf16.mxu0 0
  %966 = vmatpush1.bf16.msra.mxu0 %v904
  %967 = vmatprep.subr.bf16.mxu0 0
  %968 = vmatpush1.bf16.msra.mxu0 %v905
  %969 = vmatprep.subr.bf16.mxu0 0
  %970 = vmatpush1.bf16.msra.mxu0 0
  %971 = vmatprep.subr.bf16.mxu0 0
  %972 = vmatpush1.bf16.msra.mxu0 0
  %973 = vmatprep.subr.bf16.mxu0 0
  %974 = vmatpush1.bf16.msra.mxu0 0
  %975 = vmatprep.subr.bf16.mxu0 0
  %976 = vmatpush1.bf16.msra.mxu0 0
  %977 = vmatprep.subr.bf16.mxu0 0
  %978 = vmatpush1.bf16.msra.mxu0 0
  %979 = vmatprep.subr.bf16.mxu0 0
  %980 = vmatpush1.bf16.msra.mxu0 0
  %981 = vmatprep.subr.bf16.mxu0 0
  %982 = vmatpush1.bf16.msra.mxu0 0
  %983 = vmatprep.subr.bf16.mxu0 0
  %984 = vmatpush1.bf16.msra.mxu0 0
  %985 = vmatprep.subr.bf16.mxu0 0
  %986 = vmatpush1.bf16.msra.mxu0 0
  %987 = vmatprep.subr.bf16.mxu0 0
  %988 = vmatpush1.bf16.msra.mxu0 0
  %989 = vmatprep.subr.bf16.mxu0 0
  %990 = vmatpush1.bf16.msra.mxu0 0
  %991 = vmatprep.subr.bf16.mxu0 0
  %992 = vmatpush1.bf16.msra.mxu0 0
  %993 = vmatprep.mubr.bf16.mxu0 0
  %994 = vmatmul.mubr.bf16.gmra.mrb[0].mxu0 %v959
  %v995 = vpop.f32.mrb[0].mxu0
  %v996 = vadd.f32 %v884, %v995
  %v997 = vpop.f32.mrb[0].mxu0
  %v998 = vpop.f32.mrb[0].mxu0
  %v999 = vpop.f32.mrb[0].mxu0
  %1000 = vdwg.mxu0
  %v1001 = vmax.f32 %v996, 0.0
  %v1002 = vmul.f32 %v1001, 0.0625
  %v1003 = vadd.f32 %v869, %v1002
  %v1004 = vpack.c.bf16 %v1003, %v1003
  %v1006 = vsel %vm910, %v1004, 0
  %1008 = vmatprep.subr.bf16.mxu0 0
  %1009 = vmatpush1.bf16.msra.mxu0 %v902
  %1010 = vmatprep.subr.bf16.mxu0 0
  %1011 = vmatpush1.bf16.msra.mxu0 %v903
  %1012 = vmatprep.subr.bf16.mxu0 0
  %1013 = vmatpush1.bf16.msra.mxu0 %v904
  %1014 = vmatprep.subr.bf16.mxu0 0
  %1015 = vmatpush1.bf16.msra.mxu0 %v905
  %1016 = vmatprep.subr.bf16.mxu0 0
  %1017 = vmatpush1.bf16.msra.mxu0 0
  %1018 = vmatprep.subr.bf16.mxu0 0
  %1019 = vmatpush1.bf16.msra.mxu0 0
  %1020 = vmatprep.subr.bf16.mxu0 0
  %1021 = vmatpush1.bf16.msra.mxu0 0
  %1022 = vmatprep.subr.bf16.mxu0 0
  %1023 = vmatpush1.bf16.msra.mxu0 0
  %1024 = vmatprep.subr.bf16.mxu0 0
  %1025 = vmatpush1.bf16.msra.mxu0 0
  %1026 = vmatprep.subr.bf16.mxu0 0
  %1027 = vmatpush1.bf16.msra.mxu0 0
  %1028 = vmatprep.subr.bf16.mxu0 0
  %1029 = vmatpush1.bf16.msra.mxu0 0
  %1030 = vmatprep.subr.bf16.mxu0 0
  %1031 = vmatpush1.bf16.msra.mxu0 0
  %1032 = vmatprep.subr.bf16.mxu0 0
  %1033 = vmatpush1.bf16.msra.mxu0 0
  %1034 = vmatprep.subr.bf16.mxu0 0
  %1035 = vmatpush1.bf16.msra.mxu0 0
  %1036 = vmatprep.subr.bf16.mxu0 0
  %1037 = vmatpush1.bf16.msra.mxu0 0
  %1038 = vmatprep.subr.bf16.mxu0 0
  %1039 = vmatpush1.bf16.msra.mxu0 0
  %1040 = vmatprep.mubr.bf16.mxu0 0
  %1041 = vmatmul.mubr.bf16.gmra.mrb[0].mxu0 %v1006
  %v1042 = vpop.f32.mrb[0].mxu0
  %v1043 = vadd.f32 %v884, %v1042
  %v1044 = vpop.f32.mrb[0].mxu0
  %v1045 = vpop.f32.mrb[0].mxu0
  %v1046 = vpop.f32.mrb[0].mxu0
  %1047 = vdwg.mxu0
  %v1048 = vmax.f32 %v1043, 0.0
  %v1049 = vmul.f32 %v1048, 0.125
  %v1050 = vadd.f32 %v869, %v1049
  %v1051 = vpack.c.bf16 %v1050, %v1050
  %v1053 = vsel %vm910, %v1051, 0
  %1055 = vmatprep.subr.bf16.mxu0 0
  %1056 = vmatpush1.bf16.msra.mxu0 %v902
  %1057 = vmatprep.subr.bf16.mxu0 0
  %1058 = vmatpush1.bf16.msra.mxu0 %v903
  %1059 = vmatprep.subr.bf16.mxu0 0
  %1060 = vmatpush1.bf16.msra.mxu0 %v904
  %1061 = vmatprep.subr.bf16.mxu0 0
  %1062 = vmatpush1.bf16.msra.mxu0 %v905
  %1063 = vmatprep.subr.bf16.mxu0 0
  %1064 = vmatpush1.bf16.msra.mxu0 0
  %1065 = vmatprep.subr.bf16.mxu0 0
  %1066 = vmatpush1.bf16.msra.mxu0 0
  %1067 = vmatprep.subr.bf16.mxu0 0
  %1068 = vmatpush1.bf16.msra.mxu0 0
  %1069 = vmatprep.subr.bf16.mxu0 0
  %1070 = vmatpush1.bf16.msra.mxu0 0
  %1071 = vmatprep.subr.bf16.mxu0 0
  %1072 = vmatpush1.bf16.msra.mxu0 0
  %1073 = vmatprep.subr.bf16.mxu0 0
  %1074 = vmatpush1.bf16.msra.mxu0 0
  %1075 = vmatprep.subr.bf16.mxu0 0
  %1076 = vmatpush1.bf16.msra.mxu0 0
  %1077 = vmatprep.subr.bf16.mxu0 0
  %1078 = vmatpush1.bf16.msra.mxu0 0
  %1079 = vmatprep.subr.bf16.mxu0 0
  %1080 = vmatpush1.bf16.msra.mxu0 0
  %1081 = vmatprep.subr.bf16.mxu0 0
  %1082 = vmatpush1.bf16.msra.mxu0 0
  %1083 = vmatprep.subr.bf16.mxu0 0
  %1084 = vmatpush1.bf16.msra.mxu0 0
  %1085 = vmatprep.subr.bf16.mxu0 0
  %1086 = vmatpush1.bf16.msra.mxu0 0
  %1087 = vmatprep.mubr.bf16.mxu0 0
  %1088 = vmatmul.mubr.bf16.gmra.mrb[0].mxu0 %v1053
  %v1089 = vpop.f32.mrb[0].mxu0
  %v1090 = vadd.f32 %v884, %v1089
  %v1091 = vpop.f32.mrb[0].mxu0
  %v1092 = vpop.f32.mrb[0].mxu0
  %v1093 = vpop.f32.mrb[0].mxu0
  %1094 = vdwg.mxu0
  %v1095 = vmax.f32 %v1090, 0.0
  %v1096 = vmul.f32 %v1001, 2.0
  %v1097 = vadd.f32 %v954, %v1096
  %v1098 = vmul.f32 %v1048, 2.0
  %v1099 = vadd.f32 %v1097, %v1098
  %v1100 = vadd.f32 %v1099, %v1095
  %v1101 = vmul.f32 %v1100, 0.020833334
  %v1102 = vadd.f32 %v869, %v1101
  %v1103 = vpack.c.bf16 %v1102, %v1102
  %v1105 = vsel %vm910, %v1103, 0
  %1107 = vmatprep.subr.bf16.mxu0 0
  %1108 = vmatpush1.bf16.msra.mxu0 %v902
  %1109 = vmatprep.subr.bf16.mxu0 0
  %1110 = vmatpush1.bf16.msra.mxu0 %v903
  %1111 = vmatprep.subr.bf16.mxu0 0
  %1112 = vmatpush1.bf16.msra.mxu0 %v904
  %1113 = vmatprep.subr.bf16.mxu0 0
  %1114 = vmatpush1.bf16.msra.mxu0 %v905
  %1115 = vmatprep.subr.bf16.mxu0 0
  %1116 = vmatpush1.bf16.msra.mxu0 0
  %1117 = vmatprep.subr.bf16.mxu0 0
  %1118 = vmatpush1.bf16.msra.mxu0 0
  %1119 = vmatprep.subr.bf16.mxu0 0
  %1120 = vmatpush1.bf16.msra.mxu0 0
  %1121 = vmatprep.subr.bf16.mxu0 0
  %1122 = vmatpush1.bf16.msra.mxu0 0
  %1123 = vmatprep.subr.bf16.mxu0 0
  %1124 = vmatpush1.bf16.msra.mxu0 0
  %1125 = vmatprep.subr.bf16.mxu0 0
  %1126 = vmatpush1.bf16.msra.mxu0 0
  %1127 = vmatprep.subr.bf16.mxu0 0
  %1128 = vmatpush1.bf16.msra.mxu0 0
  %1129 = vmatprep.subr.bf16.mxu0 0
  %1130 = vmatpush1.bf16.msra.mxu0 0
  %1131 = vmatprep.subr.bf16.mxu0 0
  %1132 = vmatpush1.bf16.msra.mxu0 0
  %1133 = vmatprep.subr.bf16.mxu0 0
  %1134 = vmatpush1.bf16.msra.mxu0 0
  %1135 = vmatprep.subr.bf16.mxu0 0
  %1136 = vmatpush1.bf16.msra.mxu0 0
  %1137 = vmatprep.subr.bf16.mxu0 0
  %1138 = vmatpush1.bf16.msra.mxu0 0
  %1139 = vmatprep.mubr.bf16.mxu0 0
  %1140 = vmatmul.mubr.bf16.gmra.mrb[0].mxu0 %v1105
  %v1141 = vpop.f32.mrb[0].mxu0
  %v1142 = vadd.f32 %v884, %v1141
  %v1143 = vpop.f32.mrb[0].mxu0
  %v1144 = vpop.f32.mrb[0].mxu0
  %v1145 = vpop.f32.mrb[0].mxu0
  %1146 = vdwg.mxu0
  %v1147 = vmax.f32 %v1142, 0.0
  %v1148 = vmul.f32 %v1147, 0.0625
  %v1149 = vadd.f32 %v1102, %v1148
  %v1150 = vpack.c.bf16 %v1149, %v1149
  %v1152 = vsel %vm910, %v1150, 0
  %1154 = vmatprep.subr.bf16.mxu0 0
  %1155 = vmatpush1.bf16.msra.mxu0 %v902
  %1156 = vmatprep.subr.bf16.mxu0 0
  %1157 = vmatpush1.bf16.msra.mxu0 %v903
  %1158 = vmatprep.subr.bf16.mxu0 0
  %1159 = vmatpush1.bf16.msra.mxu0 %v904
  %1160 = vmatprep.subr.bf16.mxu0 0
  %1161 = vmatpush1.bf16.msra.mxu0 %v905
  %1162 = vmatprep.subr.bf16.mxu0 0
  %1163 = vmatpush1.bf16.msra.mxu0 0
  %1164 = vmatprep.subr.bf16.mxu0 0
  %1165 = vmatpush1.bf16.msra.mxu0 0
  %1166 = vmatprep.subr.bf16.mxu0 0
  %1167 = vmatpush1.bf16.msra.mxu0 0
  %1168 = vmatprep.subr.bf16.mxu0 0
  %1169 = vmatpush1.bf16.msra.mxu0 0
  %1170 = vmatprep.subr.bf16.mxu0 0
  %1171 = vmatpush1.bf16.msra.mxu0 0
  %1172 = vmatprep.subr.bf16.mxu0 0
  %1173 = vmatpush1.bf16.msra.mxu0 0
  %1174 = vmatprep.subr.bf16.mxu0 0
  %1175 = vmatpush1.bf16.msra.mxu0 0
  %1176 = vmatprep.subr.bf16.mxu0 0
  %1177 = vmatpush1.bf16.msra.mxu0 0
  %1178 = vmatprep.subr.bf16.mxu0 0
  %1179 = vmatpush1.bf16.msra.mxu0 0
  %1180 = vmatprep.subr.bf16.mxu0 0
  %1181 = vmatpush1.bf16.msra.mxu0 0
  %1182 = vmatprep.subr.bf16.mxu0 0
  %1183 = vmatpush1.bf16.msra.mxu0 0
  %1184 = vmatprep.subr.bf16.mxu0 0
  %1185 = vmatpush1.bf16.msra.mxu0 0
  %1186 = vmatprep.mubr.bf16.mxu0 0
  %1187 = vmatmul.mubr.bf16.gmra.mrb[0].mxu0 %v1152
  %v1188 = vpop.f32.mrb[0].mxu0
  %v1189 = vadd.f32 %v884, %v1188
  %v1190 = vpop.f32.mrb[0].mxu0
  %v1191 = vpop.f32.mrb[0].mxu0
  %v1192 = vpop.f32.mrb[0].mxu0
  %1193 = vdwg.mxu0
  %v1194 = vmax.f32 %v1189, 0.0
  %v1195 = vmul.f32 %v1194, 0.0625
  %v1196 = vadd.f32 %v1102, %v1195
  %v1197 = vpack.c.bf16 %v1196, %v1196
  %v1199 = vsel %vm910, %v1197, 0
  %1201 = vmatprep.subr.bf16.mxu0 0
  %1202 = vmatpush1.bf16.msra.mxu0 %v902
  %1203 = vmatprep.subr.bf16.mxu0 0
  %1204 = vmatpush1.bf16.msra.mxu0 %v903
  %1205 = vmatprep.subr.bf16.mxu0 0
  %1206 = vmatpush1.bf16.msra.mxu0 %v904
  %1207 = vmatprep.subr.bf16.mxu0 0
  %1208 = vmatpush1.bf16.msra.mxu0 %v905
  %1209 = vmatprep.subr.bf16.mxu0 0
  %1210 = vmatpush1.bf16.msra.mxu0 0
  %1211 = vmatprep.subr.bf16.mxu0 0
  %1212 = vmatpush1.bf16.msra.mxu0 0
  %1213 = vmatprep.subr.bf16.mxu0 0
  %1214 = vmatpush1.bf16.msra.mxu0 0
  %1215 = vmatprep.subr.bf16.mxu0 0
  %1216 = vmatpush1.bf16.msra.mxu0 0
  %1217 = vmatprep.subr.bf16.mxu0 0
  %1218 = vmatpush1.bf16.msra.mxu0 0
  %1219 = vmatprep.subr.bf16.mxu0 0
  %1220 = vmatpush1.bf16.msra.mxu0 0
  %1221 = vmatprep.subr.bf16.mxu0 0
  %1222 = vmatpush1.bf16.msra.mxu0 0
  %1223 = vmatprep.subr.bf16.mxu0 0
  %1224 = vmatpush1.bf16.msra.mxu0 0
  %1225 = vmatprep.subr.bf16.mxu0 0
  %1226 = vmatpush1.bf16.msra.mxu0 0
  %1227 = vmatprep.subr.bf16.mxu0 0
  %1228 = vmatpush1.bf16.msra.mxu0 0
  %1229 = vmatprep.subr.bf16.mxu0 0
  %1230 = vmatpush1.bf16.msra.mxu0 0
  %1231 = vmatprep.subr.bf16.mxu0 0
  %1232 = vmatpush1.bf16.msra.mxu0 0
  %1233 = vmatprep.mubr.bf16.mxu0 0
  %1234 = vmatmul.mubr.bf16.gmra.mrb[0].mxu0 %v1199
  %v1235 = vpop.f32.mrb[0].mxu0
  %v1236 = vadd.f32 %v884, %v1235
  %v1237 = vpop.f32.mrb[0].mxu0
  %v1238 = vpop.f32.mrb[0].mxu0
  %v1239 = vpop.f32.mrb[0].mxu0
  %1240 = vdwg.mxu0
  %v1241 = vmax.f32 %v1236, 0.0
  %v1242 = vmul.f32 %v1241, 0.125
  %v1243 = vadd.f32 %v1102, %v1242
  %v1244 = vpack.c.bf16 %v1243, %v1243
  %v1246 = vsel %vm910, %v1244, 0
  %1248 = vmatprep.subr.bf16.mxu0 0
  %1249 = vmatpush1.bf16.msra.mxu0 %v902
  %1250 = vmatprep.subr.bf16.mxu0 0
  %1251 = vmatpush1.bf16.msra.mxu0 %v903
  %1252 = vmatprep.subr.bf16.mxu0 0
  %1253 = vmatpush1.bf16.msra.mxu0 %v904
  %1254 = vmatprep.subr.bf16.mxu0 0
  %1255 = vmatpush1.bf16.msra.mxu0 %v905
  %1256 = vmatprep.subr.bf16.mxu0 0
  %1257 = vmatpush1.bf16.msra.mxu0 0
  %1258 = vmatprep.subr.bf16.mxu0 0
  %1259 = vmatpush1.bf16.msra.mxu0 0
  %1260 = vmatprep.subr.bf16.mxu0 0
  %1261 = vmatpush1.bf16.msra.mxu0 0
  %1262 = vmatprep.subr.bf16.mxu0 0
  %1263 = vmatpush1.bf16.msra.mxu0 0
  %1264 = vmatprep.subr.bf16.mxu0 0
  %1265 = vmatpush1.bf16.msra.mxu0 0
  %1266 = vmatprep.subr.bf16.mxu0 0
  %1267 = vmatpush1.bf16.msra.mxu0 0
  %1268 = vmatprep.subr.bf16.mxu0 0
  %1269 = vmatpush1.bf16.msra.mxu0 0
  %1270 = vmatprep.subr.bf16.mxu0 0
  %1271 = vmatpush1.bf16.msra.mxu0 0
  %1272 = vmatprep.subr.bf16.mxu0 0
  %1273 = vmatpush1.bf16.msra.mxu0 0
  %1274 = vmatprep.subr.bf16.mxu0 0
  %1275 = vmatpush1.bf16.msra.mxu0 0
  %1276 = vmatprep.subr.bf16.mxu0 0
  %1277 = vmatpush1.bf16.msra.mxu0 0
  %1278 = vmatprep.subr.bf16.mxu0 0
  %1279 = vmatpush1.bf16.msra.mxu0 0
  %1280 = vmatprep.mubr.bf16.mxu0 0
  %1281 = vmatmul.mubr.bf16.gmra.mrb[0].mxu0 %v1246
  %v1282 = vpop.f32.mrb[0].mxu0
  %v1283 = vadd.f32 %v884, %v1282
  %v1284 = vpop.f32.mrb[0].mxu0
  %v1285 = vpop.f32.mrb[0].mxu0
  %v1286 = vpop.f32.mrb[0].mxu0
  %1287 = vdwg.mxu0
  %v1288 = vmax.f32 %v1283, 0.0
  %v1289 = vmul.f32 %v1194, 2.0
  %v1290 = vadd.f32 %v1147, %v1289
  %v1291 = vmul.f32 %v1241, 2.0
  %v1292 = vadd.f32 %v1290, %v1291
  %v1293 = vadd.f32 %v1292, %v1288
  %v1294 = vmul.f32 %v1293, 0.020833334
  %v1295 = vadd.f32 %v1102, %v1294
  %v1296 = vpack.c.bf16 %v1295, %v1295
  %v1298 = vsel %vm910, %v1296, 0
  %1300 = vmatprep.subr.bf16.mxu0 0
  %1301 = vmatpush1.bf16.msra.mxu0 %v902
  %1302 = vmatprep.subr.bf16.mxu0 0
  %1303 = vmatpush1.bf16.msra.mxu0 %v903
  %1304 = vmatprep.subr.bf16.mxu0 0
  %1305 = vmatpush1.bf16.msra.mxu0 %v904
  %1306 = vmatprep.subr.bf16.mxu0 0
  %1307 = vmatpush1.bf16.msra.mxu0 %v905
  %1308 = vmatprep.subr.bf16.mxu0 0
  %1309 = vmatpush1.bf16.msra.mxu0 0
  %1310 = vmatprep.subr.bf16.mxu0 0
  %1311 = vmatpush1.bf16.msra.mxu0 0
  %1312 = vmatprep.subr.bf16.mxu0 0
  %1313 = vmatpush1.bf16.msra.mxu0 0
  %1314 = vmatprep.subr.bf16.mxu0 0
  %1315 = vmatpush1.bf16.msra.mxu0 0
  %1316 = vmatprep.subr.bf16.mxu0 0
  %1317 = vmatpush1.bf16.msra.mxu0 0
  %1318 = vmatprep.subr.bf16.mxu0 0
  %1319 = vmatpush1.bf16.msra.mxu0 0
  %1320 = vmatprep.subr.bf16.mxu0 0
  %1321 = vmatpush1.bf16.msra.mxu0 0
  %1322 = vmatprep.subr.bf16.mxu0 0
  %1323 = vmatpush1.bf16.msra.mxu0 0
  %1324 = vmatprep.subr.bf16.mxu0 0
  %1325 = vmatpush1.bf16.msra.mxu0 0
  %1326 = vmatprep.subr.bf16.mxu0 0
  %1327 = vmatpush1.bf16.msra.mxu0 0
  %1328 = vmatprep.subr.bf16.mxu0 0
  %1329 = vmatpush1.bf16.msra.mxu0 0
  %1330 = vmatprep.subr.bf16.mxu0 0
  %1331 = vmatpush1.bf16.msra.mxu0 0
  %1332 = vmatprep.mubr.bf16.mxu0 0
  %1333 = vmatmul.mubr.bf16.gmra.mrb[0].mxu0 %v1298
  %v1334 = vpop.f32.mrb[0].mxu0
  %v1335 = vadd.f32 %v884, %v1334
  %v1336 = vpop.f32.mrb[0].mxu0
  %v1337 = vpop.f32.mrb[0].mxu0
  %v1338 = vpop.f32.mrb[0].mxu0
  %1339 = vdwg.mxu0
  %v1340 = vmax.f32 %v1335, 0.0
  %v1341 = vmul.f32 %v1340, 0.0625
  %v1342 = vadd.f32 %v1295, %v1341
  %v1343 = vpack.c.bf16 %v1342, %v1342
  %v1345 = vsel %vm910, %v1343, 0
  %1347 = vmatprep.subr.bf16.mxu0 0
  %1348 = vmatpush1.bf16.msra.mxu0 %v902
  %1349 = vmatprep.subr.bf16.mxu0 0
  %1350 = vmatpush1.bf16.msra.mxu0 %v903
  %1351 = vmatprep.subr.bf16.mxu0 0
  %1352 = vmatpush1.bf16.msra.mxu0 %v904
  %1353 = vmatprep.subr.bf16.mxu0 0
  %1354 = vmatpush1.bf16.msra.mxu0 %v905
  %1355 = vmatprep.subr.bf16.mxu0 0
  %1356 = vmatpush1.bf16.msra.mxu0 0
  %1357 = vmatprep.subr.bf16.mxu0 0
  %1358 = vmatpush1.bf16.msra.mxu0 0
  %1359 = vmatprep.subr.bf16.mxu0 0
  %1360 = vmatpush1.bf16.msra.mxu0 0
  %1361 = vmatprep.subr.bf16.mxu0 0
  %1362 = vmatpush1.bf16.msra.mxu0 0
  %1363 = vmatprep.subr.bf16.mxu0 0
  %1364 = vmatpush1.bf16.msra.mxu0 0
  %1365 = vmatprep.subr.bf16.mxu0 0
  %1366 = vmatpush1.bf16.msra.mxu0 0
  %1367 = vmatprep.subr.bf16.mxu0 0
  %1368 = vmatpush1.bf16.msra.mxu0 0
  %1369 = vmatprep.subr.bf16.mxu0 0
  %1370 = vmatpush1.bf16.msra.mxu0 0
  %1371 = vmatprep.subr.bf16.mxu0 0
  %1372 = vmatpush1.bf16.msra.mxu0 0
  %1373 = vmatprep.subr.bf16.mxu0 0
  %1374 = vmatpush1.bf16.msra.mxu0 0
  %1375 = vmatprep.subr.bf16.mxu0 0
  %1376 = vmatpush1.bf16.msra.mxu0 0
  %1377 = vmatprep.subr.bf16.mxu0 0
  %1378 = vmatpush1.bf16.msra.mxu0 0
  %1379 = vmatprep.mubr.bf16.mxu0 0
  %1380 = vmatmul.mubr.bf16.gmra.mrb[0].mxu0 %v1345
  %v1381 = vpop.f32.mrb[0].mxu0
  %v1382 = vadd.f32 %v884, %v1381
  %v1383 = vpop.f32.mrb[0].mxu0
  %v1384 = vpop.f32.mrb[0].mxu0
  %v1385 = vpop.f32.mrb[0].mxu0
  %1386 = vdwg.mxu0
  %v1387 = vmax.f32 %v1382, 0.0
  %v1388 = vmul.f32 %v1387, 0.0625
  %v1389 = vadd.f32 %v1295, %v1388
  %v1390 = vpack.c.bf16 %v1389, %v1389
  %v1392 = vsel %vm910, %v1390, 0
  %1394 = vmatprep.subr.bf16.mxu0 0
  %1395 = vmatpush1.bf16.msra.mxu0 %v902
  %1396 = vmatprep.subr.bf16.mxu0 0
  %1397 = vmatpush1.bf16.msra.mxu0 %v903
  %1398 = vmatprep.subr.bf16.mxu0 0
  %1399 = vmatpush1.bf16.msra.mxu0 %v904
  %1400 = vmatprep.subr.bf16.mxu0 0
  %1401 = vmatpush1.bf16.msra.mxu0 %v905
  %1402 = vmatprep.subr.bf16.mxu0 0
  %1403 = vmatpush1.bf16.msra.mxu0 0
  %1404 = vmatprep.subr.bf16.mxu0 0
  %1405 = vmatpush1.bf16.msra.mxu0 0
  %1406 = vmatprep.subr.bf16.mxu0 0
  %1407 = vmatpush1.bf16.msra.mxu0 0
  %1408 = vmatprep.subr.bf16.mxu0 0
  %1409 = vmatpush1.bf16.msra.mxu0 0
  %1410 = vmatprep.subr.bf16.mxu0 0
  %1411 = vmatpush1.bf16.msra.mxu0 0
  %1412 = vmatprep.subr.bf16.mxu0 0
  %1413 = vmatpush1.bf16.msra.mxu0 0
  %1414 = vmatprep.subr.bf16.mxu0 0
  %1415 = vmatpush1.bf16.msra.mxu0 0
  %1416 = vmatprep.subr.bf16.mxu0 0
  %1417 = vmatpush1.bf16.msra.mxu0 0
  %1418 = vmatprep.subr.bf16.mxu0 0
  %1419 = vmatpush1.bf16.msra.mxu0 0
  %1420 = vmatprep.subr.bf16.mxu0 0
  %1421 = vmatpush1.bf16.msra.mxu0 0
  %1422 = vmatprep.subr.bf16.mxu0 0
  %1423 = vmatpush1.bf16.msra.mxu0 0
  %1424 = vmatprep.subr.bf16.mxu0 0
  %1425 = vmatpush1.bf16.msra.mxu0 0
  %1426 = vmatprep.mubr.bf16.mxu0 0
  %1427 = vmatmul.mubr.bf16.gmra.mrb[0].mxu0 %v1392
  %v1428 = vpop.f32.mrb[0].mxu0
  %v1429 = vadd.f32 %v884, %v1428
  %v1430 = vpop.f32.mrb[0].mxu0
  %v1431 = vpop.f32.mrb[0].mxu0
  %v1432 = vpop.f32.mrb[0].mxu0
  %1433 = vdwg.mxu0
  %v1434 = vmax.f32 %v1429, 0.0
  %v1435 = vmul.f32 %v1434, 0.125
  %v1436 = vadd.f32 %v1295, %v1435
  %v1437 = vpack.c.bf16 %v1436, %v1436
  %v1439 = vsel %vm910, %v1437, 0
  %1441 = vmatprep.subr.bf16.mxu0 0
  %1442 = vmatpush1.bf16.msra.mxu0 %v902
  %1443 = vmatprep.subr.bf16.mxu0 0
  %1444 = vmatpush1.bf16.msra.mxu0 %v903
  %1445 = vmatprep.subr.bf16.mxu0 0
  %1446 = vmatpush1.bf16.msra.mxu0 %v904
  %1447 = vmatprep.subr.bf16.mxu0 0
  %1448 = vmatpush1.bf16.msra.mxu0 %v905
  %1449 = vmatprep.subr.bf16.mxu0 0
  %1450 = vmatpush1.bf16.msra.mxu0 0
  %1451 = vmatprep.subr.bf16.mxu0 0
  %1452 = vmatpush1.bf16.msra.mxu0 0
  %1453 = vmatprep.subr.bf16.mxu0 0
  %1454 = vmatpush1.bf16.msra.mxu0 0
  %1455 = vmatprep.subr.bf16.mxu0 0
  %1456 = vmatpush1.bf16.msra.mxu0 0
  %1457 = vmatprep.subr.bf16.mxu0 0
  %1458 = vmatpush1.bf16.msra.mxu0 0
  %1459 = vmatprep.subr.bf16.mxu0 0
  %1460 = vmatpush1.bf16.msra.mxu0 0
  %1461 = vmatprep.subr.bf16.mxu0 0
  %1462 = vmatpush1.bf16.msra.mxu0 0
  %1463 = vmatprep.subr.bf16.mxu0 0
  %1464 = vmatpush1.bf16.msra.mxu0 0
  %1465 = vmatprep.subr.bf16.mxu0 0
  %1466 = vmatpush1.bf16.msra.mxu0 0
  %1467 = vmatprep.subr.bf16.mxu0 0
  %1468 = vmatpush1.bf16.msra.mxu0 0
  %1469 = vmatprep.subr.bf16.mxu0 0
  %1470 = vmatpush1.bf16.msra.mxu0 0
  %1471 = vmatprep.subr.bf16.mxu0 0
  %1472 = vmatpush1.bf16.msra.mxu0 0
  %1473 = vmatprep.mubr.bf16.mxu0 0
  %1474 = vmatmul.mubr.bf16.gmra.mrb[0].mxu0 %v1439
  %v1475 = vpop.f32.mrb[0].mxu0
  %v1476 = vadd.f32 %v884, %v1475
  %v1477 = vpop.f32.mrb[0].mxu0
  %v1478 = vpop.f32.mrb[0].mxu0
  %v1479 = vpop.f32.mrb[0].mxu0
  %1480 = vdwg.mxu0
  %v1481 = vmax.f32 %v1476, 0.0
  %v1482 = vmul.f32 %v1387, 2.0
  %v1483 = vadd.f32 %v1340, %v1482
  %v1484 = vmul.f32 %v1434, 2.0
  %v1485 = vadd.f32 %v1483, %v1484
  %v1486 = vadd.f32 %v1485, %v1481
  %v1487 = vmul.f32 %v1486, 0.020833334
  %v1488 = vadd.f32 %v1295, %v1487
  %v1489 = vpack.c.bf16 %v1488, %v1488
  %v1491 = vsel %vm910, %v1489, 0
  %1493 = vmatprep.subr.bf16.mxu0 0
  %1494 = vmatpush1.bf16.msra.mxu0 %v902
  %1495 = vmatprep.subr.bf16.mxu0 0
  %1496 = vmatpush1.bf16.msra.mxu0 %v903
  %1497 = vmatprep.subr.bf16.mxu0 0
  %1498 = vmatpush1.bf16.msra.mxu0 %v904
  %1499 = vmatprep.subr.bf16.mxu0 0
  %1500 = vmatpush1.bf16.msra.mxu0 %v905
  %1501 = vmatprep.subr.bf16.mxu0 0
  %1502 = vmatpush1.bf16.msra.mxu0 0
  %1503 = vmatprep.subr.bf16.mxu0 0
  %1504 = vmatpush1.bf16.msra.mxu0 0
  %1505 = vmatprep.subr.bf16.mxu0 0
  %1506 = vmatpush1.bf16.msra.mxu0 0
  %1507 = vmatprep.subr.bf16.mxu0 0
  %1508 = vmatpush1.bf16.msra.mxu0 0
  %1509 = vmatprep.subr.bf16.mxu0 0
  %1510 = vmatpush1.bf16.msra.mxu0 0
  %1511 = vmatprep.subr.bf16.mxu0 0
  %1512 = vmatpush1.bf16.msra.mxu0 0
  %1513 = vmatprep.subr.bf16.mxu0 0
  %1514 = vmatpush1.bf16.msra.mxu0 0
  %1515 = vmatprep.subr.bf16.mxu0 0
  %1516 = vmatpush1.bf16.msra.mxu0 0
  %1517 = vmatprep.subr.bf16.mxu0 0
  %1518 = vmatpush1.bf16.msra.mxu0 0
  %1519 = vmatprep.subr.bf16.mxu0 0
  %1520 = vmatpush1.bf16.msra.mxu0 0
  %1521 = vmatprep.subr.bf16.mxu0 0
  %1522 = vmatpush1.bf16.msra.mxu0 0
  %1523 = vmatprep.subr.bf16.mxu0 0
  %1524 = vmatpush1.bf16.msra.mxu0 0
  %1525 = vmatprep.mubr.bf16.mxu0 0
  %1526 = vmatmul.mubr.bf16.gmra.mrb[0].mxu0 %v1491
  %v1527 = vpop.f32.mrb[0].mxu0
  %v1528 = vadd.f32 %v884, %v1527
  %v1529 = vpop.f32.mrb[0].mxu0
  %v1530 = vpop.f32.mrb[0].mxu0
  %v1531 = vpop.f32.mrb[0].mxu0
  %1532 = vdwg.mxu0
  %v1533 = vmax.f32 %v1528, 0.0
  %v1534 = vmul.f32 %v1533, 0.0625
  %v1535 = vadd.f32 %v1488, %v1534
  %v1536 = vpack.c.bf16 %v1535, %v1535
  %v1538 = vsel %vm910, %v1536, 0
  %1540 = vmatprep.subr.bf16.mxu0 0
  %1541 = vmatpush1.bf16.msra.mxu0 %v902
  %1542 = vmatprep.subr.bf16.mxu0 0
  %1543 = vmatpush1.bf16.msra.mxu0 %v903
  %1544 = vmatprep.subr.bf16.mxu0 0
  %1545 = vmatpush1.bf16.msra.mxu0 %v904
  %1546 = vmatprep.subr.bf16.mxu0 0
  %1547 = vmatpush1.bf16.msra.mxu0 %v905
  %1548 = vmatprep.subr.bf16.mxu0 0
  %1549 = vmatpush1.bf16.msra.mxu0 0
  %1550 = vmatprep.subr.bf16.mxu0 0
  %1551 = vmatpush1.bf16.msra.mxu0 0
  %1552 = vmatprep.subr.bf16.mxu0 0
  %1553 = vmatpush1.bf16.msra.mxu0 0
  %1554 = vmatprep.subr.bf16.mxu0 0
  %1555 = vmatpush1.bf16.msra.mxu0 0
  %1556 = vmatprep.subr.bf16.mxu0 0
  %1557 = vmatpush1.bf16.msra.mxu0 0
  %1558 = vmatprep.subr.bf16.mxu0 0
  %1559 = vmatpush1.bf16.msra.mxu0 0
  %1560 = vmatprep.subr.bf16.mxu0 0
  %1561 = vmatpush1.bf16.msra.mxu0 0
  %1562 = vmatprep.subr.bf16.mxu0 0
  %1563 = vmatpush1.bf16.msra.mxu0 0
  %1564 = vmatprep.subr.bf16.mxu0 0
  %1565 = vmatpush1.bf16.msra.mxu0 0
  %1566 = vmatprep.subr.bf16.mxu0 0
  %1567 = vmatpush1.bf16.msra.mxu0 0
  %1568 = vmatprep.subr.bf16.mxu0 0
  %1569 = vmatpush1.bf16.msra.mxu0 0
  %1570 = vmatprep.subr.bf16.mxu0 0
  %1571 = vmatpush1.bf16.msra.mxu0 0
  %1572 = vmatprep.mubr.bf16.mxu0 0
  %1573 = vmatmul.mubr.bf16.gmra.mrb[0].mxu0 %v1538
  %v1574 = vpop.f32.mrb[0].mxu0
  %v1575 = vadd.f32 %v884, %v1574
  %v1576 = vpop.f32.mrb[0].mxu0
  %v1577 = vpop.f32.mrb[0].mxu0
  %v1578 = vpop.f32.mrb[0].mxu0
  %1579 = vdwg.mxu0
  %v1580 = vmax.f32 %v1575, 0.0
  %v1581 = vmul.f32 %v1580, 0.0625
  %v1582 = vadd.f32 %v1488, %v1581
  %v1583 = vpack.c.bf16 %v1582, %v1582
  %v1585 = vsel %vm910, %v1583, 0
  %1587 = vmatprep.subr.bf16.mxu0 0
  %1588 = vmatpush1.bf16.msra.mxu0 %v902
  %1589 = vmatprep.subr.bf16.mxu0 0
  %1590 = vmatpush1.bf16.msra.mxu0 %v903
  %1591 = vmatprep.subr.bf16.mxu0 0
  %1592 = vmatpush1.bf16.msra.mxu0 %v904
  %1593 = vmatprep.subr.bf16.mxu0 0
  %1594 = vmatpush1.bf16.msra.mxu0 %v905
  %1595 = vmatprep.subr.bf16.mxu0 0
  %1596 = vmatpush1.bf16.msra.mxu0 0
  %1597 = vmatprep.subr.bf16.mxu0 0
  %1598 = vmatpush1.bf16.msra.mxu0 0
  %1599 = vmatprep.subr.bf16.mxu0 0
  %1600 = vmatpush1.bf16.msra.mxu0 0
  %1601 = vmatprep.subr.bf16.mxu0 0
  %1602 = vmatpush1.bf16.msra.mxu0 0
  %1603 = vmatprep.subr.bf16.mxu0 0
  %1604 = vmatpush1.bf16.msra.mxu0 0
  %1605 = vmatprep.subr.bf16.mxu0 0
  %1606 = vmatpush1.bf16.msra.mxu0 0
  %1607 = vmatprep.subr.bf16.mxu0 0
  %1608 = vmatpush1.bf16.msra.mxu0 0
  %1609 = vmatprep.subr.bf16.mxu0 0
  %1610 = vmatpush1.bf16.msra.mxu0 0
  %1611 = vmatprep.subr.bf16.mxu0 0
  %1612 = vmatpush1.bf16.msra.mxu0 0
  %1613 = vmatprep.subr.bf16.mxu0 0
  %1614 = vmatpush1.bf16.msra.mxu0 0
  %1615 = vmatprep.subr.bf16.mxu0 0
  %1616 = vmatpush1.bf16.msra.mxu0 0
  %1617 = vmatprep.subr.bf16.mxu0 0
  %1618 = vmatpush1.bf16.msra.mxu0 0
  %1619 = vmatprep.mubr.bf16.mxu0 0
  %1620 = vmatmul.mubr.bf16.gmra.mrb[0].mxu0 %v1585
  %v1621 = vpop.f32.mrb[0].mxu0
  %v1622 = vadd.f32 %v884, %v1621
  %v1623 = vpop.f32.mrb[0].mxu0
  %v1624 = vpop.f32.mrb[0].mxu0
  %v1625 = vpop.f32.mrb[0].mxu0
  %1626 = vdwg.mxu0
  %v1627 = vmax.f32 %v1622, 0.0
  %v1628 = vmul.f32 %v1627, 0.125
  %v1629 = vadd.f32 %v1488, %v1628
  %v1630 = vpack.c.bf16 %v1629, %v1629
  %v1632 = vsel %vm910, %v1630, 0
  %1634 = vmatprep.subr.bf16.mxu0 0
  %1635 = vmatpush1.bf16.msra.mxu0 %v902
  %1636 = vmatprep.subr.bf16.mxu0 0
  %1637 = vmatpush1.bf16.msra.mxu0 %v903
  %1638 = vmatprep.subr.bf16.mxu0 0
  %1639 = vmatpush1.bf16.msra.mxu0 %v904
  %1640 = vmatprep.subr.bf16.mxu0 0
  %1641 = vmatpush1.bf16.msra.mxu0 %v905
  %1642 = vmatprep.subr.bf16.mxu0 0
  %1643 = vmatpush1.bf16.msra.mxu0 0
  %1644 = vmatprep.subr.bf16.mxu0 0
  %1645 = vmatpush1.bf16.msra.mxu0 0
  %1646 = vmatprep.subr.bf16.mxu0 0
  %1647 = vmatpush1.bf16.msra.mxu0 0
  %1648 = vmatprep.subr.bf16.mxu0 0
  %1649 = vmatpush1.bf16.msra.mxu0 0
  %1650 = vmatprep.subr.bf16.mxu0 0
  %1651 = vmatpush1.bf16.msra.mxu0 0
  %1652 = vmatprep.subr.bf16.mxu0 0
  %1653 = vmatpush1.bf16.msra.mxu0 0
  %1654 = vmatprep.subr.bf16.mxu0 0
  %1655 = vmatpush1.bf16.msra.mxu0 0
  %1656 = vmatprep.subr.bf16.mxu0 0
  %1657 = vmatpush1.bf16.msra.mxu0 0
  %1658 = vmatprep.subr.bf16.mxu0 0
  %1659 = vmatpush1.bf16.msra.mxu0 0
  %1660 = vmatprep.subr.bf16.mxu0 0
  %1661 = vmatpush1.bf16.msra.mxu0 0
  %1662 = vmatprep.subr.bf16.mxu0 0
  %1663 = vmatpush1.bf16.msra.mxu0 0
  %1664 = vmatprep.subr.bf16.mxu0 0
  %1665 = vmatpush1.bf16.msra.mxu0 0
  %1666 = vmatprep.mubr.bf16.mxu0 0
  %1667 = vmatmul.mubr.bf16.gmra.mrb[0].mxu0 %v1632
  %v1668 = vpop.f32.mrb[0].mxu0
  %v1669 = vadd.f32 %v884, %v1668
  %v1670 = vpop.f32.mrb[0].mxu0
  %v1671 = vpop.f32.mrb[0].mxu0
  %v1672 = vpop.f32.mrb[0].mxu0
  %1673 = vdwg.mxu0
  %v1674 = vmax.f32 %v1669, 0.0
  %v1675 = vmul.f32 %v1580, 2.0
  %v1676 = vadd.f32 %v1533, %v1675
  %v1677 = vmul.f32 %v1627, 2.0
  %v1678 = vadd.f32 %v1676, %v1677
  %v1679 = vadd.f32 %v1678, %v1674
  %v1680 = vmul.f32 %v1679, 0.020833334
  %v1681 = vadd.f32 %v1488, %v1680
  %v1682 = vpack.c.bf16 %v1681, %v1681
  %v1684 = vsel %vm910, %v1682, 0
  %1686 = vmatprep.subr.bf16.mxu0 0
  %1687 = vmatpush1.bf16.msra.mxu0 %v902
  %1688 = vmatprep.subr.bf16.mxu0 0
  %1689 = vmatpush1.bf16.msra.mxu0 %v903
  %1690 = vmatprep.subr.bf16.mxu0 0
  %1691 = vmatpush1.bf16.msra.mxu0 %v904
  %1692 = vmatprep.subr.bf16.mxu0 0
  %1693 = vmatpush1.bf16.msra.mxu0 %v905
  %1694 = vmatprep.subr.bf16.mxu0 0
  %1695 = vmatpush1.bf16.msra.mxu0 0
  %1696 = vmatprep.subr.bf16.mxu0 0
  %1697 = vmatpush1.bf16.msra.mxu0 0
  %1698 = vmatprep.subr.bf16.mxu0 0
  %1699 = vmatpush1.bf16.msra.mxu0 0
  %1700 = vmatprep.subr.bf16.mxu0 0
  %1701 = vmatpush1.bf16.msra.mxu0 0
  %1702 = vmatprep.subr.bf16.mxu0 0
  %1703 = vmatpush1.bf16.msra.mxu0 0
  %1704 = vmatprep.subr.bf16.mxu0 0
  %1705 = vmatpush1.bf16.msra.mxu0 0
  %1706 = vmatprep.subr.bf16.mxu0 0
  %1707 = vmatpush1.bf16.msra.mxu0 0
  %1708 = vmatprep.subr.bf16.mxu0 0
  %1709 = vmatpush1.bf16.msra.mxu0 0
  %1710 = vmatprep.subr.bf16.mxu0 0
  %1711 = vmatpush1.bf16.msra.mxu0 0
  %1712 = vmatprep.subr.bf16.mxu0 0
  %1713 = vmatpush1.bf16.msra.mxu0 0
  %1714 = vmatprep.subr.bf16.mxu0 0
  %1715 = vmatpush1.bf16.msra.mxu0 0
  %1716 = vmatprep.subr.bf16.mxu0 0
  %1717 = vmatpush1.bf16.msra.mxu0 0
  %1718 = vmatprep.mubr.bf16.mxu0 0
  %1719 = vmatmul.mubr.bf16.gmra.mrb[0].mxu0 %v1684
  %v1720 = vpop.f32.mrb[0].mxu0
  %v1721 = vadd.f32 %v884, %v1720
  %v1722 = vpop.f32.mrb[0].mxu0
  %v1723 = vpop.f32.mrb[0].mxu0
  %v1724 = vpop.f32.mrb[0].mxu0
  %1725 = vdwg.mxu0
  %v1726 = vmax.f32 %v1721, 0.0
  %v1727 = vmul.f32 %v1726, 0.0625
  %v1728 = vadd.f32 %v1681, %v1727
  %v1729 = vpack.c.bf16 %v1728, %v1728
  %v1731 = vsel %vm910, %v1729, 0
  %1733 = vmatprep.subr.bf16.mxu0 0
  %1734 = vmatpush1.bf16.msra.mxu0 %v902
  %1735 = vmatprep.subr.bf16.mxu0 0
  %1736 = vmatpush1.bf16.msra.mxu0 %v903
  %1737 = vmatprep.subr.bf16.mxu0 0
  %1738 = vmatpush1.bf16.msra.mxu0 %v904
  %1739 = vmatprep.subr.bf16.mxu0 0
  %1740 = vmatpush1.bf16.msra.mxu0 %v905
  %1741 = vmatprep.subr.bf16.mxu0 0
  %1742 = vmatpush1.bf16.msra.mxu0 0
  %1743 = vmatprep.subr.bf16.mxu0 0
  %1744 = vmatpush1.bf16.msra.mxu0 0
  %1745 = vmatprep.subr.bf16.mxu0 0
  %1746 = vmatpush1.bf16.msra.mxu0 0
  %1747 = vmatprep.subr.bf16.mxu0 0
  %1748 = vmatpush1.bf16.msra.mxu0 0
  %1749 = vmatprep.subr.bf16.mxu0 0
  %1750 = vmatpush1.bf16.msra.mxu0 0
  %1751 = vmatprep.subr.bf16.mxu0 0
  %1752 = vmatpush1.bf16.msra.mxu0 0
  %1753 = vmatprep.subr.bf16.mxu0 0
  %1754 = vmatpush1.bf16.msra.mxu0 0
  %1755 = vmatprep.subr.bf16.mxu0 0
  %1756 = vmatpush1.bf16.msra.mxu0 0
  %1757 = vmatprep.subr.bf16.mxu0 0
  %1758 = vmatpush1.bf16.msra.mxu0 0
  %1759 = vmatprep.subr.bf16.mxu0 0
  %1760 = vmatpush1.bf16.msra.mxu0 0
  %1761 = vmatprep.subr.bf16.mxu0 0
  %1762 = vmatpush1.bf16.msra.mxu0 0
  %1763 = vmatprep.subr.bf16.mxu0 0
  %1764 = vmatpush1.bf16.msra.mxu0 0
  %1765 = vmatprep.mubr.bf16.mxu0 0
  %1766 = vmatmul.mubr.bf16.gmra.mrb[0].mxu0 %v1731
  %v1767 = vpop.f32.mrb[0].mxu0
  %v1768 = vadd.f32 %v884, %v1767
  %v1769 = vpop.f32.mrb[0].mxu0
  %v1770 = vpop.f32.mrb[0].mxu0
  %v1771 = vpop.f32.mrb[0].mxu0
  %1772 = vdwg.mxu0
  %v1773 = vmax.f32 %v1768, 0.0
  %v1774 = vmul.f32 %v1773, 0.0625
  %v1775 = vadd.f32 %v1681, %v1774
  %v1776 = vpack.c.bf16 %v1775, %v1775
  %v1778 = vsel %vm910, %v1776, 0
  %1780 = vmatprep.subr.bf16.mxu0 0
  %1781 = vmatpush1.bf16.msra.mxu0 %v902
  %1782 = vmatprep.subr.bf16.mxu0 0
  %1783 = vmatpush1.bf16.msra.mxu0 %v903
  %1784 = vmatprep.subr.bf16.mxu0 0
  %1785 = vmatpush1.bf16.msra.mxu0 %v904
  %1786 = vmatprep.subr.bf16.mxu0 0
  %1787 = vmatpush1.bf16.msra.mxu0 %v905
  %1788 = vmatprep.subr.bf16.mxu0 0
  %1789 = vmatpush1.bf16.msra.mxu0 0
  %1790 = vmatprep.subr.bf16.mxu0 0
  %1791 = vmatpush1.bf16.msra.mxu0 0
  %1792 = vmatprep.subr.bf16.mxu0 0
  %1793 = vmatpush1.bf16.msra.mxu0 0
  %1794 = vmatprep.subr.bf16.mxu0 0
  %1795 = vmatpush1.bf16.msra.mxu0 0
  %1796 = vmatprep.subr.bf16.mxu0 0
  %1797 = vmatpush1.bf16.msra.mxu0 0
  %1798 = vmatprep.subr.bf16.mxu0 0
  %1799 = vmatpush1.bf16.msra.mxu0 0
  %1800 = vmatprep.subr.bf16.mxu0 0
  %1801 = vmatpush1.bf16.msra.mxu0 0
  %1802 = vmatprep.subr.bf16.mxu0 0
  %1803 = vmatpush1.bf16.msra.mxu0 0
  %1804 = vmatprep.subr.bf16.mxu0 0
  %1805 = vmatpush1.bf16.msra.mxu0 0
  %1806 = vmatprep.subr.bf16.mxu0 0
  %1807 = vmatpush1.bf16.msra.mxu0 0
  %1808 = vmatprep.subr.bf16.mxu0 0
  %1809 = vmatpush1.bf16.msra.mxu0 0
  %1810 = vmatprep.subr.bf16.mxu0 0
  %1811 = vmatpush1.bf16.msra.mxu0 0
  %1812 = vmatprep.mubr.bf16.mxu0 0
  %1813 = vmatmul.mubr.bf16.gmra.mrb[0].mxu0 %v1778
  %v1814 = vpop.f32.mrb[0].mxu0
  %v1815 = vadd.f32 %v884, %v1814
  %v1816 = vpop.f32.mrb[0].mxu0
  %v1817 = vpop.f32.mrb[0].mxu0
  %v1818 = vpop.f32.mrb[0].mxu0
  %1819 = vdwg.mxu0
  %v1820 = vmax.f32 %v1815, 0.0
  %v1821 = vmul.f32 %v1820, 0.125
  %v1822 = vadd.f32 %v1681, %v1821
  %v1823 = vpack.c.bf16 %v1822, %v1822
  %v1825 = vsel %vm910, %v1823, 0
  %1827 = vmatprep.subr.bf16.mxu0 0
  %1828 = vmatpush1.bf16.msra.mxu0 %v902
  %1829 = vmatprep.subr.bf16.mxu0 0
  %1830 = vmatpush1.bf16.msra.mxu0 %v903
  %1831 = vmatprep.subr.bf16.mxu0 0
  %1832 = vmatpush1.bf16.msra.mxu0 %v904
  %1833 = vmatprep.subr.bf16.mxu0 0
  %1834 = vmatpush1.bf16.msra.mxu0 %v905
  %1835 = vmatprep.subr.bf16.mxu0 0
  %1836 = vmatpush1.bf16.msra.mxu0 0
  %1837 = vmatprep.subr.bf16.mxu0 0
  %1838 = vmatpush1.bf16.msra.mxu0 0
  %1839 = vmatprep.subr.bf16.mxu0 0
  %1840 = vmatpush1.bf16.msra.mxu0 0
  %1841 = vmatprep.subr.bf16.mxu0 0
  %1842 = vmatpush1.bf16.msra.mxu0 0
  %1843 = vmatprep.subr.bf16.mxu0 0
  %1844 = vmatpush1.bf16.msra.mxu0 0
  %1845 = vmatprep.subr.bf16.mxu0 0
  %1846 = vmatpush1.bf16.msra.mxu0 0
  %1847 = vmatprep.subr.bf16.mxu0 0
  %1848 = vmatpush1.bf16.msra.mxu0 0
  %1849 = vmatprep.subr.bf16.mxu0 0
  %1850 = vmatpush1.bf16.msra.mxu0 0
  %1851 = vmatprep.subr.bf16.mxu0 0
  %1852 = vmatpush1.bf16.msra.mxu0 0
  %1853 = vmatprep.subr.bf16.mxu0 0
  %1854 = vmatpush1.bf16.msra.mxu0 0
  %1855 = vmatprep.subr.bf16.mxu0 0
  %1856 = vmatpush1.bf16.msra.mxu0 0
  %1857 = vmatprep.subr.bf16.mxu0 0
  %1858 = vmatpush1.bf16.msra.mxu0 0
  %1859 = vmatprep.mubr.bf16.mxu0 0
  %1860 = vmatmul.mubr.bf16.gmra.mrb[0].mxu0 %v1825
  %v1861 = vpop.f32.mrb[0].mxu0
  %v1862 = vadd.f32 %v884, %v1861
  %v1863 = vpop.f32.mrb[0].mxu0
  %v1864 = vpop.f32.mrb[0].mxu0
  %v1865 = vpop.f32.mrb[0].mxu0
  %1866 = vdwg.mxu0
  %v1867 = vmax.f32 %v1862, 0.0
  %v1868 = vmul.f32 %v1773, 2.0
  %v1869 = vadd.f32 %v1726, %v1868
  %v1870 = vmul.f32 %v1820, 2.0
  %v1871 = vadd.f32 %v1869, %v1870
  %v1872 = vadd.f32 %v1871, %v1867
  %v1873 = vmul.f32 %v1872, 0.020833334
  %v1874 = vadd.f32 %v1681, %v1873
  %v1875 = vpack.c.bf16 %v1874, %v1874
  %v1877 = vsel %vm910, %v1875, 0
  %1879 = vmatprep.subr.bf16.mxu0 0
  %1880 = vmatpush1.bf16.msra.mxu0 %v902
  %1881 = vmatprep.subr.bf16.mxu0 0
  %1882 = vmatpush1.bf16.msra.mxu0 %v903
  %1883 = vmatprep.subr.bf16.mxu0 0
  %1884 = vmatpush1.bf16.msra.mxu0 %v904
  %1885 = vmatprep.subr.bf16.mxu0 0
  %1886 = vmatpush1.bf16.msra.mxu0 %v905
  %1887 = vmatprep.subr.bf16.mxu0 0
  %1888 = vmatpush1.bf16.msra.mxu0 0
  %1889 = vmatprep.subr.bf16.mxu0 0
  %1890 = vmatpush1.bf16.msra.mxu0 0
  %1891 = vmatprep.subr.bf16.mxu0 0
  %1892 = vmatpush1.bf16.msra.mxu0 0
  %1893 = vmatprep.subr.bf16.mxu0 0
  %1894 = vmatpush1.bf16.msra.mxu0 0
  %1895 = vmatprep.subr.bf16.mxu0 0
  %1896 = vmatpush1.bf16.msra.mxu0 0
  %1897 = vmatprep.subr.bf16.mxu0 0
  %1898 = vmatpush1.bf16.msra.mxu0 0
  %1899 = vmatprep.subr.bf16.mxu0 0
  %1900 = vmatpush1.bf16.msra.mxu0 0
  %1901 = vmatprep.subr.bf16.mxu0 0
  %1902 = vmatpush1.bf16.msra.mxu0 0
  %1903 = vmatprep.subr.bf16.mxu0 0
  %1904 = vmatpush1.bf16.msra.mxu0 0
  %1905 = vmatprep.subr.bf16.mxu0 0
  %1906 = vmatpush1.bf16.msra.mxu0 0
  %1907 = vmatprep.subr.bf16.mxu0 0
  %1908 = vmatpush1.bf16.msra.mxu0 0
  %1909 = vmatprep.subr.bf16.mxu0 0
  %1910 = vmatpush1.bf16.msra.mxu0 0
  %1911 = vmatprep.mubr.bf16.mxu0 0
  %1912 = vmatmul.mubr.bf16.gmra.mrb[0].mxu0 %v1877
  %v1913 = vpop.f32.mrb[0].mxu0
  %v1914 = vadd.f32 %v884, %v1913
  %v1915 = vpop.f32.mrb[0].mxu0
  %v1916 = vpop.f32.mrb[0].mxu0
  %v1917 = vpop.f32.mrb[0].mxu0
  %1918 = vdwg.mxu0
  %v1919 = vmax.f32 %v1914, 0.0
  %v1920 = vmul.f32 %v1919, 0.0625
  %v1921 = vadd.f32 %v1874, %v1920
  %v1922 = vpack.c.bf16 %v1921, %v1921
  %v1924 = vsel %vm910, %v1922, 0
  %1926 = vmatprep.subr.bf16.mxu0 0
  %1927 = vmatpush1.bf16.msra.mxu0 %v902
  %1928 = vmatprep.subr.bf16.mxu0 0
  %1929 = vmatpush1.bf16.msra.mxu0 %v903
  %1930 = vmatprep.subr.bf16.mxu0 0
  %1931 = vmatpush1.bf16.msra.mxu0 %v904
  %1932 = vmatprep.subr.bf16.mxu0 0
  %1933 = vmatpush1.bf16.msra.mxu0 %v905
  %1934 = vmatprep.subr.bf16.mxu0 0
  %1935 = vmatpush1.bf16.msra.mxu0 0
  %1936 = vmatprep.subr.bf16.mxu0 0
  %1937 = vmatpush1.bf16.msra.mxu0 0
  %1938 = vmatprep.subr.bf16.mxu0 0
  %1939 = vmatpush1.bf16.msra.mxu0 0
  %1940 = vmatprep.subr.bf16.mxu0 0
  %1941 = vmatpush1.bf16.msra.mxu0 0
  %1942 = vmatprep.subr.bf16.mxu0 0
  %1943 = vmatpush1.bf16.msra.mxu0 0
  %1944 = vmatprep.subr.bf16.mxu0 0
  %1945 = vmatpush1.bf16.msra.mxu0 0
  %1946 = vmatprep.subr.bf16.mxu0 0
  %1947 = vmatpush1.bf16.msra.mxu0 0
  %1948 = vmatprep.subr.bf16.mxu0 0
  %1949 = vmatpush1.bf16.msra.mxu0 0
  %1950 = vmatprep.subr.bf16.mxu0 0
  %1951 = vmatpush1.bf16.msra.mxu0 0
  %1952 = vmatprep.subr.bf16.mxu0 0
  %1953 = vmatpush1.bf16.msra.mxu0 0
  %1954 = vmatprep.subr.bf16.mxu0 0
  %1955 = vmatpush1.bf16.msra.mxu0 0
  %1956 = vmatprep.subr.bf16.mxu0 0
  %1957 = vmatpush1.bf16.msra.mxu0 0
  %1958 = vmatprep.mubr.bf16.mxu0 0
  %1959 = vmatmul.mubr.bf16.gmra.mrb[0].mxu0 %v1924
  %v1960 = vpop.f32.mrb[0].mxu0
  %v1961 = vadd.f32 %v884, %v1960
  %v1962 = vpop.f32.mrb[0].mxu0
  %v1963 = vpop.f32.mrb[0].mxu0
  %v1964 = vpop.f32.mrb[0].mxu0
  %1965 = vdwg.mxu0
  %v1966 = vmax.f32 %v1961, 0.0
  %v1967 = vmul.f32 %v1966, 0.0625
  %v1968 = vadd.f32 %v1874, %v1967
  %v1969 = vpack.c.bf16 %v1968, %v1968
  %v1971 = vsel %vm910, %v1969, 0
  %1973 = vmatprep.subr.bf16.mxu0 0
  %1974 = vmatpush1.bf16.msra.mxu0 %v902
  %1975 = vmatprep.subr.bf16.mxu0 0
  %1976 = vmatpush1.bf16.msra.mxu0 %v903
  %1977 = vmatprep.subr.bf16.mxu0 0
  %1978 = vmatpush1.bf16.msra.mxu0 %v904
  %1979 = vmatprep.subr.bf16.mxu0 0
  %1980 = vmatpush1.bf16.msra.mxu0 %v905
  %1981 = vmatprep.subr.bf16.mxu0 0
  %1982 = vmatpush1.bf16.msra.mxu0 0
  %1983 = vmatprep.subr.bf16.mxu0 0
  %1984 = vmatpush1.bf16.msra.mxu0 0
  %1985 = vmatprep.subr.bf16.mxu0 0
  %1986 = vmatpush1.bf16.msra.mxu0 0
  %1987 = vmatprep.subr.bf16.mxu0 0
  %1988 = vmatpush1.bf16.msra.mxu0 0
  %1989 = vmatprep.subr.bf16.mxu0 0
  %1990 = vmatpush1.bf16.msra.mxu0 0
  %1991 = vmatprep.subr.bf16.mxu0 0
  %1992 = vmatpush1.bf16.msra.mxu0 0
  %1993 = vmatprep.subr.bf16.mxu0 0
  %1994 = vmatpush1.bf16.msra.mxu0 0
  %1995 = vmatprep.subr.bf16.mxu0 0
  %1996 = vmatpush1.bf16.msra.mxu0 0
  %1997 = vmatprep.subr.bf16.mxu0 0
  %1998 = vmatpush1.bf16.msra.mxu0 0
  %1999 = vmatprep.subr.bf16.mxu0 0
  %2000 = vmatpush1.bf16.msra.mxu0 0
  %2001 = vmatprep.subr.bf16.mxu0 0
  %2002 = vmatpush1.bf16.msra.mxu0 0
  %2003 = vmatprep.subr.bf16.mxu0 0
  %2004 = vmatpush1.bf16.msra.mxu0 0
  %2005 = vmatprep.mubr.bf16.mxu0 0
  %2006 = vmatmul.mubr.bf16.gmra.mrb[0].mxu0 %v1971
  %v2007 = vpop.f32.mrb[0].mxu0
  %v2008 = vadd.f32 %v884, %v2007
  %v2009 = vpop.f32.mrb[0].mxu0
  %v2010 = vpop.f32.mrb[0].mxu0
  %v2011 = vpop.f32.mrb[0].mxu0
  %2012 = vdwg.mxu0
  %v2013 = vmax.f32 %v2008, 0.0
  %v2014 = vmul.f32 %v2013, 0.125
  %v2015 = vadd.f32 %v1874, %v2014
  %v2016 = vpack.c.bf16 %v2015, %v2015
  %v2018 = vsel %vm910, %v2016, 0
  %2020 = vmatprep.subr.bf16.mxu0 0
  %2021 = vmatpush1.bf16.msra.mxu0 %v902
  %2022 = vmatprep.subr.bf16.mxu0 0
  %2023 = vmatpush1.bf16.msra.mxu0 %v903
  %2024 = vmatprep.subr.bf16.mxu0 0
  %2025 = vmatpush1.bf16.msra.mxu0 %v904
  %2026 = vmatprep.subr.bf16.mxu0 0
  %2027 = vmatpush1.bf16.msra.mxu0 %v905
  %2028 = vmatprep.subr.bf16.mxu0 0
  %2029 = vmatpush1.bf16.msra.mxu0 0
  %2030 = vmatprep.subr.bf16.mxu0 0
  %2031 = vmatpush1.bf16.msra.mxu0 0
  %2032 = vmatprep.subr.bf16.mxu0 0
  %2033 = vmatpush1.bf16.msra.mxu0 0
  %2034 = vmatprep.subr.bf16.mxu0 0
  %2035 = vmatpush1.bf16.msra.mxu0 0
  %2036 = vmatprep.subr.bf16.mxu0 0
  %2037 = vmatpush1.bf16.msra.mxu0 0
  %2038 = vmatprep.subr.bf16.mxu0 0
  %2039 = vmatpush1.bf16.msra.mxu0 0
  %2040 = vmatprep.subr.bf16.mxu0 0
  %2041 = vmatpush1.bf16.msra.mxu0 0
  %2042 = vmatprep.subr.bf16.mxu0 0
  %2043 = vmatpush1.bf16.msra.mxu0 0
  %2044 = vmatprep.subr.bf16.mxu0 0
  %2045 = vmatpush1.bf16.msra.mxu0 0
  %2046 = vmatprep.subr.bf16.mxu0 0
  %2047 = vmatpush1.bf16.msra.mxu0 0
  %2048 = vmatprep.subr.bf16.mxu0 0
  %2049 = vmatpush1.bf16.msra.mxu0 0
  %2050 = vmatprep.subr.bf16.mxu0 0
  %2051 = vmatpush1.bf16.msra.mxu0 0
  %2052 = vmatprep.mubr.bf16.mxu0 0
  %2053 = vmatmul.mubr.bf16.gmra.mrb[0].mxu0 %v2018
  %v2054 = vpop.f32.mrb[0].mxu0
  %v2055 = vadd.f32 %v884, %v2054
  %v2056 = vpop.f32.mrb[0].mxu0
  %v2057 = vpop.f32.mrb[0].mxu0
  %v2058 = vpop.f32.mrb[0].mxu0
  %2059 = vdwg.mxu0
  %v2060 = vmax.f32 %v2055, 0.0
  %v2061 = vmul.f32 %v1966, 2.0
  %v2062 = vadd.f32 %v1919, %v2061
  %v2063 = vmul.f32 %v2013, 2.0
  %v2064 = vadd.f32 %v2062, %v2063
  %v2065 = vadd.f32 %v2064, %v2060
  %v2066 = vmul.f32 %v2065, 0.020833334
  %v2067 = vadd.f32 %v1874, %v2066
  %v2068 = vpack.c.bf16 %v2067, %v2067
  %v2070 = vsel %vm910, %v2068, 0
  %2072 = vmatprep.subr.bf16.mxu0 0
  %2073 = vmatpush1.bf16.msra.mxu0 %v902
  %2074 = vmatprep.subr.bf16.mxu0 0
  %2075 = vmatpush1.bf16.msra.mxu0 %v903
  %2076 = vmatprep.subr.bf16.mxu0 0
  %2077 = vmatpush1.bf16.msra.mxu0 %v904
  %2078 = vmatprep.subr.bf16.mxu0 0
  %2079 = vmatpush1.bf16.msra.mxu0 %v905
  %2080 = vmatprep.subr.bf16.mxu0 0
  %2081 = vmatpush1.bf16.msra.mxu0 0
  %2082 = vmatprep.subr.bf16.mxu0 0
  %2083 = vmatpush1.bf16.msra.mxu0 0
  %2084 = vmatprep.subr.bf16.mxu0 0
  %2085 = vmatpush1.bf16.msra.mxu0 0
  %2086 = vmatprep.subr.bf16.mxu0 0
  %2087 = vmatpush1.bf16.msra.mxu0 0
  %2088 = vmatprep.subr.bf16.mxu0 0
  %2089 = vmatpush1.bf16.msra.mxu0 0
  %2090 = vmatprep.subr.bf16.mxu0 0
  %2091 = vmatpush1.bf16.msra.mxu0 0
  %2092 = vmatprep.subr.bf16.mxu0 0
  %2093 = vmatpush1.bf16.msra.mxu0 0
  %2094 = vmatprep.subr.bf16.mxu0 0
  %2095 = vmatpush1.bf16.msra.mxu0 0
  %2096 = vmatprep.subr.bf16.mxu0 0
  %2097 = vmatpush1.bf16.msra.mxu0 0
  %2098 = vmatprep.subr.bf16.mxu0 0
  %2099 = vmatpush1.bf16.msra.mxu0 0
  %2100 = vmatprep.subr.bf16.mxu0 0
  %2101 = vmatpush1.bf16.msra.mxu0 0
  %2102 = vmatprep.subr.bf16.mxu0 0
  %2103 = vmatpush1.bf16.msra.mxu0 0
  %2104 = vmatprep.mubr.bf16.mxu0 0
  %2105 = vmatmul.mubr.bf16.gmra.mrb[0].mxu0 %v2070
  %v2106 = vpop.f32.mrb[0].mxu0
  %v2107 = vadd.f32 %v884, %v2106
  %v2108 = vpop.f32.mrb[0].mxu0
  %v2109 = vpop.f32.mrb[0].mxu0
  %v2110 = vpop.f32.mrb[0].mxu0
  %2111 = vdwg.mxu0
  %v2112 = vmax.f32 %v2107, 0.0
  %v2113 = vmul.f32 %v2112, 0.0625
  %v2114 = vadd.f32 %v2067, %v2113
  %v2115 = vpack.c.bf16 %v2114, %v2114
  %v2117 = vsel %vm910, %v2115, 0
  %2119 = vmatprep.subr.bf16.mxu0 0
  %2120 = vmatpush1.bf16.msra.mxu0 %v902
  %2121 = vmatprep.subr.bf16.mxu0 0
  %2122 = vmatpush1.bf16.msra.mxu0 %v903
  %2123 = vmatprep.subr.bf16.mxu0 0
  %2124 = vmatpush1.bf16.msra.mxu0 %v904
  %2125 = vmatprep.subr.bf16.mxu0 0
  %2126 = vmatpush1.bf16.msra.mxu0 %v905
  %2127 = vmatprep.subr.bf16.mxu0 0
  %2128 = vmatpush1.bf16.msra.mxu0 0
  %2129 = vmatprep.subr.bf16.mxu0 0
  %2130 = vmatpush1.bf16.msra.mxu0 0
  %2131 = vmatprep.subr.bf16.mxu0 0
  %2132 = vmatpush1.bf16.msra.mxu0 0
  %2133 = vmatprep.subr.bf16.mxu0 0
  %2134 = vmatpush1.bf16.msra.mxu0 0
  %2135 = vmatprep.subr.bf16.mxu0 0
  %2136 = vmatpush1.bf16.msra.mxu0 0
  %2137 = vmatprep.subr.bf16.mxu0 0
  %2138 = vmatpush1.bf16.msra.mxu0 0
  %2139 = vmatprep.subr.bf16.mxu0 0
  %2140 = vmatpush1.bf16.msra.mxu0 0
  %2141 = vmatprep.subr.bf16.mxu0 0
  %2142 = vmatpush1.bf16.msra.mxu0 0
  %2143 = vmatprep.subr.bf16.mxu0 0
  %2144 = vmatpush1.bf16.msra.mxu0 0
  %2145 = vmatprep.subr.bf16.mxu0 0
  %2146 = vmatpush1.bf16.msra.mxu0 0
  %2147 = vmatprep.subr.bf16.mxu0 0
  %2148 = vmatpush1.bf16.msra.mxu0 0
  %2149 = vmatprep.subr.bf16.mxu0 0
  %2150 = vmatpush1.bf16.msra.mxu0 0
  %2151 = vmatprep.mubr.bf16.mxu0 0
  %2152 = vmatmul.mubr.bf16.gmra.mrb[0].mxu0 %v2117
  %v2153 = vpop.f32.mrb[0].mxu0
  %v2154 = vadd.f32 %v884, %v2153
  %v2155 = vpop.f32.mrb[0].mxu0
  %v2156 = vpop.f32.mrb[0].mxu0
  %v2157 = vpop.f32.mrb[0].mxu0
  %2158 = vdwg.mxu0
  %v2159 = vmax.f32 %v2154, 0.0
  %v2160 = vmul.f32 %v2159, 0.0625
  %v2161 = vadd.f32 %v2067, %v2160
  %v2162 = vpack.c.bf16 %v2161, %v2161
  %v2164 = vsel %vm910, %v2162, 0
  %2166 = vmatprep.subr.bf16.mxu0 0
  %2167 = vmatpush1.bf16.msra.mxu0 %v902
  %2168 = vmatprep.subr.bf16.mxu0 0
  %2169 = vmatpush1.bf16.msra.mxu0 %v903
  %2170 = vmatprep.subr.bf16.mxu0 0
  %2171 = vmatpush1.bf16.msra.mxu0 %v904
  %2172 = vmatprep.subr.bf16.mxu0 0
  %2173 = vmatpush1.bf16.msra.mxu0 %v905
  %2174 = vmatprep.subr.bf16.mxu0 0
  %2175 = vmatpush1.bf16.msra.mxu0 0
  %2176 = vmatprep.subr.bf16.mxu0 0
  %2177 = vmatpush1.bf16.msra.mxu0 0
  %2178 = vmatprep.subr.bf16.mxu0 0
  %2179 = vmatpush1.bf16.msra.mxu0 0
  %2180 = vmatprep.subr.bf16.mxu0 0
  %2181 = vmatpush1.bf16.msra.mxu0 0
  %2182 = vmatprep.subr.bf16.mxu0 0
  %2183 = vmatpush1.bf16.msra.mxu0 0
  %2184 = vmatprep.subr.bf16.mxu0 0
  %2185 = vmatpush1.bf16.msra.mxu0 0
  %2186 = vmatprep.subr.bf16.mxu0 0
  %2187 = vmatpush1.bf16.msra.mxu0 0
  %2188 = vmatprep.subr.bf16.mxu0 0
  %2189 = vmatpush1.bf16.msra.mxu0 0
  %2190 = vmatprep.subr.bf16.mxu0 0
  %2191 = vmatpush1.bf16.msra.mxu0 0
  %2192 = vmatprep.subr.bf16.mxu0 0
  %2193 = vmatpush1.bf16.msra.mxu0 0
  %2194 = vmatprep.subr.bf16.mxu0 0
  %2195 = vmatpush1.bf16.msra.mxu0 0
  %2196 = vmatprep.subr.bf16.mxu0 0
  %2197 = vmatpush1.bf16.msra.mxu0 0
  %2198 = vmatprep.mubr.bf16.mxu0 0
  %2199 = vmatmul.mubr.bf16.gmra.mrb[0].mxu0 %v2164
  %v2200 = vpop.f32.mrb[0].mxu0
  %v2201 = vadd.f32 %v884, %v2200
  %v2202 = vpop.f32.mrb[0].mxu0
  %v2203 = vpop.f32.mrb[0].mxu0
  %v2204 = vpop.f32.mrb[0].mxu0
  %2205 = vdwg.mxu0
  %v2206 = vmax.f32 %v2201, 0.0
  %v2207 = vmul.f32 %v2206, 0.125
  %v2208 = vadd.f32 %v2067, %v2207
  %v2209 = vpack.c.bf16 %v2208, %v2208
  %v2211 = vsel %vm910, %v2209, 0
  %2213 = vmatprep.subr.bf16.mxu0 0
  %2214 = vmatpush1.bf16.msra.mxu0 %v902
  %2215 = vmatprep.subr.bf16.mxu0 0
  %2216 = vmatpush1.bf16.msra.mxu0 %v903
  %2217 = vmatprep.subr.bf16.mxu0 0
  %2218 = vmatpush1.bf16.msra.mxu0 %v904
  %2219 = vmatprep.subr.bf16.mxu0 0
  %2220 = vmatpush1.bf16.msra.mxu0 %v905
  %2221 = vmatprep.subr.bf16.mxu0 0
  %2222 = vmatpush1.bf16.msra.mxu0 0
  %2223 = vmatprep.subr.bf16.mxu0 0
  %2224 = vmatpush1.bf16.msra.mxu0 0
  %2225 = vmatprep.subr.bf16.mxu0 0
  %2226 = vmatpush1.bf16.msra.mxu0 0
  %2227 = vmatprep.subr.bf16.mxu0 0
  %2228 = vmatpush1.bf16.msra.mxu0 0
  %2229 = vmatprep.subr.bf16.mxu0 0
  %2230 = vmatpush1.bf16.msra.mxu0 0
  %2231 = vmatprep.subr.bf16.mxu0 0
  %2232 = vmatpush1.bf16.msra.mxu0 0
  %2233 = vmatprep.subr.bf16.mxu0 0
  %2234 = vmatpush1.bf16.msra.mxu0 0
  %2235 = vmatprep.subr.bf16.mxu0 0
  %2236 = vmatpush1.bf16.msra.mxu0 0
  %2237 = vmatprep.subr.bf16.mxu0 0
  %2238 = vmatpush1.bf16.msra.mxu0 0
  %2239 = vmatprep.subr.bf16.mxu0 0
  %2240 = vmatpush1.bf16.msra.mxu0 0
  %2241 = vmatprep.subr.bf16.mxu0 0
  %2242 = vmatpush1.bf16.msra.mxu0 0
  %2243 = vmatprep.subr.bf16.mxu0 0
  %2244 = vmatpush1.bf16.msra.mxu0 0
  %2245 = vmatprep.mubr.bf16.mxu0 0
  %2246 = vmatmul.mubr.bf16.gmra.mrb[0].mxu0 %v2211
  %v2247 = vpop.f32.mrb[0].mxu0
  %v2248 = vadd.f32 %v884, %v2247
  %v2249 = vpop.f32.mrb[0].mxu0
  %v2250 = vpop.f32.mrb[0].mxu0
  %v2251 = vpop.f32.mrb[0].mxu0
  %2252 = vdwg.mxu0
  %v2253 = vmax.f32 %v2248, 0.0
  %v2254 = vmul.f32 %v2159, 2.0
  %v2255 = vadd.f32 %v2112, %v2254
  %v2256 = vmul.f32 %v2206, 2.0
  %v2257 = vadd.f32 %v2255, %v2256
  %v2258 = vadd.f32 %v2257, %v2253
  %v2259 = vmul.f32 %v2258, 0.020833334
  %v2260 = vadd.f32 %v2067, %v2259
  %v2261 = vpack.c.bf16 %v2260, %v2260
  %v2263 = vsel %vm910, %v2261, 0
  %2265 = vmatprep.subr.bf16.mxu0 0
  %2266 = vmatpush1.bf16.msra.mxu0 %v902
  %2267 = vmatprep.subr.bf16.mxu0 0
  %2268 = vmatpush1.bf16.msra.mxu0 %v903
  %2269 = vmatprep.subr.bf16.mxu0 0
  %2270 = vmatpush1.bf16.msra.mxu0 %v904
  %2271 = vmatprep.subr.bf16.mxu0 0
  %2272 = vmatpush1.bf16.msra.mxu0 %v905
  %2273 = vmatprep.subr.bf16.mxu0 0
  %2274 = vmatpush1.bf16.msra.mxu0 0
  %2275 = vmatprep.subr.bf16.mxu0 0
  %2276 = vmatpush1.bf16.msra.mxu0 0
  %2277 = vmatprep.subr.bf16.mxu0 0
  %2278 = vmatpush1.bf16.msra.mxu0 0
  %2279 = vmatprep.subr.bf16.mxu0 0
  %2280 = vmatpush1.bf16.msra.mxu0 0
  %2281 = vmatprep.subr.bf16.mxu0 0
  %2282 = vmatpush1.bf16.msra.mxu0 0
  %2283 = vmatprep.subr.bf16.mxu0 0
  %2284 = vmatpush1.bf16.msra.mxu0 0
  %2285 = vmatprep.subr.bf16.mxu0 0
  %2286 = vmatpush1.bf16.msra.mxu0 0
  %2287 = vmatprep.subr.bf16.mxu0 0
  %2288 = vmatpush1.bf16.msra.mxu0 0
  %2289 = vmatprep.subr.bf16.mxu0 0
  %2290 = vmatpush1.bf16.msra.mxu0 0
  %2291 = vmatprep.subr.bf16.mxu0 0
  %2292 = vmatpush1.bf16.msra.mxu0 0
  %2293 = vmatprep.subr.bf16.mxu0 0
  %2294 = vmatpush1.bf16.msra.mxu0 0
  %2295 = vmatprep.subr.bf16.mxu0 0
  %2296 = vmatpush1.bf16.msra.mxu0 0
  %2297 = vmatprep.mubr.bf16.mxu0 0
  %2298 = vmatmul.mubr.bf16.gmra.mrb[0].mxu0 %v2263
  %v2299 = vpop.f32.mrb[0].mxu0
  %v2300 = vadd.f32 %v884, %v2299
  %v2301 = vpop.f32.mrb[0].mxu0
  %v2302 = vpop.f32.mrb[0].mxu0
  %v2303 = vpop.f32.mrb[0].mxu0
  %2304 = vdwg.mxu0
  %v2305 = vmax.f32 %v2300, 0.0
  %v2306 = vmul.f32 %v2305, 0.0625
  %v2307 = vadd.f32 %v2260, %v2306
  %v2308 = vpack.c.bf16 %v2307, %v2307
  %v2310 = vsel %vm910, %v2308, 0
  %2312 = vmatprep.subr.bf16.mxu0 0
  %2313 = vmatpush1.bf16.msra.mxu0 %v902
  %2314 = vmatprep.subr.bf16.mxu0 0
  %2315 = vmatpush1.bf16.msra.mxu0 %v903
  %2316 = vmatprep.subr.bf16.mxu0 0
  %2317 = vmatpush1.bf16.msra.mxu0 %v904
  %2318 = vmatprep.subr.bf16.mxu0 0
  %2319 = vmatpush1.bf16.msra.mxu0 %v905
  %2320 = vmatprep.subr.bf16.mxu0 0
  %2321 = vmatpush1.bf16.msra.mxu0 0
  %2322 = vmatprep.subr.bf16.mxu0 0
  %2323 = vmatpush1.bf16.msra.mxu0 0
  %2324 = vmatprep.subr.bf16.mxu0 0
  %2325 = vmatpush1.bf16.msra.mxu0 0
  %2326 = vmatprep.subr.bf16.mxu0 0
  %2327 = vmatpush1.bf16.msra.mxu0 0
  %2328 = vmatprep.subr.bf16.mxu0 0
  %2329 = vmatpush1.bf16.msra.mxu0 0
  %2330 = vmatprep.subr.bf16.mxu0 0
  %2331 = vmatpush1.bf16.msra.mxu0 0
  %2332 = vmatprep.subr.bf16.mxu0 0
  %2333 = vmatpush1.bf16.msra.mxu0 0
  %2334 = vmatprep.subr.bf16.mxu0 0
  %2335 = vmatpush1.bf16.msra.mxu0 0
  %2336 = vmatprep.subr.bf16.mxu0 0
  %2337 = vmatpush1.bf16.msra.mxu0 0
  %2338 = vmatprep.subr.bf16.mxu0 0
  %2339 = vmatpush1.bf16.msra.mxu0 0
  %2340 = vmatprep.subr.bf16.mxu0 0
  %2341 = vmatpush1.bf16.msra.mxu0 0
  %2342 = vmatprep.subr.bf16.mxu0 0
  %2343 = vmatpush1.bf16.msra.mxu0 0
  %2344 = vmatprep.mubr.bf16.mxu0 0
  %2345 = vmatmul.mubr.bf16.gmra.mrb[0].mxu0 %v2310
  %v2346 = vpop.f32.mrb[0].mxu0
  %v2347 = vadd.f32 %v884, %v2346
  %v2348 = vpop.f32.mrb[0].mxu0
  %v2349 = vpop.f32.mrb[0].mxu0
  %v2350 = vpop.f32.mrb[0].mxu0
  %2351 = vdwg.mxu0
  %v2352 = vmax.f32 %v2347, 0.0
  %v2353 = vmul.f32 %v2352, 0.0625
  %v2354 = vadd.f32 %v2260, %v2353
  %v2355 = vpack.c.bf16 %v2354, %v2354
  %v2357 = vsel %vm910, %v2355, 0
  %2359 = vmatprep.subr.bf16.mxu0 0
  %2360 = vmatpush1.bf16.msra.mxu0 %v902
  %2361 = vmatprep.subr.bf16.mxu0 0
  %2362 = vmatpush1.bf16.msra.mxu0 %v903
  %2363 = vmatprep.subr.bf16.mxu0 0
  %2364 = vmatpush1.bf16.msra.mxu0 %v904
  %2365 = vmatprep.subr.bf16.mxu0 0
  %2366 = vmatpush1.bf16.msra.mxu0 %v905
  %2367 = vmatprep.subr.bf16.mxu0 0
  %2368 = vmatpush1.bf16.msra.mxu0 0
  %2369 = vmatprep.subr.bf16.mxu0 0
  %2370 = vmatpush1.bf16.msra.mxu0 0
  %2371 = vmatprep.subr.bf16.mxu0 0
  %2372 = vmatpush1.bf16.msra.mxu0 0
  %2373 = vmatprep.subr.bf16.mxu0 0
  %2374 = vmatpush1.bf16.msra.mxu0 0
  %2375 = vmatprep.subr.bf16.mxu0 0
  %2376 = vmatpush1.bf16.msra.mxu0 0
  %2377 = vmatprep.subr.bf16.mxu0 0
  %2378 = vmatpush1.bf16.msra.mxu0 0
  %2379 = vmatprep.subr.bf16.mxu0 0
  %2380 = vmatpush1.bf16.msra.mxu0 0
  %2381 = vmatprep.subr.bf16.mxu0 0
  %2382 = vmatpush1.bf16.msra.mxu0 0
  %2383 = vmatprep.subr.bf16.mxu0 0
  %2384 = vmatpush1.bf16.msra.mxu0 0
  %2385 = vmatprep.subr.bf16.mxu0 0
  %2386 = vmatpush1.bf16.msra.mxu0 0
  %2387 = vmatprep.subr.bf16.mxu0 0
  %2388 = vmatpush1.bf16.msra.mxu0 0
  %2389 = vmatprep.subr.bf16.mxu0 0
  %2390 = vmatpush1.bf16.msra.mxu0 0
  %2391 = vmatprep.mubr.bf16.mxu0 0
  %2392 = vmatmul.mubr.bf16.gmra.mrb[0].mxu0 %v2357
  %v2393 = vpop.f32.mrb[0].mxu0
  %v2394 = vadd.f32 %v884, %v2393
  %v2395 = vpop.f32.mrb[0].mxu0
  %v2396 = vpop.f32.mrb[0].mxu0
  %v2397 = vpop.f32.mrb[0].mxu0
  %2398 = vdwg.mxu0
  %v2399 = vmax.f32 %v2394, 0.0
  %v2400 = vmul.f32 %v2399, 0.125
  %v2401 = vadd.f32 %v2260, %v2400
  %v2402 = vpack.c.bf16 %v2401, %v2401
  %v2404 = vsel %vm910, %v2402, 0
  %2406 = vmatprep.subr.bf16.mxu0 0
  %2407 = vmatpush1.bf16.msra.mxu0 %v902
  %2408 = vmatprep.subr.bf16.mxu0 0
  %2409 = vmatpush1.bf16.msra.mxu0 %v903
  %2410 = vmatprep.subr.bf16.mxu0 0
  %2411 = vmatpush1.bf16.msra.mxu0 %v904
  %2412 = vmatprep.subr.bf16.mxu0 0
  %2413 = vmatpush1.bf16.msra.mxu0 %v905
  %2414 = vmatprep.subr.bf16.mxu0 0
  %2415 = vmatpush1.bf16.msra.mxu0 0
  %2416 = vmatprep.subr.bf16.mxu0 0
  %2417 = vmatpush1.bf16.msra.mxu0 0
  %2418 = vmatprep.subr.bf16.mxu0 0
  %2419 = vmatpush1.bf16.msra.mxu0 0
  %2420 = vmatprep.subr.bf16.mxu0 0
  %2421 = vmatpush1.bf16.msra.mxu0 0
  %2422 = vmatprep.subr.bf16.mxu0 0
  %2423 = vmatpush1.bf16.msra.mxu0 0
  %2424 = vmatprep.subr.bf16.mxu0 0
  %2425 = vmatpush1.bf16.msra.mxu0 0
  %2426 = vmatprep.subr.bf16.mxu0 0
  %2427 = vmatpush1.bf16.msra.mxu0 0
  %2428 = vmatprep.subr.bf16.mxu0 0
  %2429 = vmatpush1.bf16.msra.mxu0 0
  %2430 = vmatprep.subr.bf16.mxu0 0
  %2431 = vmatpush1.bf16.msra.mxu0 0
  %2432 = vmatprep.subr.bf16.mxu0 0
  %2433 = vmatpush1.bf16.msra.mxu0 0
  %2434 = vmatprep.subr.bf16.mxu0 0
  %2435 = vmatpush1.bf16.msra.mxu0 0
  %2436 = vmatprep.subr.bf16.mxu0 0
  %2437 = vmatpush1.bf16.msra.mxu0 0
  %2438 = vmatprep.mubr.bf16.mxu0 0
  %2439 = vmatmul.mubr.bf16.gmra.mrb[0].mxu0 %v2404
  %v2440 = vpop.f32.mrb[0].mxu0
  %v2441 = vadd.f32 %v884, %v2440
  %v2442 = vpop.f32.mrb[0].mxu0
  %v2443 = vpop.f32.mrb[0].mxu0
  %v2444 = vpop.f32.mrb[0].mxu0
  %2445 = vdwg.mxu0
  %v2446 = vmax.f32 %v2441, 0.0
  %v2447 = vmul.f32 %v2352, 2.0
  %v2448 = vadd.f32 %v2305, %v2447
  %v2449 = vmul.f32 %v2399, 2.0
  %v2450 = vadd.f32 %v2448, %v2449
  %v2451 = vadd.f32 %v2450, %v2446
  %v2452 = vmul.f32 %v2451, 0.020833334
  %v2453 = vadd.f32 %v2260, %v2452
  %v2454 = vld [vmem:[%s7] sm:$0xff]
  %v2455 = vld [vmem:[%s9] sm:$0x1]
  %2457 = vset.pattern.permute.xlu0 0
  %2458 = vperm.xlu0 %2457, %v2454
  %v2459 = vpop.permute.xlu0 %2458
  %v2461 = vlaneseq
  %v2462 = vshrl.u32 %v2461, 7
  %v2463 = vsub.s32 0, %v2462
  %v2464 = vrot.slane %v2455, %v2463
  %v2465 = vmul.f32 %v2459, %v2464
  %v2466 = vld [vmem:[%s9 + $0x1] sm:$0x1]
  %2467 = vset.pattern.permute.xlu0 1
  %2468 = vperm.xlu0 %2467, %v2454
  %v2469 = vpop.permute.xlu0 %2468
  %v2471 = vlaneseq
  %v2472 = vshrl.u32 %v2471, 7
  %v2473 = vsub.s32 0, %v2472
  %v2474 = vrot.slane %v2466, %v2473
  %v2475 = vmul.f32 %v2469, %v2474
  %v2476 = vadd.f32 %v2465, %v2475
  %v2477 = vpack.c.bf16 %v2453, %v2453
  %v2478 = vld [vmem:[%s8] sm:$0xf]
  %v2479 = vld [vmem:[%s8 + $0x4] sm:$0xf]
  %v2480 = vld [vmem:[%s8 + $0x8] sm:$0xf]
  %v2481 = vld [vmem:[%s8 + $0xc] sm:$0xf]
  %v2482 = vld [vmem:[%s8 + $0x10] sm:$0xf]
  %v2483 = vld [vmem:[%s8 + $0x14] sm:$0xf]
  %v2484 = vld [vmem:[%s8 + $0x18] sm:$0xf]
  %v2485 = vld [vmem:[%s8 + $0x1c] sm:$0xf]
  %v2494 = vunpack.c.l.b16 %v2478
  %v2495 = vunpack.c.l.b16 %v2479
  %v2496 = vunpack.c.l.b16 %v2480
  %v2497 = vunpack.c.l.b16 %v2481
  %v2498 = vunpack.c.l.b16 %v2482
  %v2499 = vunpack.c.l.b16 %v2483
  %v2500 = vunpack.c.l.b16 %v2484
  %v2501 = vunpack.c.l.b16 %v2485
  %v2502 = vpack.c.b16 %v2495, %v2494
  %v2503 = vpack.c.b16 %v2497, %v2496
  %v2504 = vpack.c.b16 %v2499, %v2498
  %v2505 = vpack.c.b16 %v2501, %v2500
  %v2511 = vsel %vm910, %v2477, 0
  %2513 = vmatprep.subr.bf16.mxu0 0
  %2514 = vmatpush1.bf16.msra.mxu0 %v2502
  %2515 = vmatprep.subr.bf16.mxu0 0
  %2516 = vmatpush1.bf16.msra.mxu0 %v2503
  %2517 = vmatprep.subr.bf16.mxu0 0
  %2518 = vmatpush1.bf16.msra.mxu0 %v2504
  %2519 = vmatprep.subr.bf16.mxu0 0
  %2520 = vmatpush1.bf16.msra.mxu0 %v2505
  %2521 = vmatprep.subr.bf16.mxu0 0
  %2522 = vmatpush1.bf16.msra.mxu0 0
  %2523 = vmatprep.subr.bf16.mxu0 0
  %2524 = vmatpush1.bf16.msra.mxu0 0
  %2525 = vmatprep.subr.bf16.mxu0 0
  %2526 = vmatpush1.bf16.msra.mxu0 0
  %2527 = vmatprep.subr.bf16.mxu0 0
  %2528 = vmatpush1.bf16.msra.mxu0 0
  %2529 = vmatprep.subr.bf16.mxu0 0
  %2530 = vmatpush1.bf16.msra.mxu0 0
  %2531 = vmatprep.subr.bf16.mxu0 0
  %2532 = vmatpush1.bf16.msra.mxu0 0
  %2533 = vmatprep.subr.bf16.mxu0 0
  %2534 = vmatpush1.bf16.msra.mxu0 0
  %2535 = vmatprep.subr.bf16.mxu0 0
  %2536 = vmatpush1.bf16.msra.mxu0 0
  %2537 = vmatprep.subr.bf16.mxu0 0
  %2538 = vmatpush1.bf16.msra.mxu0 0
  %2539 = vmatprep.subr.bf16.mxu0 0
  %2540 = vmatpush1.bf16.msra.mxu0 0
  %2541 = vmatprep.subr.bf16.mxu0 0
  %2542 = vmatpush1.bf16.msra.mxu0 0
  %2543 = vmatprep.subr.bf16.mxu0 0
  %2544 = vmatpush1.bf16.msra.mxu0 0
  %2545 = vmatprep.mubr.bf16.mxu0 0
  %2546 = vmatmul.mubr.bf16.gmra.mrb[0].mxu0 %v2511
  %v2547 = vpop.f32.mrb[0].mxu0
  %v2548 = vadd.f32 %v2476, %v2547
  %v2549 = vpop.f32.mrb[0].mxu0
  %v2550 = vpop.f32.mrb[0].mxu0
  %v2551 = vpop.f32.mrb[0].mxu0
  %2552 = vdwg.mxu0
  %v2553 = vld [vmem:[%s10] sm:$0x1]
  %v2555 = vlaneseq
  %v2556 = vshrl.u32 %v2555, 7
  %v2557 = vsub.s32 0, %v2556
  %v2558 = vrot.slane %v2553, %v2557
  %v2560 = vadd.f32 %v2548, %v2558
  %vm2561 = vcmask 64512
  %2562 = vst.msk [vmem:[%s11] sm:$0xff] %vm2561, %v2560
  // Predicated region
  $region46: #{node_bilstm_forward.1} parent=0 // pred_check
    _
  $region47: #{node_bilstm_forward.1} parent=0 // pred_check_branch
    %2564 = sbr.rel (0) target = $region49
  $region48: #{node_bilstm_forward.1} parent=0 // pred_region
    _
  $region49: #{node_bilstm_forward.1} parent=0 // pred_fallthru
    _
  // Predicated region
  $region50: #{node_bilstm_forward.1} parent=0 // pred_check
    _
  $region51: #{node_bilstm_forward.1} parent=0 // pred_check_branch
    %2566 = sbr.rel (0) target = $region53
  $region52: #{node_bilstm_forward.1} parent=0 // pred_region
    _
  $region53: #{node_bilstm_forward.1} parent=0 // pred_fallthru
    _

</llo_original>
